<compile_context>
chip_gen: v5e
topology: v5e:2x2
jax: 0.10.0
libtpu: 0.0.40
codegen_flags: <defaults>
</compile_context>

<pallas_src>
import functools

import jax
import jax.numpy as jnp
from jax import lax
from jax.experimental import pallas as pl
from jax.experimental.pallas import tpu as pltpu

_HP = 128           # lanes per gate (both layers padded to this)
_GP = 4 * _HP       # total gate lanes (i, f, g, o)


def _round_up(a, m):
    return ((a + m - 1) // m) * m


def _lstm_cell(gates, c_prev):
    """gates: (Bp, 4*HP) f32 in PyTorch order i,f,g,o; 128-lane-aligned."""
    i_g = jax.nn.sigmoid(gates[:, 0 * _HP:1 * _HP])
    f_g = jax.nn.sigmoid(gates[:, 1 * _HP:2 * _HP])
    g_g = jnp.tanh(gates[:, 2 * _HP:3 * _HP])
    o_g = jax.nn.sigmoid(gates[:, 3 * _HP:4 * _HP])
    c_new = f_g * c_prev + i_g * g_g
    h_new = o_g * jnp.tanh(c_new)
    return h_new, c_new


def _vd_encoder_kernel(x_ref, wih1_ref, b1_ref, whh1_ref,
                       wih2_ref, whh2_ref, b2_ref,
                       out_ref,
                       g_ref, h1seq_ref, h1s_ref, c1s_ref, h2s_ref, c2s_ref,
                       *, TB, Bp):
    blk = pl.program_id(0)

    # Recurrent state lives in small scratch across time blocks; init at blk 0.
    @pl.when(blk == 0)
    def _():
        h1s_ref[...] = jnp.zeros_like(h1s_ref)
        c1s_ref[...] = jnp.zeros_like(c1s_ref)
        h2s_ref[...] = jnp.zeros_like(h2s_ref)
        c2s_ref[...] = jnp.zeros_like(c2s_ref)

    # ---- layer-1 input projection: batched over the whole time block ----
    g_ref[...] = (
        jnp.dot(x_ref[...], wih1_ref[...], preferred_element_type=jnp.float32)
        + b1_ref[...]
    )

    # ---- layer-1 recurrence: only h1 @ W_hh1 on the serial path ----
    def l1_step(t, carry):
        h1, c1 = carry
        row = pl.multiple_of(t * Bp, Bp)
        g = g_ref[pl.ds(row, Bp), :] + jnp.dot(
            h1.astype(jnp.bfloat16), whh1_ref[...],
            preferred_element_type=jnp.float32)
        h1n, c1n = _lstm_cell(g, c1)
        h1seq_ref[pl.ds(row, Bp), :] = h1n
        return h1n, c1n

    h1f, c1f = lax.fori_loop(0, TB, l1_step, (h1s_ref[...], c1s_ref[...]),
                             unroll=8)
    h1s_ref[...] = h1f
    c1s_ref[...] = c1f

    # ---- layer-2 input projection: batched over the block (reuse g_ref) ----
    g_ref[...] = (
        jnp.dot(h1seq_ref[...].astype(jnp.bfloat16), wih2_ref[...],
                preferred_element_type=jnp.float32)
        + b2_ref[...]
    )

    # ---- layer-2 recurrence: only h2 @ W_hh2 on the serial path, + ReLU ----
    def l2_step(t, carry):
        h2, c2 = carry
        row = pl.multiple_of(t * Bp, Bp)
        g = g_ref[pl.ds(row, Bp), :] + jnp.dot(
            h2.astype(jnp.bfloat16), whh2_ref[...],
            preferred_element_type=jnp.float32)
        h2n, c2n = _lstm_cell(g, c2)
        out_ref[pl.ds(row, Bp), :] = jnp.maximum(h2n, 0.0).astype(out_ref.dtype)
        return h2n, c2n

    h2f, c2f = lax.fori_loop(0, TB, l2_step, (h2s_ref[...], c2s_ref[...]),
                             unroll=8)
    h2s_ref[...] = h2f
    c2s_ref[...] = c2f


def _pad_gate_cols(m, HP):
    """(rows, 4H) -> (rows, 4*HP): gate g placed at columns [g*HP, g*HP+H)."""
    rows, four_h = m.shape
    H = four_h // 4
    out = jnp.zeros((rows, 4 * HP), m.dtype)
    for g in range(4):
        out = out.at[:, g * HP:g * HP + H].set(m[:, g * H:(g + 1) * H])
    return out


def _pad_lstm_params(w_ih, w_hh, b_ih, b_hh, in_pad, HP):
    """Returns lane/row padded (W_ih^T, W_hh^T) in bf16 and summed bias in f32."""
    four_h, I = w_ih.shape
    H = four_h // 4
    wih_t = _pad_gate_cols(jnp.transpose(w_ih).astype(jnp.float32), HP)  # (I, 4HP)
    wih_p = jnp.zeros((in_pad, 4 * HP), jnp.float32).at[:I, :].set(wih_t)
    whh_t = _pad_gate_cols(jnp.transpose(w_hh).astype(jnp.float32), HP)  # (H, 4HP)
    whh_p = jnp.zeros((HP, 4 * HP), jnp.float32).at[:H, :].set(whh_t)
    bias = _pad_gate_cols((b_ih + b_hh).reshape(1, four_h).astype(jnp.float32), HP)
    return wih_p.astype(jnp.bfloat16), whh_p.astype(jnp.bfloat16), bias


@jax.jit
def vd_encoder_forward(x, params):
    """x: (B, T, in_features) batch_first, as in the PyTorch module."""
    (w_ih1, w_hh1, b_ih1, b_hh1), (w_ih2, w_hh2, b_ih2, b_hh2) = params
    B, T, I = x.shape
    H2 = w_hh2.shape[1]           # out_features
    HP, GP = _HP, _GP

    Bp = _round_up(B, 8)                      # batch -> 8-row sublane tile
    TB = min(32, _round_up(T, 8))             # time-block (multiple of 8)
    Tp = _round_up(T, TB)                     # padded sequence length
    n_blocks = Tp // TB
    rows_blk = TB * Bp

    # Time-major, batch/time padded, flattened to (Tp*Bp, I); bf16 MXU operands.
    x_tm = jnp.transpose(x, (1, 0, 2))                        # (T, B, I)
    x_tm = jnp.pad(x_tm, ((0, Tp - T), (0, Bp - B), (0, 0)))  # (Tp, Bp, I)
    x2d = x_tm.reshape(Tp * Bp, I).astype(jnp.bfloat16)

    wih1_p, whh1_p, b1_p = _pad_lstm_params(w_ih1, w_hh1, b_ih1, b_hh1, I, HP)
    wih2_p, whh2_p, b2_p = _pad_lstm_params(w_ih2, w_hh2, b_ih2, b_hh2, HP, HP)

    kernel = functools.partial(_vd_encoder_kernel, TB=TB, Bp=Bp)

    # Scoped-VMEM sized from the actual footprint (double-buffered x/out blocks,
    # gate + h1-sequence scratch, weights, state) with headroom; clipped to a
    # range that is safe on v5e / v6e / v7x.
    footprint = (
        2 * rows_blk * I * 2          # x block (bf16), double-buffered
        + 2 * rows_blk * HP * 4       # out block (f32), double-buffered
        + rows_blk * GP * 4           # gate scratch (f32)
        + rows_blk * HP * 4           # h1-sequence scratch (f32)
        + 4 * Bp * HP * 4             # carried state
        + 2 * (I + 3 * HP) * GP * 2   # weights (bf16), double-buffered
        + 2 * 2 * GP * 4              # biases
    )
    vmem_limit = int(min(max(2 * footprint, 16 << 20), 32 << 20))

    out2d = pl.pallas_call(
        kernel,
        out_shape=jax.ShapeDtypeStruct((Tp * Bp, HP), jnp.float32),
        grid_spec=pltpu.PrefetchScalarGridSpec(
            num_scalar_prefetch=0,
            grid=(n_blocks,),
            in_specs=[
                pl.BlockSpec((rows_blk, I), lambda i: (i, 0)),   # x (bf16)
                pl.BlockSpec((I, GP), lambda i: (0, 0)),         # W_ih1^T (bf16)
                pl.BlockSpec((1, GP), lambda i: (0, 0)),         # bias1 (f32)
                pl.BlockSpec((HP, GP), lambda i: (0, 0)),        # W_hh1^T (bf16)
                pl.BlockSpec((HP, GP), lambda i: (0, 0)),        # W_ih2^T (bf16)
                pl.BlockSpec((HP, GP), lambda i: (0, 0)),        # W_hh2^T (bf16)
                pl.BlockSpec((1, GP), lambda i: (0, 0)),         # bias2 (f32)
            ],
            out_specs=pl.BlockSpec((rows_blk, HP), lambda i: (i, 0)),
            scratch_shapes=[
                pltpu.VMEM((rows_blk, GP), jnp.float32),  # gates (reused L1/L2)
                pltpu.VMEM((rows_blk, HP), jnp.float32),  # layer-1 h sequence
                pltpu.VMEM((Bp, HP), jnp.float32),        # h1 (across blocks)
                pltpu.VMEM((Bp, HP), jnp.float32),        # c1
                pltpu.VMEM((Bp, HP), jnp.float32),        # h2
                pltpu.VMEM((Bp, HP), jnp.float32),        # c2
            ],
        ),
        compiler_params=pltpu.CompilerParams(
            # Time recurrence is serial: keep "arbitrary", never "parallel".
            dimension_semantics=("arbitrary",),
            vmem_limit_bytes=vmem_limit),
    )(x2d, wih1_p, b1_p, whh1_p, wih2_p, whh2_p, b2_p)

    out = out2d.reshape(Tp, Bp, HP)[:T, :B, :H2]              # strip padding
    return jnp.transpose(out, (1, 0, 2))                      # (B, T, out)


# ------------------------- pure-JAX reference -------------------------

def _lstm_ref(x, w_ih, w_hh, b_ih, b_hh):
    """f32 reference LSTM, batch_first, zero initial state."""
    B, T, I = x.shape
    H = w_hh.shape[1]

    def step(carry, xt):
        h, c = carry
        g = xt @ w_ih.T + h @ w_hh.T + b_ih + b_hh
        i, f, gg, o = jnp.split(g, 4, axis=-1)
        i = jax.nn.sigmoid(i)
        f = jax.nn.sigmoid(f)
        gg = jnp.tanh(gg)
        o = jax.nn.sigmoid(o)
        c = f * c + i * gg
        h = o * jnp.tanh(c)
        return (h, c), h

    init = (jnp.zeros((B, H), jnp.float32), jnp.zeros((B, H), jnp.float32))
    _, hs = lax.scan(step, init, jnp.transpose(x, (1, 0, 2)))
    return jnp.transpose(hs, (1, 0, 2))


def vd_encoder_reference(x, params):
    p1, p2 = params
    h1 = _lstm_ref(x, *p1)
    h2 = _lstm_ref(h1, *p2)
    return jnp.maximum(h2, 0.0)


def _init_lstm_params(key, in_features, hidden):
    """PyTorch-style LSTM init: U(-1/sqrt(H), 1/sqrt(H))."""
    k = 1.0 / jnp.sqrt(jnp.float32(hidden))
    k1, k2, k3, k4 = jax.random.split(key, 4)
    w_ih = jax.random.uniform(k1, (4 * hidden, in_features), jnp.float32, -k, k)
    w_hh = jax.random.uniform(k2, (4 * hidden, hidden), jnp.float32, -k, k)
    b_ih = jax.random.uniform(k3, (4 * hidden,), jnp.float32, -k, k)
    b_hh = jax.random.uniform(k4, (4 * hidden,), jnp.float32, -k, k)
    return w_ih, w_hh, b_ih, b_hh


if __name__ == "__main__":
    # Small shapes consistent with the module: lstm1 hidden fixed at 64.
    B, T = 2, 8
    in_features, hidden1, out_features = 32, 64, 32

    key = jax.random.PRNGKey(0)
    kx, kp1, kp2 = jax.random.split(key, 3)

    x = jax.random.normal(kx, (B, T, in_features), jnp.float32)
    params = (
        _init_lstm_params(kp1, in_features, hidden1),
        _init_lstm_params(kp2, hidden1, out_features),
    )

    out = vd_encoder_forward(x, params)
    out = jax.block_until_ready(out)

    assert out.shape == (B, T, out_features), out.shape
    assert bool(jnp.all(jnp.isfinite(out)))
    assert bool(jnp.all(out >= 0.0))  # ReLU output

    # Tolerance-asserted f32 reference (kernel matmuls use bf16 operands).
    ref = vd_encoder_reference(x, params)
    assert bool(jnp.allclose(out, ref, atol=3e-2, rtol=3e-2)), (
        float(jnp.max(jnp.abs(out - ref))))

    print("KERNEL_OK")
</pallas_src>

<mosaic_0001>
module attributes {stable_mosaic.version = 11 : i64} {
  func.func @_vd_encoder_kernel(%arg0: i32, %arg1: memref<64x32xbf16, #tpu.memory_space<vmem>>, %arg2: memref<32x512xbf16, #tpu.memory_space<vmem>>, %arg3: memref<1x512xf32, #tpu.memory_space<vmem>>, %arg4: memref<128x512xbf16, #tpu.memory_space<vmem>>, %arg5: memref<128x512xbf16, #tpu.memory_space<vmem>>, %arg6: memref<128x512xbf16, #tpu.memory_space<vmem>>, %arg7: memref<1x512xf32, #tpu.memory_space<vmem>>, %arg8: memref<64x128xf32, #tpu.memory_space<vmem>>, %arg9: memref<64x512xf32, #tpu.memory_space<vmem>>, %arg10: memref<64x128xf32, #tpu.memory_space<vmem>>, %arg11: memref<8x128xf32, #tpu.memory_space<vmem>>, %arg12: memref<8x128xf32, #tpu.memory_space<vmem>>, %arg13: memref<8x128xf32, #tpu.memory_space<vmem>>, %arg14: memref<8x128xf32, #tpu.memory_space<vmem>>) attributes {dimension_semantics = [#tpu.dimension_semantics<arbitrary>], iteration_bounds = array<i64: 1>, scalar_prefetch = 0 : i64, scratch_operands = 6 : i64, tpu.core_type = #tpu.core_type<tc>, window_params = [{transform_indices = @transform_0, window_bounds = array<i64: 64, 32>}, {pipeline_mode = #tpu.pipeline_mode<synchronous>, transform_indices = @transform_1, window_bounds = array<i64: 32, 512>}, {pipeline_mode = #tpu.pipeline_mode<synchronous>, transform_indices = @transform_2, window_bounds = array<i64: 1, 512>}, {pipeline_mode = #tpu.pipeline_mode<synchronous>, transform_indices = @transform_3, window_bounds = array<i64: 128, 512>}, {pipeline_mode = #tpu.pipeline_mode<synchronous>, transform_indices = @transform_4, window_bounds = array<i64: 128, 512>}, {pipeline_mode = #tpu.pipeline_mode<synchronous>, transform_indices = @transform_5, window_bounds = array<i64: 128, 512>}, {pipeline_mode = #tpu.pipeline_mode<synchronous>, transform_indices = @transform_6, window_bounds = array<i64: 1, 512>}, {transform_indices = @transform_7, window_bounds = array<i64: 64, 128>}]} {
    %c0_i32 = arith.constant 0 : i32
    %0 = arith.cmpi eq, %arg0, %c0_i32 : i32
    %1 = arith.extui %0 : i1 to i32
    %c0_i32_0 = arith.constant 0 : i32
    %2 = arith.cmpi ne, %1, %c0_i32_0 : i32
    scf.if %2 {
      %cst_195 = arith.constant 0.000000e+00 : f32
      %602 = vector.broadcast %cst_195 : f32 to vector<8x128xf32>
      %c0_196 = arith.constant 0 : index
      %c0_197 = arith.constant 0 : index
      %603 = vector.load %arg11[%c0_196, %c0_197] : memref<8x128xf32, #tpu.memory_space<vmem>>, vector<8x128xf32>
      tpu.vector_store %arg11[%c0_196, %c0_197], %602 {strides = array<i32>} : memref<8x128xf32, #tpu.memory_space<vmem>>, vector<8x128xf32>,
      %cst_198 = arith.constant 0.000000e+00 : f32
      %604 = vector.broadcast %cst_198 : f32 to vector<8x128xf32>
      %c0_199 = arith.constant 0 : index
      %c0_200 = arith.constant 0 : index
      %605 = vector.load %arg12[%c0_199, %c0_200] : memref<8x128xf32, #tpu.memory_space<vmem>>, vector<8x128xf32>
      tpu.vector_store %arg12[%c0_199, %c0_200], %604 {strides = array<i32>} : memref<8x128xf32, #tpu.memory_space<vmem>>, vector<8x128xf32>,
      %cst_201 = arith.constant 0.000000e+00 : f32
      %606 = vector.broadcast %cst_201 : f32 to vector<8x128xf32>
      %c0_202 = arith.constant 0 : index
      %c0_203 = arith.constant 0 : index
      %607 = vector.load %arg13[%c0_202, %c0_203] : memref<8x128xf32, #tpu.memory_space<vmem>>, vector<8x128xf32>
      tpu.vector_store %arg13[%c0_202, %c0_203], %606 {strides = array<i32>} : memref<8x128xf32, #tpu.memory_space<vmem>>, vector<8x128xf32>,
      %cst_204 = arith.constant 0.000000e+00 : f32
      %608 = vector.broadcast %cst_204 : f32 to vector<8x128xf32>
      %c0_205 = arith.constant 0 : index
      %c0_206 = arith.constant 0 : index
      %609 = vector.load %arg14[%c0_205, %c0_206] : memref<8x128xf32, #tpu.memory_space<vmem>>, vector<8x128xf32>
      tpu.vector_store %arg14[%c0_205, %c0_206], %608 {strides = array<i32>} : memref<8x128xf32, #tpu.memory_space<vmem>>, vector<8x128xf32>,
    } else {
    }
    %c0 = arith.constant 0 : index
    %c0_1 = arith.constant 0 : index
    %3 = vector.load %arg1[%c0, %c0_1] : memref<64x32xbf16, #tpu.memory_space<vmem>>, vector<64x32xbf16>
    %c0_2 = arith.constant 0 : index
    %c0_3 = arith.constant 0 : index
    %4 = vector.load %arg2[%c0_2, %c0_3] : memref<32x512xbf16, #tpu.memory_space<vmem>>, vector<32x512xbf16>
    %cst = arith.constant dense<0.000000e+00> : vector<64x512xf32>
    %5 = tpu.matmul %3, %4, %cst {dimension_numbers = #tpu.dot_dimension_numbers<[1], [0], [0], [1], [0, 0, 1, 1], [], []>} : vector<64x32xbf16>, vector<32x512xbf16>, vector<64x512xf32> -> vector<64x512xf32>
    %c0_4 = arith.constant 0 : index
    %c0_5 = arith.constant 0 : index
    %6 = vector.load %arg3[%c0_4, %c0_5] : memref<1x512xf32, #tpu.memory_space<vmem>>, vector<1x512xf32>
    %7 = vector.broadcast %6 : vector<1x512xf32> to vector<64x512xf32>
    %8 = arith.addf %5, %7 : vector<64x512xf32>
    %c0_6 = arith.constant 0 : index
    %c0_7 = arith.constant 0 : index
    %9 = vector.load %arg9[%c0_6, %c0_7] : memref<64x512xf32, #tpu.memory_space<vmem>>, vector<64x512xf32>
    tpu.vector_store %arg9[%c0_6, %c0_7], %8 {strides = array<i32>} : memref<64x512xf32, #tpu.memory_space<vmem>>, vector<64x512xf32>,
    %c0_8 = arith.constant 0 : index
    %c0_9 = arith.constant 0 : index
    %10 = vector.load %arg11[%c0_8, %c0_9] : memref<8x128xf32, #tpu.memory_space<vmem>>, vector<8x128xf32>
    %c0_10 = arith.constant 0 : index
    %c0_11 = arith.constant 0 : index
    %11 = vector.load %arg12[%c0_10, %c0_11] : memref<8x128xf32, #tpu.memory_space<vmem>>, vector<8x128xf32>
    %c0_i32_12 = arith.constant 0 : i32
    %c8_i32 = arith.constant 8 : i32
    %12 = arith.muli %c0_i32_12, %c8_i32 : i32
    %13 = tpu.assume_multiple %12, 8 : i32
    %14 = arith.index_cast %13 : i32 to index
    %c0_13 = arith.constant 0 : index
    %15 = vector.load %arg9[%14, %c0_13] : memref<64x512xf32, #tpu.memory_space<vmem>>, vector<8x512xf32>
    %16 = arith.truncf %10 : vector<8x128xf32> to vector<8x128xbf16>
    %c0_14 = arith.constant 0 : index
    %c0_15 = arith.constant 0 : index
    %17 = vector.load %arg4[%c0_14, %c0_15] : memref<128x512xbf16, #tpu.memory_space<vmem>>, vector<128x512xbf16>
    %cst_16 = arith.constant dense<0.000000e+00> : vector<8x512xf32>
    %18 = tpu.matmul %16, %17, %cst_16 {dimension_numbers = #tpu.dot_dimension_numbers<[1], [0], [0], [1], [0, 0, 1, 1], [], []>} : vector<8x128xbf16>, vector<128x512xbf16>, vector<8x512xf32> -> vector<8x512xf32>
    %19 = arith.addf %15, %18 : vector<8x512xf32>
    %20 = vector.extract_strided_slice %19 {offsets = [0, 0], sizes = [8, 128], strides = [1, 1]} : vector<8x512xf32> to vector<8x128xf32>
    %21 = arith.negf %20 : vector<8x128xf32>
    %22 = math.exp %21 : vector<8x128xf32>
    %cst_17 = arith.constant 1.000000e+00 : f32
    %23 = vector.broadcast %cst_17 : f32 to vector<8x128xf32>
    %24 = arith.addf %23, %22 : vector<8x128xf32>
    %25 = arith.divf %23, %24 : vector<8x128xf32>
    %26 = vector.extract_strided_slice %19 {offsets = [0, 128], sizes = [8, 128], strides = [1, 1]} : vector<8x512xf32> to vector<8x128xf32>
    %27 = arith.negf %26 : vector<8x128xf32>
    %28 = math.exp %27 : vector<8x128xf32>
    %cst_18 = arith.constant 1.000000e+00 : f32
    %29 = vector.broadcast %cst_18 : f32 to vector<8x128xf32>
    %30 = arith.addf %29, %28 : vector<8x128xf32>
    %31 = arith.divf %29, %30 : vector<8x128xf32>
    %32 = vector.extract_strided_slice %19 {offsets = [0, 256], sizes = [8, 128], strides = [1, 1]} : vector<8x512xf32> to vector<8x128xf32>
    %33 = math.tanh %32 : vector<8x128xf32>
    %34 = vector.extract_strided_slice %19 {offsets = [0, 384], sizes = [8, 128], strides = [1, 1]} : vector<8x512xf32> to vector<8x128xf32>
    %35 = arith.negf %34 : vector<8x128xf32>
    %36 = math.exp %35 : vector<8x128xf32>
    %cst_19 = arith.constant 1.000000e+00 : f32
    %37 = vector.broadcast %cst_19 : f32 to vector<8x128xf32>
    %38 = arith.addf %37, %36 : vector<8x128xf32>
    %39 = arith.divf %37, %38 : vector<8x128xf32>
    %40 = arith.mulf %31, %11 : vector<8x128xf32>
    %41 = arith.mulf %25, %33 : vector<8x128xf32>
    %42 = arith.addf %40, %41 : vector<8x128xf32>
    %43 = math.tanh %42 : vector<8x128xf32>
    %44 = arith.mulf %39, %43 : vector<8x128xf32>
    %45 = arith.index_cast %13 : i32 to index
    %c0_20 = arith.constant 0 : index
    %46 = vector.load %arg10[%45, %c0_20] : memref<64x128xf32, #tpu.memory_space<vmem>>, vector<8x128xf32>
    tpu.vector_store %arg10[%45, %c0_20], %44 {strides = array<i32>} : memref<64x128xf32, #tpu.memory_space<vmem>>, vector<8x128xf32>,
    %c1_i32 = arith.constant 1 : i32
    %c8_i32_21 = arith.constant 8 : i32
    %47 = arith.muli %c1_i32, %c8_i32_21 : i32
    %48 = tpu.assume_multiple %47, 8 : i32
    %49 = arith.index_cast %48 : i32 to index
    %c0_22 = arith.constant 0 : index
    %50 = vector.load %arg9[%49, %c0_22] : memref<64x512xf32, #tpu.memory_space<vmem>>, vector<8x512xf32>
    %51 = arith.truncf %44 : vector<8x128xf32> to vector<8x128xbf16>
    %c0_23 = arith.constant 0 : index
    %c0_24 = arith.constant 0 : index
    %52 = vector.load %arg4[%c0_23, %c0_24] : memref<128x512xbf16, #tpu.memory_space<vmem>>, vector<128x512xbf16>
    %cst_25 = arith.constant dense<0.000000e+00> : vector<8x512xf32>
    %53 = tpu.matmul %51, %52, %cst_25 {dimension_numbers = #tpu.dot_dimension_numbers<[1], [0], [0], [1], [0, 0, 1, 1], [], []>} : vector<8x128xbf16>, vector<128x512xbf16>, vector<8x512xf32> -> vector<8x512xf32>
    %54 = arith.addf %50, %53 : vector<8x512xf32>
    %55 = vector.extract_strided_slice %54 {offsets = [0, 0], sizes = [8, 128], strides = [1, 1]} : vector<8x512xf32> to vector<8x128xf32>
    %56 = arith.negf %55 : vector<8x128xf32>
    %57 = math.exp %56 : vector<8x128xf32>
    %cst_26 = arith.constant 1.000000e+00 : f32
    %58 = vector.broadcast %cst_26 : f32 to vector<8x128xf32>
    %59 = arith.addf %58, %57 : vector<8x128xf32>
    %60 = arith.divf %58, %59 : vector<8x128xf32>
    %61 = vector.extract_strided_slice %54 {offsets = [0, 128], sizes = [8, 128], strides = [1, 1]} : vector<8x512xf32> to vector<8x128xf32>
    %62 = arith.negf %61 : vector<8x128xf32>
    %63 = math.exp %62 : vector<8x128xf32>
    %cst_27 = arith.constant 1.000000e+00 : f32
    %64 = vector.broadcast %cst_27 : f32 to vector<8x128xf32>
    %65 = arith.addf %64, %63 : vector<8x128xf32>
    %66 = arith.divf %64, %65 : vector<8x128xf32>
    %67 = vector.extract_strided_slice %54 {offsets = [0, 256], sizes = [8, 128], strides = [1, 1]} : vector<8x512xf32> to vector<8x128xf32>
    %68 = math.tanh %67 : vector<8x128xf32>
    %69 = vector.extract_strided_slice %54 {offsets = [0, 384], sizes = [8, 128], strides = [1, 1]} : vector<8x512xf32> to vector<8x128xf32>
    %70 = arith.negf %69 : vector<8x128xf32>
    %71 = math.exp %70 : vector<8x128xf32>
    %cst_28 = arith.constant 1.000000e+00 : f32
    %72 = vector.broadcast %cst_28 : f32 to vector<8x128xf32>
    %73 = arith.addf %72, %71 : vector<8x128xf32>
    %74 = arith.divf %72, %73 : vector<8x128xf32>
    %75 = arith.mulf %66, %42 : vector<8x128xf32>
    %76 = arith.mulf %60, %68 : vector<8x128xf32>
    %77 = arith.addf %75, %76 : vector<8x128xf32>
    %78 = math.tanh %77 : vector<8x128xf32>
    %79 = arith.mulf %74, %78 : vector<8x128xf32>
    %80 = arith.index_cast %48 : i32 to index
    %c0_29 = arith.constant 0 : index
    %81 = vector.load %arg10[%80, %c0_29] : memref<64x128xf32, #tpu.memory_space<vmem>>, vector<8x128xf32>
    tpu.vector_store %arg10[%80, %c0_29], %79 {strides = array<i32>} : memref<64x128xf32, #tpu.memory_space<vmem>>, vector<8x128xf32>,
    %c2_i32 = arith.constant 2 : i32
    %c8_i32_30 = arith.constant 8 : i32
    %82 = arith.muli %c2_i32, %c8_i32_30 : i32
    %83 = tpu.assume_multiple %82, 8 : i32
    %84 = arith.index_cast %83 : i32 to index
    %c0_31 = arith.constant 0 : index
    %85 = vector.load %arg9[%84, %c0_31] : memref<64x512xf32, #tpu.memory_space<vmem>>, vector<8x512xf32>
    %86 = arith.truncf %79 : vector<8x128xf32> to vector<8x128xbf16>
    %c0_32 = arith.constant 0 : index
    %c0_33 = arith.constant 0 : index
    %87 = vector.load %arg4[%c0_32, %c0_33] : memref<128x512xbf16, #tpu.memory_space<vmem>>, vector<128x512xbf16>
    %cst_34 = arith.constant dense<0.000000e+00> : vector<8x512xf32>
    %88 = tpu.matmul %86, %87, %cst_34 {dimension_numbers = #tpu.dot_dimension_numbers<[1], [0], [0], [1], [0, 0, 1, 1], [], []>} : vector<8x128xbf16>, vector<128x512xbf16>, vector<8x512xf32> -> vector<8x512xf32>
    %89 = arith.addf %85, %88 : vector<8x512xf32>
    %90 = vector.extract_strided_slice %89 {offsets = [0, 0], sizes = [8, 128], strides = [1, 1]} : vector<8x512xf32> to vector<8x128xf32>
    %91 = arith.negf %90 : vector<8x128xf32>
    %92 = math.exp %91 : vector<8x128xf32>
    %cst_35 = arith.constant 1.000000e+00 : f32
    %93 = vector.broadcast %cst_35 : f32 to vector<8x128xf32>
    %94 = arith.addf %93, %92 : vector<8x128xf32>
    %95 = arith.divf %93, %94 : vector<8x128xf32>
    %96 = vector.extract_strided_slice %89 {offsets = [0, 128], sizes = [8, 128], strides = [1, 1]} : vector<8x512xf32> to vector<8x128xf32>
    %97 = arith.negf %96 : vector<8x128xf32>
    %98 = math.exp %97 : vector<8x128xf32>
    %cst_36 = arith.constant 1.000000e+00 : f32
    %99 = vector.broadcast %cst_36 : f32 to vector<8x128xf32>
    %100 = arith.addf %99, %98 : vector<8x128xf32>
    %101 = arith.divf %99, %100 : vector<8x128xf32>
    %102 = vector.extract_strided_slice %89 {offsets = [0, 256], sizes = [8, 128], strides = [1, 1]} : vector<8x512xf32> to vector<8x128xf32>
    %103 = math.tanh %102 : vector<8x128xf32>
    %104 = vector.extract_strided_slice %89 {offsets = [0, 384], sizes = [8, 128], strides = [1, 1]} : vector<8x512xf32> to vector<8x128xf32>
    %105 = arith.negf %104 : vector<8x128xf32>
    %106 = math.exp %105 : vector<8x128xf32>
    %cst_37 = arith.constant 1.000000e+00 : f32
    %107 = vector.broadcast %cst_37 : f32 to vector<8x128xf32>
    %108 = arith.addf %107, %106 : vector<8x128xf32>
    %109 = arith.divf %107, %108 : vector<8x128xf32>
    %110 = arith.mulf %101, %77 : vector<8x128xf32>
    %111 = arith.mulf %95, %103 : vector<8x128xf32>
    %112 = arith.addf %110, %111 : vector<8x128xf32>
    %113 = math.tanh %112 : vector<8x128xf32>
    %114 = arith.mulf %109, %113 : vector<8x128xf32>
    %115 = arith.index_cast %83 : i32 to index
    %c0_38 = arith.constant 0 : index
    %116 = vector.load %arg10[%115, %c0_38] : memref<64x128xf32, #tpu.memory_space<vmem>>, vector<8x128xf32>
    tpu.vector_store %arg10[%115, %c0_38], %114 {strides = array<i32>} : memref<64x128xf32, #tpu.memory_space<vmem>>, vector<8x128xf32>,
    %c3_i32 = arith.constant 3 : i32
    %c8_i32_39 = arith.constant 8 : i32
    %117 = arith.muli %c3_i32, %c8_i32_39 : i32
    %118 = tpu.assume_multiple %117, 8 : i32
    %119 = arith.index_cast %118 : i32 to index
    %c0_40 = arith.constant 0 : index
    %120 = vector.load %arg9[%119, %c0_40] : memref<64x512xf32, #tpu.memory_space<vmem>>, vector<8x512xf32>
    %121 = arith.truncf %114 : vector<8x128xf32> to vector<8x128xbf16>
    %c0_41 = arith.constant 0 : index
    %c0_42 = arith.constant 0 : index
    %122 = vector.load %arg4[%c0_41, %c0_42] : memref<128x512xbf16, #tpu.memory_space<vmem>>, vector<128x512xbf16>
    %cst_43 = arith.constant dense<0.000000e+00> : vector<8x512xf32>
    %123 = tpu.matmul %121, %122, %cst_43 {dimension_numbers = #tpu.dot_dimension_numbers<[1], [0], [0], [1], [0, 0, 1, 1], [], []>} : vector<8x128xbf16>, vector<128x512xbf16>, vector<8x512xf32> -> vector<8x512xf32>
    %124 = arith.addf %120, %123 : vector<8x512xf32>
    %125 = vector.extract_strided_slice %124 {offsets = [0, 0], sizes = [8, 128], strides = [1, 1]} : vector<8x512xf32> to vector<8x128xf32>
    %126 = arith.negf %125 : vector<8x128xf32>
    %127 = math.exp %126 : vector<8x128xf32>
    %cst_44 = arith.constant 1.000000e+00 : f32
    %128 = vector.broadcast %cst_44 : f32 to vector<8x128xf32>
    %129 = arith.addf %128, %127 : vector<8x128xf32>
    %130 = arith.divf %128, %129 : vector<8x128xf32>
    %131 = vector.extract_strided_slice %124 {offsets = [0, 128], sizes = [8, 128], strides = [1, 1]} : vector<8x512xf32> to vector<8x128xf32>
    %132 = arith.negf %131 : vector<8x128xf32>
    %133 = math.exp %132 : vector<8x128xf32>
    %cst_45 = arith.constant 1.000000e+00 : f32
    %134 = vector.broadcast %cst_45 : f32 to vector<8x128xf32>
    %135 = arith.addf %134, %133 : vector<8x128xf32>
    %136 = arith.divf %134, %135 : vector<8x128xf32>
    %137 = vector.extract_strided_slice %124 {offsets = [0, 256], sizes = [8, 128], strides = [1, 1]} : vector<8x512xf32> to vector<8x128xf32>
    %138 = math.tanh %137 : vector<8x128xf32>
    %139 = vector.extract_strided_slice %124 {offsets = [0, 384], sizes = [8, 128], strides = [1, 1]} : vector<8x512xf32> to vector<8x128xf32>
    %140 = arith.negf %139 : vector<8x128xf32>
    %141 = math.exp %140 : vector<8x128xf32>
    %cst_46 = arith.constant 1.000000e+00 : f32
    %142 = vector.broadcast %cst_46 : f32 to vector<8x128xf32>
    %143 = arith.addf %142, %141 : vector<8x128xf32>
    %144 = arith.divf %142, %143 : vector<8x128xf32>
    %145 = arith.mulf %136, %112 : vector<8x128xf32>
    %146 = arith.mulf %130, %138 : vector<8x128xf32>
    %147 = arith.addf %145, %146 : vector<8x128xf32>
    %148 = math.tanh %147 : vector<8x128xf32>
    %149 = arith.mulf %144, %148 : vector<8x128xf32>
    %150 = arith.index_cast %118 : i32 to index
    %c0_47 = arith.constant 0 : index
    %151 = vector.load %arg10[%150, %c0_47] : memref<64x128xf32, #tpu.memory_space<vmem>>, vector<8x128xf32>
    tpu.vector_store %arg10[%150, %c0_47], %149 {strides = array<i32>} : memref<64x128xf32, #tpu.memory_space<vmem>>, vector<8x128xf32>,
    %c4_i32 = arith.constant 4 : i32
    %c8_i32_48 = arith.constant 8 : i32
    %152 = arith.muli %c4_i32, %c8_i32_48 : i32
    %153 = tpu.assume_multiple %152, 8 : i32
    %154 = arith.index_cast %153 : i32 to index
    %c0_49 = arith.constant 0 : index
    %155 = vector.load %arg9[%154, %c0_49] : memref<64x512xf32, #tpu.memory_space<vmem>>, vector<8x512xf32>
    %156 = arith.truncf %149 : vector<8x128xf32> to vector<8x128xbf16>
    %c0_50 = arith.constant 0 : index
    %c0_51 = arith.constant 0 : index
    %157 = vector.load %arg4[%c0_50, %c0_51] : memref<128x512xbf16, #tpu.memory_space<vmem>>, vector<128x512xbf16>
    %cst_52 = arith.constant dense<0.000000e+00> : vector<8x512xf32>
    %158 = tpu.matmul %156, %157, %cst_52 {dimension_numbers = #tpu.dot_dimension_numbers<[1], [0], [0], [1], [0, 0, 1, 1], [], []>} : vector<8x128xbf16>, vector<128x512xbf16>, vector<8x512xf32> -> vector<8x512xf32>
    %159 = arith.addf %155, %158 : vector<8x512xf32>
    %160 = vector.extract_strided_slice %159 {offsets = [0, 0], sizes = [8, 128], strides = [1, 1]} : vector<8x512xf32> to vector<8x128xf32>
    %161 = arith.negf %160 : vector<8x128xf32>
    %162 = math.exp %161 : vector<8x128xf32>
    %cst_53 = arith.constant 1.000000e+00 : f32
    %163 = vector.broadcast %cst_53 : f32 to vector<8x128xf32>
    %164 = arith.addf %163, %162 : vector<8x128xf32>
    %165 = arith.divf %163, %164 : vector<8x128xf32>
    %166 = vector.extract_strided_slice %159 {offsets = [0, 128], sizes = [8, 128], strides = [1, 1]} : vector<8x512xf32> to vector<8x128xf32>
    %167 = arith.negf %166 : vector<8x128xf32>
    %168 = math.exp %167 : vector<8x128xf32>
    %cst_54 = arith.constant 1.000000e+00 : f32
    %169 = vector.broadcast %cst_54 : f32 to vector<8x128xf32>
    %170 = arith.addf %169, %168 : vector<8x128xf32>
    %171 = arith.divf %169, %170 : vector<8x128xf32>
    %172 = vector.extract_strided_slice %159 {offsets = [0, 256], sizes = [8, 128], strides = [1, 1]} : vector<8x512xf32> to vector<8x128xf32>
    %173 = math.tanh %172 : vector<8x128xf32>
    %174 = vector.extract_strided_slice %159 {offsets = [0, 384], sizes = [8, 128], strides = [1, 1]} : vector<8x512xf32> to vector<8x128xf32>
    %175 = arith.negf %174 : vector<8x128xf32>
    %176 = math.exp %175 : vector<8x128xf32>
    %cst_55 = arith.constant 1.000000e+00 : f32
    %177 = vector.broadcast %cst_55 : f32 to vector<8x128xf32>
    %178 = arith.addf %177, %176 : vector<8x128xf32>
    %179 = arith.divf %177, %178 : vector<8x128xf32>
    %180 = arith.mulf %171, %147 : vector<8x128xf32>
    %181 = arith.mulf %165, %173 : vector<8x128xf32>
    %182 = arith.addf %180, %181 : vector<8x128xf32>
    %183 = math.tanh %182 : vector<8x128xf32>
    %184 = arith.mulf %179, %183 : vector<8x128xf32>
    %185 = arith.index_cast %153 : i32 to index
    %c0_56 = arith.constant 0 : index
    %186 = vector.load %arg10[%185, %c0_56] : memref<64x128xf32, #tpu.memory_space<vmem>>, vector<8x128xf32>
    tpu.vector_store %arg10[%185, %c0_56], %184 {strides = array<i32>} : memref<64x128xf32, #tpu.memory_space<vmem>>, vector<8x128xf32>,
    %c5_i32 = arith.constant 5 : i32
    %c8_i32_57 = arith.constant 8 : i32
    %187 = arith.muli %c5_i32, %c8_i32_57 : i32
    %188 = tpu.assume_multiple %187, 8 : i32
    %189 = arith.index_cast %188 : i32 to index
    %c0_58 = arith.constant 0 : index
    %190 = vector.load %arg9[%189, %c0_58] : memref<64x512xf32, #tpu.memory_space<vmem>>, vector<8x512xf32>
    %191 = arith.truncf %184 : vector<8x128xf32> to vector<8x128xbf16>
    %c0_59 = arith.constant 0 : index
    %c0_60 = arith.constant 0 : index
    %192 = vector.load %arg4[%c0_59, %c0_60] : memref<128x512xbf16, #tpu.memory_space<vmem>>, vector<128x512xbf16>
    %cst_61 = arith.constant dense<0.000000e+00> : vector<8x512xf32>
    %193 = tpu.matmul %191, %192, %cst_61 {dimension_numbers = #tpu.dot_dimension_numbers<[1], [0], [0], [1], [0, 0, 1, 1], [], []>} : vector<8x128xbf16>, vector<128x512xbf16>, vector<8x512xf32> -> vector<8x512xf32>
    %194 = arith.addf %190, %193 : vector<8x512xf32>
    %195 = vector.extract_strided_slice %194 {offsets = [0, 0], sizes = [8, 128], strides = [1, 1]} : vector<8x512xf32> to vector<8x128xf32>
    %196 = arith.negf %195 : vector<8x128xf32>
    %197 = math.exp %196 : vector<8x128xf32>
    %cst_62 = arith.constant 1.000000e+00 : f32
    %198 = vector.broadcast %cst_62 : f32 to vector<8x128xf32>
    %199 = arith.addf %198, %197 : vector<8x128xf32>
    %200 = arith.divf %198, %199 : vector<8x128xf32>
    %201 = vector.extract_strided_slice %194 {offsets = [0, 128], sizes = [8, 128], strides = [1, 1]} : vector<8x512xf32> to vector<8x128xf32>
    %202 = arith.negf %201 : vector<8x128xf32>
    %203 = math.exp %202 : vector<8x128xf32>
    %cst_63 = arith.constant 1.000000e+00 : f32
    %204 = vector.broadcast %cst_63 : f32 to vector<8x128xf32>
    %205 = arith.addf %204, %203 : vector<8x128xf32>
    %206 = arith.divf %204, %205 : vector<8x128xf32>
    %207 = vector.extract_strided_slice %194 {offsets = [0, 256], sizes = [8, 128], strides = [1, 1]} : vector<8x512xf32> to vector<8x128xf32>
    %208 = math.tanh %207 : vector<8x128xf32>
    %209 = vector.extract_strided_slice %194 {offsets = [0, 384], sizes = [8, 128], strides = [1, 1]} : vector<8x512xf32> to vector<8x128xf32>
    %210 = arith.negf %209 : vector<8x128xf32>
    %211 = math.exp %210 : vector<8x128xf32>
    %cst_64 = arith.constant 1.000000e+00 : f32
    %212 = vector.broadcast %cst_64 : f32 to vector<8x128xf32>
    %213 = arith.addf %212, %211 : vector<8x128xf32>
    %214 = arith.divf %212, %213 : vector<8x128xf32>
    %215 = arith.mulf %206, %182 : vector<8x128xf32>
    %216 = arith.mulf %200, %208 : vector<8x128xf32>
    %217 = arith.addf %215, %216 : vector<8x128xf32>
    %218 = math.tanh %217 : vector<8x128xf32>
    %219 = arith.mulf %214, %218 : vector<8x128xf32>
    %220 = arith.index_cast %188 : i32 to index
    %c0_65 = arith.constant 0 : index
    %221 = vector.load %arg10[%220, %c0_65] : memref<64x128xf32, #tpu.memory_space<vmem>>, vector<8x128xf32>
    tpu.vector_store %arg10[%220, %c0_65], %219 {strides = array<i32>} : memref<64x128xf32, #tpu.memory_space<vmem>>, vector<8x128xf32>,
    %c6_i32 = arith.constant 6 : i32
    %c8_i32_66 = arith.constant 8 : i32
    %222 = arith.muli %c6_i32, %c8_i32_66 : i32
    %223 = tpu.assume_multiple %222, 8 : i32
    %224 = arith.index_cast %223 : i32 to index
    %c0_67 = arith.constant 0 : index
    %225 = vector.load %arg9[%224, %c0_67] : memref<64x512xf32, #tpu.memory_space<vmem>>, vector<8x512xf32>
    %226 = arith.truncf %219 : vector<8x128xf32> to vector<8x128xbf16>
    %c0_68 = arith.constant 0 : index
    %c0_69 = arith.constant 0 : index
    %227 = vector.load %arg4[%c0_68, %c0_69] : memref<128x512xbf16, #tpu.memory_space<vmem>>, vector<128x512xbf16>
    %cst_70 = arith.constant dense<0.000000e+00> : vector<8x512xf32>
    %228 = tpu.matmul %226, %227, %cst_70 {dimension_numbers = #tpu.dot_dimension_numbers<[1], [0], [0], [1], [0, 0, 1, 1], [], []>} : vector<8x128xbf16>, vector<128x512xbf16>, vector<8x512xf32> -> vector<8x512xf32>
    %229 = arith.addf %225, %228 : vector<8x512xf32>
    %230 = vector.extract_strided_slice %229 {offsets = [0, 0], sizes = [8, 128], strides = [1, 1]} : vector<8x512xf32> to vector<8x128xf32>
    %231 = arith.negf %230 : vector<8x128xf32>
    %232 = math.exp %231 : vector<8x128xf32>
    %cst_71 = arith.constant 1.000000e+00 : f32
    %233 = vector.broadcast %cst_71 : f32 to vector<8x128xf32>
    %234 = arith.addf %233, %232 : vector<8x128xf32>
    %235 = arith.divf %233, %234 : vector<8x128xf32>
    %236 = vector.extract_strided_slice %229 {offsets = [0, 128], sizes = [8, 128], strides = [1, 1]} : vector<8x512xf32> to vector<8x128xf32>
    %237 = arith.negf %236 : vector<8x128xf32>
    %238 = math.exp %237 : vector<8x128xf32>
    %cst_72 = arith.constant 1.000000e+00 : f32
    %239 = vector.broadcast %cst_72 : f32 to vector<8x128xf32>
    %240 = arith.addf %239, %238 : vector<8x128xf32>
    %241 = arith.divf %239, %240 : vector<8x128xf32>
    %242 = vector.extract_strided_slice %229 {offsets = [0, 256], sizes = [8, 128], strides = [1, 1]} : vector<8x512xf32> to vector<8x128xf32>
    %243 = math.tanh %242 : vector<8x128xf32>
    %244 = vector.extract_strided_slice %229 {offsets = [0, 384], sizes = [8, 128], strides = [1, 1]} : vector<8x512xf32> to vector<8x128xf32>
    %245 = arith.negf %244 : vector<8x128xf32>
    %246 = math.exp %245 : vector<8x128xf32>
    %cst_73 = arith.constant 1.000000e+00 : f32
    %247 = vector.broadcast %cst_73 : f32 to vector<8x128xf32>
    %248 = arith.addf %247, %246 : vector<8x128xf32>
    %249 = arith.divf %247, %248 : vector<8x128xf32>
    %250 = arith.mulf %241, %217 : vector<8x128xf32>
    %251 = arith.mulf %235, %243 : vector<8x128xf32>
    %252 = arith.addf %250, %251 : vector<8x128xf32>
    %253 = math.tanh %252 : vector<8x128xf32>
    %254 = arith.mulf %249, %253 : vector<8x128xf32>
    %255 = arith.index_cast %223 : i32 to index
    %c0_74 = arith.constant 0 : index
    %256 = vector.load %arg10[%255, %c0_74] : memref<64x128xf32, #tpu.memory_space<vmem>>, vector<8x128xf32>
    tpu.vector_store %arg10[%255, %c0_74], %254 {strides = array<i32>} : memref<64x128xf32, #tpu.memory_space<vmem>>, vector<8x128xf32>,
    %c7_i32 = arith.constant 7 : i32
    %c8_i32_75 = arith.constant 8 : i32
    %257 = arith.muli %c7_i32, %c8_i32_75 : i32
    %258 = tpu.assume_multiple %257, 8 : i32
    %259 = arith.index_cast %258 : i32 to index
    %c0_76 = arith.constant 0 : index
    %260 = vector.load %arg9[%259, %c0_76] : memref<64x512xf32, #tpu.memory_space<vmem>>, vector<8x512xf32>
    %261 = arith.truncf %254 : vector<8x128xf32> to vector<8x128xbf16>
    %c0_77 = arith.constant 0 : index
    %c0_78 = arith.constant 0 : index
    %262 = vector.load %arg4[%c0_77, %c0_78] : memref<128x512xbf16, #tpu.memory_space<vmem>>, vector<128x512xbf16>
    %cst_79 = arith.constant dense<0.000000e+00> : vector<8x512xf32>
    %263 = tpu.matmul %261, %262, %cst_79 {dimension_numbers = #tpu.dot_dimension_numbers<[1], [0], [0], [1], [0, 0, 1, 1], [], []>} : vector<8x128xbf16>, vector<128x512xbf16>, vector<8x512xf32> -> vector<8x512xf32>
    %264 = arith.addf %260, %263 : vector<8x512xf32>
    %265 = vector.extract_strided_slice %264 {offsets = [0, 0], sizes = [8, 128], strides = [1, 1]} : vector<8x512xf32> to vector<8x128xf32>
    %266 = arith.negf %265 : vector<8x128xf32>
    %267 = math.exp %266 : vector<8x128xf32>
    %cst_80 = arith.constant 1.000000e+00 : f32
    %268 = vector.broadcast %cst_80 : f32 to vector<8x128xf32>
    %269 = arith.addf %268, %267 : vector<8x128xf32>
    %270 = arith.divf %268, %269 : vector<8x128xf32>
    %271 = vector.extract_strided_slice %264 {offsets = [0, 128], sizes = [8, 128], strides = [1, 1]} : vector<8x512xf32> to vector<8x128xf32>
    %272 = arith.negf %271 : vector<8x128xf32>
    %273 = math.exp %272 : vector<8x128xf32>
    %cst_81 = arith.constant 1.000000e+00 : f32
    %274 = vector.broadcast %cst_81 : f32 to vector<8x128xf32>
    %275 = arith.addf %274, %273 : vector<8x128xf32>
    %276 = arith.divf %274, %275 : vector<8x128xf32>
    %277 = vector.extract_strided_slice %264 {offsets = [0, 256], sizes = [8, 128], strides = [1, 1]} : vector<8x512xf32> to vector<8x128xf32>
    %278 = math.tanh %277 : vector<8x128xf32>
    %279 = vector.extract_strided_slice %264 {offsets = [0, 384], sizes = [8, 128], strides = [1, 1]} : vector<8x512xf32> to vector<8x128xf32>
    %280 = arith.negf %279 : vector<8x128xf32>
    %281 = math.exp %280 : vector<8x128xf32>
    %cst_82 = arith.constant 1.000000e+00 : f32
    %282 = vector.broadcast %cst_82 : f32 to vector<8x128xf32>
    %283 = arith.addf %282, %281 : vector<8x128xf32>
    %284 = arith.divf %282, %283 : vector<8x128xf32>
    %285 = arith.mulf %276, %252 : vector<8x128xf32>
    %286 = arith.mulf %270, %278 : vector<8x128xf32>
    %287 = arith.addf %285, %286 : vector<8x128xf32>
    %288 = math.tanh %287 : vector<8x128xf32>
    %289 = arith.mulf %284, %288 : vector<8x128xf32>
    %290 = arith.index_cast %258 : i32 to index
    %c0_83 = arith.constant 0 : index
    %291 = vector.load %arg10[%290, %c0_83] : memref<64x128xf32, #tpu.memory_space<vmem>>, vector<8x128xf32>
    tpu.vector_store %arg10[%290, %c0_83], %289 {strides = array<i32>} : memref<64x128xf32, #tpu.memory_space<vmem>>, vector<8x128xf32>,
    %c8_i32_84 = arith.constant 8 : i32
    %c0_85 = arith.constant 0 : index
    %c0_86 = arith.constant 0 : index
    %292 = vector.load %arg11[%c0_85, %c0_86] : memref<8x128xf32, #tpu.memory_space<vmem>>, vector<8x128xf32>
    tpu.vector_store %arg11[%c0_85, %c0_86], %289 {strides = array<i32>} : memref<8x128xf32, #tpu.memory_space<vmem>>, vector<8x128xf32>,
    %c0_87 = arith.constant 0 : index
    %c0_88 = arith.constant 0 : index
    %293 = vector.load %arg12[%c0_87, %c0_88] : memref<8x128xf32, #tpu.memory_space<vmem>>, vector<8x128xf32>
    tpu.vector_store %arg12[%c0_87, %c0_88], %287 {strides = array<i32>} : memref<8x128xf32, #tpu.memory_space<vmem>>, vector<8x128xf32>,
    %c0_89 = arith.constant 0 : index
    %c0_90 = arith.constant 0 : index
    %294 = vector.load %arg10[%c0_89, %c0_90] : memref<64x128xf32, #tpu.memory_space<vmem>>, vector<64x128xf32>
    %295 = arith.truncf %294 : vector<64x128xf32> to vector<64x128xbf16>
    %c0_91 = arith.constant 0 : index
    %c0_92 = arith.constant 0 : index
    %296 = vector.load %arg5[%c0_91, %c0_92] : memref<128x512xbf16, #tpu.memory_space<vmem>>, vector<128x512xbf16>
    %cst_93 = arith.constant dense<0.000000e+00> : vector<64x512xf32>
    %297 = tpu.matmul %295, %296, %cst_93 {dimension_numbers = #tpu.dot_dimension_numbers<[1], [0], [0], [1], [0, 0, 1, 1], [], []>} : vector<64x128xbf16>, vector<128x512xbf16>, vector<64x512xf32> -> vector<64x512xf32>
    %c0_94 = arith.constant 0 : index
    %c0_95 = arith.constant 0 : index
    %298 = vector.load %arg7[%c0_94, %c0_95] : memref<1x512xf32, #tpu.memory_space<vmem>>, vector<1x512xf32>
    %299 = vector.broadcast %298 : vector<1x512xf32> to vector<64x512xf32>
    %300 = arith.addf %297, %299 : vector<64x512xf32>
    %c0_96 = arith.constant 0 : index
    %c0_97 = arith.constant 0 : index
    %301 = vector.load %arg9[%c0_96, %c0_97] : memref<64x512xf32, #tpu.memory_space<vmem>>, vector<64x512xf32>
    tpu.vector_store %arg9[%c0_96, %c0_97], %300 {strides = array<i32>} : memref<64x512xf32, #tpu.memory_space<vmem>>, vector<64x512xf32>,
    %c0_98 = arith.constant 0 : index
    %c0_99 = arith.constant 0 : index
    %302 = vector.load %arg13[%c0_98, %c0_99] : memref<8x128xf32, #tpu.memory_space<vmem>>, vector<8x128xf32>
    %c0_100 = arith.constant 0 : index
    %c0_101 = arith.constant 0 : index
    %303 = vector.load %arg14[%c0_100, %c0_101] : memref<8x128xf32, #tpu.memory_space<vmem>>, vector<8x128xf32>
    %c0_i32_102 = arith.constant 0 : i32
    %c8_i32_103 = arith.constant 8 : i32
    %304 = arith.muli %c0_i32_102, %c8_i32_103 : i32
    %305 = tpu.assume_multiple %304, 8 : i32
    %306 = arith.index_cast %305 : i32 to index
    %c0_104 = arith.constant 0 : index
    %307 = vector.load %arg9[%306, %c0_104] : memref<64x512xf32, #tpu.memory_space<vmem>>, vector<8x512xf32>
    %308 = arith.truncf %302 : vector<8x128xf32> to vector<8x128xbf16>
    %c0_105 = arith.constant 0 : index
    %c0_106 = arith.constant 0 : index
    %309 = vector.load %arg6[%c0_105, %c0_106] : memref<128x512xbf16, #tpu.memory_space<vmem>>, vector<128x512xbf16>
    %cst_107 = arith.constant dense<0.000000e+00> : vector<8x512xf32>
    %310 = tpu.matmul %308, %309, %cst_107 {dimension_numbers = #tpu.dot_dimension_numbers<[1], [0], [0], [1], [0, 0, 1, 1], [], []>} : vector<8x128xbf16>, vector<128x512xbf16>, vector<8x512xf32> -> vector<8x512xf32>
    %311 = arith.addf %307, %310 : vector<8x512xf32>
    %312 = vector.extract_strided_slice %311 {offsets = [0, 0], sizes = [8, 128], strides = [1, 1]} : vector<8x512xf32> to vector<8x128xf32>
    %313 = arith.negf %312 : vector<8x128xf32>
    %314 = math.exp %313 : vector<8x128xf32>
    %cst_108 = arith.constant 1.000000e+00 : f32
    %315 = vector.broadcast %cst_108 : f32 to vector<8x128xf32>
    %316 = arith.addf %315, %314 : vector<8x128xf32>
    %317 = arith.divf %315, %316 : vector<8x128xf32>
    %318 = vector.extract_strided_slice %311 {offsets = [0, 128], sizes = [8, 128], strides = [1, 1]} : vector<8x512xf32> to vector<8x128xf32>
    %319 = arith.negf %318 : vector<8x128xf32>
    %320 = math.exp %319 : vector<8x128xf32>
    %cst_109 = arith.constant 1.000000e+00 : f32
    %321 = vector.broadcast %cst_109 : f32 to vector<8x128xf32>
    %322 = arith.addf %321, %320 : vector<8x128xf32>
    %323 = arith.divf %321, %322 : vector<8x128xf32>
    %324 = vector.extract_strided_slice %311 {offsets = [0, 256], sizes = [8, 128], strides = [1, 1]} : vector<8x512xf32> to vector<8x128xf32>
    %325 = math.tanh %324 : vector<8x128xf32>
    %326 = vector.extract_strided_slice %311 {offsets = [0, 384], sizes = [8, 128], strides = [1, 1]} : vector<8x512xf32> to vector<8x128xf32>
    %327 = arith.negf %326 : vector<8x128xf32>
    %328 = math.exp %327 : vector<8x128xf32>
    %cst_110 = arith.constant 1.000000e+00 : f32
    %329 = vector.broadcast %cst_110 : f32 to vector<8x128xf32>
    %330 = arith.addf %329, %328 : vector<8x128xf32>
    %331 = arith.divf %329, %330 : vector<8x128xf32>
    %332 = arith.mulf %323, %303 : vector<8x128xf32>
    %333 = arith.mulf %317, %325 : vector<8x128xf32>
    %334 = arith.addf %332, %333 : vector<8x128xf32>
    %335 = math.tanh %334 : vector<8x128xf32>
    %336 = arith.mulf %331, %335 : vector<8x128xf32>
    %cst_111 = arith.constant 0.000000e+00 : f32
    %337 = vector.broadcast %cst_111 : f32 to vector<8x128xf32>
    %338 = arith.maximumf %336, %337 : vector<8x128xf32>
    %339 = arith.index_cast %305 : i32 to index
    %c0_112 = arith.constant 0 : index
    %340 = vector.load %arg8[%339, %c0_112] : memref<64x128xf32, #tpu.memory_space<vmem>>, vector<8x128xf32>
    tpu.vector_store %arg8[%339, %c0_112], %338 {strides = array<i32>} : memref<64x128xf32, #tpu.memory_space<vmem>>, vector<8x128xf32>,
    %c1_i32_113 = arith.constant 1 : i32
    %c8_i32_114 = arith.constant 8 : i32
    %341 = arith.muli %c1_i32_113, %c8_i32_114 : i32
    %342 = tpu.assume_multiple %341, 8 : i32
    %343 = arith.index_cast %342 : i32 to index
    %c0_115 = arith.constant 0 : index
    %344 = vector.load %arg9[%343, %c0_115] : memref<64x512xf32, #tpu.memory_space<vmem>>, vector<8x512xf32>
    %345 = arith.truncf %336 : vector<8x128xf32> to vector<8x128xbf16>
    %c0_116 = arith.constant 0 : index
    %c0_117 = arith.constant 0 : index
    %346 = vector.load %arg6[%c0_116, %c0_117] : memref<128x512xbf16, #tpu.memory_space<vmem>>, vector<128x512xbf16>
    %cst_118 = arith.constant dense<0.000000e+00> : vector<8x512xf32>
    %347 = tpu.matmul %345, %346, %cst_118 {dimension_numbers = #tpu.dot_dimension_numbers<[1], [0], [0], [1], [0, 0, 1, 1], [], []>} : vector<8x128xbf16>, vector<128x512xbf16>, vector<8x512xf32> -> vector<8x512xf32>
    %348 = arith.addf %344, %347 : vector<8x512xf32>
    %349 = vector.extract_strided_slice %348 {offsets = [0, 0], sizes = [8, 128], strides = [1, 1]} : vector<8x512xf32> to vector<8x128xf32>
    %350 = arith.negf %349 : vector<8x128xf32>
    %351 = math.exp %350 : vector<8x128xf32>
    %cst_119 = arith.constant 1.000000e+00 : f32
    %352 = vector.broadcast %cst_119 : f32 to vector<8x128xf32>
    %353 = arith.addf %352, %351 : vector<8x128xf32>
    %354 = arith.divf %352, %353 : vector<8x128xf32>
    %355 = vector.extract_strided_slice %348 {offsets = [0, 128], sizes = [8, 128], strides = [1, 1]} : vector<8x512xf32> to vector<8x128xf32>
    %356 = arith.negf %355 : vector<8x128xf32>
    %357 = math.exp %356 : vector<8x128xf32>
    %cst_120 = arith.constant 1.000000e+00 : f32
    %358 = vector.broadcast %cst_120 : f32 to vector<8x128xf32>
    %359 = arith.addf %358, %357 : vector<8x128xf32>
    %360 = arith.divf %358, %359 : vector<8x128xf32>
    %361 = vector.extract_strided_slice %348 {offsets = [0, 256], sizes = [8, 128], strides = [1, 1]} : vector<8x512xf32> to vector<8x128xf32>
    %362 = math.tanh %361 : vector<8x128xf32>
    %363 = vector.extract_strided_slice %348 {offsets = [0, 384], sizes = [8, 128], strides = [1, 1]} : vector<8x512xf32> to vector<8x128xf32>
    %364 = arith.negf %363 : vector<8x128xf32>
    %365 = math.exp %364 : vector<8x128xf32>
    %cst_121 = arith.constant 1.000000e+00 : f32
    %366 = vector.broadcast %cst_121 : f32 to vector<8x128xf32>
    %367 = arith.addf %366, %365 : vector<8x128xf32>
    %368 = arith.divf %366, %367 : vector<8x128xf32>
    %369 = arith.mulf %360, %334 : vector<8x128xf32>
    %370 = arith.mulf %354, %362 : vector<8x128xf32>
    %371 = arith.addf %369, %370 : vector<8x128xf32>
    %372 = math.tanh %371 : vector<8x128xf32>
    %373 = arith.mulf %368, %372 : vector<8x128xf32>
    %cst_122 = arith.constant 0.000000e+00 : f32
    %374 = vector.broadcast %cst_122 : f32 to vector<8x128xf32>
    %375 = arith.maximumf %373, %374 : vector<8x128xf32>
    %376 = arith.index_cast %342 : i32 to index
    %c0_123 = arith.constant 0 : index
    %377 = vector.load %arg8[%376, %c0_123] : memref<64x128xf32, #tpu.memory_space<vmem>>, vector<8x128xf32>
    tpu.vector_store %arg8[%376, %c0_123], %375 {strides = array<i32>} : memref<64x128xf32, #tpu.memory_space<vmem>>, vector<8x128xf32>,
    %c2_i32_124 = arith.constant 2 : i32
    %c8_i32_125 = arith.constant 8 : i32
    %378 = arith.muli %c2_i32_124, %c8_i32_125 : i32
    %379 = tpu.assume_multiple %378, 8 : i32
    %380 = arith.index_cast %379 : i32 to index
    %c0_126 = arith.constant 0 : index
    %381 = vector.load %arg9[%380, %c0_126] : memref<64x512xf32, #tpu.memory_space<vmem>>, vector<8x512xf32>
    %382 = arith.truncf %373 : vector<8x128xf32> to vector<8x128xbf16>
    %c0_127 = arith.constant 0 : index
    %c0_128 = arith.constant 0 : index
    %383 = vector.load %arg6[%c0_127, %c0_128] : memref<128x512xbf16, #tpu.memory_space<vmem>>, vector<128x512xbf16>
    %cst_129 = arith.constant dense<0.000000e+00> : vector<8x512xf32>
    %384 = tpu.matmul %382, %383, %cst_129 {dimension_numbers = #tpu.dot_dimension_numbers<[1], [0], [0], [1], [0, 0, 1, 1], [], []>} : vector<8x128xbf16>, vector<128x512xbf16>, vector<8x512xf32> -> vector<8x512xf32>
    %385 = arith.addf %381, %384 : vector<8x512xf32>
    %386 = vector.extract_strided_slice %385 {offsets = [0, 0], sizes = [8, 128], strides = [1, 1]} : vector<8x512xf32> to vector<8x128xf32>
    %387 = arith.negf %386 : vector<8x128xf32>
    %388 = math.exp %387 : vector<8x128xf32>
    %cst_130 = arith.constant 1.000000e+00 : f32
    %389 = vector.broadcast %cst_130 : f32 to vector<8x128xf32>
    %390 = arith.addf %389, %388 : vector<8x128xf32>
    %391 = arith.divf %389, %390 : vector<8x128xf32>
    %392 = vector.extract_strided_slice %385 {offsets = [0, 128], sizes = [8, 128], strides = [1, 1]} : vector<8x512xf32> to vector<8x128xf32>
    %393 = arith.negf %392 : vector<8x128xf32>
    %394 = math.exp %393 : vector<8x128xf32>
    %cst_131 = arith.constant 1.000000e+00 : f32
    %395 = vector.broadcast %cst_131 : f32 to vector<8x128xf32>
    %396 = arith.addf %395, %394 : vector<8x128xf32>
    %397 = arith.divf %395, %396 : vector<8x128xf32>
    %398 = vector.extract_strided_slice %385 {offsets = [0, 256], sizes = [8, 128], strides = [1, 1]} : vector<8x512xf32> to vector<8x128xf32>
    %399 = math.tanh %398 : vector<8x128xf32>
    %400 = vector.extract_strided_slice %385 {offsets = [0, 384], sizes = [8, 128], strides = [1, 1]} : vector<8x512xf32> to vector<8x128xf32>
    %401 = arith.negf %400 : vector<8x128xf32>
    %402 = math.exp %401 : vector<8x128xf32>
    %cst_132 = arith.constant 1.000000e+00 : f32
    %403 = vector.broadcast %cst_132 : f32 to vector<8x128xf32>
    %404 = arith.addf %403, %402 : vector<8x128xf32>
    %405 = arith.divf %403, %404 : vector<8x128xf32>
    %406 = arith.mulf %397, %371 : vector<8x128xf32>
    %407 = arith.mulf %391, %399 : vector<8x128xf32>
    %408 = arith.addf %406, %407 : vector<8x128xf32>
    %409 = math.tanh %408 : vector<8x128xf32>
    %410 = arith.mulf %405, %409 : vector<8x128xf32>
    %cst_133 = arith.constant 0.000000e+00 : f32
    %411 = vector.broadcast %cst_133 : f32 to vector<8x128xf32>
    %412 = arith.maximumf %410, %411 : vector<8x128xf32>
    %413 = arith.index_cast %379 : i32 to index
    %c0_134 = arith.constant 0 : index
    %414 = vector.load %arg8[%413, %c0_134] : memref<64x128xf32, #tpu.memory_space<vmem>>, vector<8x128xf32>
    tpu.vector_store %arg8[%413, %c0_134], %412 {strides = array<i32>} : memref<64x128xf32, #tpu.memory_space<vmem>>, vector<8x128xf32>,
    %c3_i32_135 = arith.constant 3 : i32
    %c8_i32_136 = arith.constant 8 : i32
    %415 = arith.muli %c3_i32_135, %c8_i32_136 : i32
    %416 = tpu.assume_multiple %415, 8 : i32
    %417 = arith.index_cast %416 : i32 to index
    %c0_137 = arith.constant 0 : index
    %418 = vector.load %arg9[%417, %c0_137] : memref<64x512xf32, #tpu.memory_space<vmem>>, vector<8x512xf32>
    %419 = arith.truncf %410 : vector<8x128xf32> to vector<8x128xbf16>
    %c0_138 = arith.constant 0 : index
    %c0_139 = arith.constant 0 : index
    %420 = vector.load %arg6[%c0_138, %c0_139] : memref<128x512xbf16, #tpu.memory_space<vmem>>, vector<128x512xbf16>
    %cst_140 = arith.constant dense<0.000000e+00> : vector<8x512xf32>
    %421 = tpu.matmul %419, %420, %cst_140 {dimension_numbers = #tpu.dot_dimension_numbers<[1], [0], [0], [1], [0, 0, 1, 1], [], []>} : vector<8x128xbf16>, vector<128x512xbf16>, vector<8x512xf32> -> vector<8x512xf32>
    %422 = arith.addf %418, %421 : vector<8x512xf32>
    %423 = vector.extract_strided_slice %422 {offsets = [0, 0], sizes = [8, 128], strides = [1, 1]} : vector<8x512xf32> to vector<8x128xf32>
    %424 = arith.negf %423 : vector<8x128xf32>
    %425 = math.exp %424 : vector<8x128xf32>
    %cst_141 = arith.constant 1.000000e+00 : f32
    %426 = vector.broadcast %cst_141 : f32 to vector<8x128xf32>
    %427 = arith.addf %426, %425 : vector<8x128xf32>
    %428 = arith.divf %426, %427 : vector<8x128xf32>
    %429 = vector.extract_strided_slice %422 {offsets = [0, 128], sizes = [8, 128], strides = [1, 1]} : vector<8x512xf32> to vector<8x128xf32>
    %430 = arith.negf %429 : vector<8x128xf32>
    %431 = math.exp %430 : vector<8x128xf32>
    %cst_142 = arith.constant 1.000000e+00 : f32
    %432 = vector.broadcast %cst_142 : f32 to vector<8x128xf32>
    %433 = arith.addf %432, %431 : vector<8x128xf32>
    %434 = arith.divf %432, %433 : vector<8x128xf32>
    %435 = vector.extract_strided_slice %422 {offsets = [0, 256], sizes = [8, 128], strides = [1, 1]} : vector<8x512xf32> to vector<8x128xf32>
    %436 = math.tanh %435 : vector<8x128xf32>
    %437 = vector.extract_strided_slice %422 {offsets = [0, 384], sizes = [8, 128], strides = [1, 1]} : vector<8x512xf32> to vector<8x128xf32>
    %438 = arith.negf %437 : vector<8x128xf32>
    %439 = math.exp %438 : vector<8x128xf32>
    %cst_143 = arith.constant 1.000000e+00 : f32
    %440 = vector.broadcast %cst_143 : f32 to vector<8x128xf32>
    %441 = arith.addf %440, %439 : vector<8x128xf32>
    %442 = arith.divf %440, %441 : vector<8x128xf32>
    %443 = arith.mulf %434, %408 : vector<8x128xf32>
    %444 = arith.mulf %428, %436 : vector<8x128xf32>
    %445 = arith.addf %443, %444 : vector<8x128xf32>
    %446 = math.tanh %445 : vector<8x128xf32>
    %447 = arith.mulf %442, %446 : vector<8x128xf32>
    %cst_144 = arith.constant 0.000000e+00 : f32
    %448 = vector.broadcast %cst_144 : f32 to vector<8x128xf32>
    %449 = arith.maximumf %447, %448 : vector<8x128xf32>
    %450 = arith.index_cast %416 : i32 to index
    %c0_145 = arith.constant 0 : index
    %451 = vector.load %arg8[%450, %c0_145] : memref<64x128xf32, #tpu.memory_space<vmem>>, vector<8x128xf32>
    tpu.vector_store %arg8[%450, %c0_145], %449 {strides = array<i32>} : memref<64x128xf32, #tpu.memory_space<vmem>>, vector<8x128xf32>,
    %c4_i32_146 = arith.constant 4 : i32
    %c8_i32_147 = arith.constant 8 : i32
    %452 = arith.muli %c4_i32_146, %c8_i32_147 : i32
    %453 = tpu.assume_multiple %452, 8 : i32
    %454 = arith.index_cast %453 : i32 to index
    %c0_148 = arith.constant 0 : index
    %455 = vector.load %arg9[%454, %c0_148] : memref<64x512xf32, #tpu.memory_space<vmem>>, vector<8x512xf32>
    %456 = arith.truncf %447 : vector<8x128xf32> to vector<8x128xbf16>
    %c0_149 = arith.constant 0 : index
    %c0_150 = arith.constant 0 : index
    %457 = vector.load %arg6[%c0_149, %c0_150] : memref<128x512xbf16, #tpu.memory_space<vmem>>, vector<128x512xbf16>
    %cst_151 = arith.constant dense<0.000000e+00> : vector<8x512xf32>
    %458 = tpu.matmul %456, %457, %cst_151 {dimension_numbers = #tpu.dot_dimension_numbers<[1], [0], [0], [1], [0, 0, 1, 1], [], []>} : vector<8x128xbf16>, vector<128x512xbf16>, vector<8x512xf32> -> vector<8x512xf32>
    %459 = arith.addf %455, %458 : vector<8x512xf32>
    %460 = vector.extract_strided_slice %459 {offsets = [0, 0], sizes = [8, 128], strides = [1, 1]} : vector<8x512xf32> to vector<8x128xf32>
    %461 = arith.negf %460 : vector<8x128xf32>
    %462 = math.exp %461 : vector<8x128xf32>
    %cst_152 = arith.constant 1.000000e+00 : f32
    %463 = vector.broadcast %cst_152 : f32 to vector<8x128xf32>
    %464 = arith.addf %463, %462 : vector<8x128xf32>
    %465 = arith.divf %463, %464 : vector<8x128xf32>
    %466 = vector.extract_strided_slice %459 {offsets = [0, 128], sizes = [8, 128], strides = [1, 1]} : vector<8x512xf32> to vector<8x128xf32>
    %467 = arith.negf %466 : vector<8x128xf32>
    %468 = math.exp %467 : vector<8x128xf32>
    %cst_153 = arith.constant 1.000000e+00 : f32
    %469 = vector.broadcast %cst_153 : f32 to vector<8x128xf32>
    %470 = arith.addf %469, %468 : vector<8x128xf32>
    %471 = arith.divf %469, %470 : vector<8x128xf32>
    %472 = vector.extract_strided_slice %459 {offsets = [0, 256], sizes = [8, 128], strides = [1, 1]} : vector<8x512xf32> to vector<8x128xf32>
    %473 = math.tanh %472 : vector<8x128xf32>
    %474 = vector.extract_strided_slice %459 {offsets = [0, 384], sizes = [8, 128], strides = [1, 1]} : vector<8x512xf32> to vector<8x128xf32>
    %475 = arith.negf %474 : vector<8x128xf32>
    %476 = math.exp %475 : vector<8x128xf32>
    %cst_154 = arith.constant 1.000000e+00 : f32
    %477 = vector.broadcast %cst_154 : f32 to vector<8x128xf32>
    %478 = arith.addf %477, %476 : vector<8x128xf32>
    %479 = arith.divf %477, %478 : vector<8x128xf32>
    %480 = arith.mulf %471, %445 : vector<8x128xf32>
    %481 = arith.mulf %465, %473 : vector<8x128xf32>
    %482 = arith.addf %480, %481 : vector<8x128xf32>
    %483 = math.tanh %482 : vector<8x128xf32>
    %484 = arith.mulf %479, %483 : vector<8x128xf32>
    %cst_155 = arith.constant 0.000000e+00 : f32
    %485 = vector.broadcast %cst_155 : f32 to vector<8x128xf32>
    %486 = arith.maximumf %484, %485 : vector<8x128xf32>
    %487 = arith.index_cast %453 : i32 to index
    %c0_156 = arith.constant 0 : index
    %488 = vector.load %arg8[%487, %c0_156] : memref<64x128xf32, #tpu.memory_space<vmem>>, vector<8x128xf32>
    tpu.vector_store %arg8[%487, %c0_156], %486 {strides = array<i32>} : memref<64x128xf32, #tpu.memory_space<vmem>>, vector<8x128xf32>,
    %c5_i32_157 = arith.constant 5 : i32
    %c8_i32_158 = arith.constant 8 : i32
    %489 = arith.muli %c5_i32_157, %c8_i32_158 : i32
    %490 = tpu.assume_multiple %489, 8 : i32
    %491 = arith.index_cast %490 : i32 to index
    %c0_159 = arith.constant 0 : index
    %492 = vector.load %arg9[%491, %c0_159] : memref<64x512xf32, #tpu.memory_space<vmem>>, vector<8x512xf32>
    %493 = arith.truncf %484 : vector<8x128xf32> to vector<8x128xbf16>
    %c0_160 = arith.constant 0 : index
    %c0_161 = arith.constant 0 : index
    %494 = vector.load %arg6[%c0_160, %c0_161] : memref<128x512xbf16, #tpu.memory_space<vmem>>, vector<128x512xbf16>
    %cst_162 = arith.constant dense<0.000000e+00> : vector<8x512xf32>
    %495 = tpu.matmul %493, %494, %cst_162 {dimension_numbers = #tpu.dot_dimension_numbers<[1], [0], [0], [1], [0, 0, 1, 1], [], []>} : vector<8x128xbf16>, vector<128x512xbf16>, vector<8x512xf32> -> vector<8x512xf32>
    %496 = arith.addf %492, %495 : vector<8x512xf32>
    %497 = vector.extract_strided_slice %496 {offsets = [0, 0], sizes = [8, 128], strides = [1, 1]} : vector<8x512xf32> to vector<8x128xf32>
    %498 = arith.negf %497 : vector<8x128xf32>
    %499 = math.exp %498 : vector<8x128xf32>
    %cst_163 = arith.constant 1.000000e+00 : f32
    %500 = vector.broadcast %cst_163 : f32 to vector<8x128xf32>
    %501 = arith.addf %500, %499 : vector<8x128xf32>
    %502 = arith.divf %500, %501 : vector<8x128xf32>
    %503 = vector.extract_strided_slice %496 {offsets = [0, 128], sizes = [8, 128], strides = [1, 1]} : vector<8x512xf32> to vector<8x128xf32>
    %504 = arith.negf %503 : vector<8x128xf32>
    %505 = math.exp %504 : vector<8x128xf32>
    %cst_164 = arith.constant 1.000000e+00 : f32
    %506 = vector.broadcast %cst_164 : f32 to vector<8x128xf32>
    %507 = arith.addf %506, %505 : vector<8x128xf32>
    %508 = arith.divf %506, %507 : vector<8x128xf32>
    %509 = vector.extract_strided_slice %496 {offsets = [0, 256], sizes = [8, 128], strides = [1, 1]} : vector<8x512xf32> to vector<8x128xf32>
    %510 = math.tanh %509 : vector<8x128xf32>
    %511 = vector.extract_strided_slice %496 {offsets = [0, 384], sizes = [8, 128], strides = [1, 1]} : vector<8x512xf32> to vector<8x128xf32>
    %512 = arith.negf %511 : vector<8x128xf32>
    %513 = math.exp %512 : vector<8x128xf32>
    %cst_165 = arith.constant 1.000000e+00 : f32
    %514 = vector.broadcast %cst_165 : f32 to vector<8x128xf32>
    %515 = arith.addf %514, %513 : vector<8x128xf32>
    %516 = arith.divf %514, %515 : vector<8x128xf32>
    %517 = arith.mulf %508, %482 : vector<8x128xf32>
    %518 = arith.mulf %502, %510 : vector<8x128xf32>
    %519 = arith.addf %517, %518 : vector<8x128xf32>
    %520 = math.tanh %519 : vector<8x128xf32>
    %521 = arith.mulf %516, %520 : vector<8x128xf32>
    %cst_166 = arith.constant 0.000000e+00 : f32
    %522 = vector.broadcast %cst_166 : f32 to vector<8x128xf32>
    %523 = arith.maximumf %521, %522 : vector<8x128xf32>
    %524 = arith.index_cast %490 : i32 to index
    %c0_167 = arith.constant 0 : index
    %525 = vector.load %arg8[%524, %c0_167] : memref<64x128xf32, #tpu.memory_space<vmem>>, vector<8x128xf32>
    tpu.vector_store %arg8[%524, %c0_167], %523 {strides = array<i32>} : memref<64x128xf32, #tpu.memory_space<vmem>>, vector<8x128xf32>,
    %c6_i32_168 = arith.constant 6 : i32
    %c8_i32_169 = arith.constant 8 : i32
    %526 = arith.muli %c6_i32_168, %c8_i32_169 : i32
    %527 = tpu.assume_multiple %526, 8 : i32
    %528 = arith.index_cast %527 : i32 to index
    %c0_170 = arith.constant 0 : index
    %529 = vector.load %arg9[%528, %c0_170] : memref<64x512xf32, #tpu.memory_space<vmem>>, vector<8x512xf32>
    %530 = arith.truncf %521 : vector<8x128xf32> to vector<8x128xbf16>
    %c0_171 = arith.constant 0 : index
    %c0_172 = arith.constant 0 : index
    %531 = vector.load %arg6[%c0_171, %c0_172] : memref<128x512xbf16, #tpu.memory_space<vmem>>, vector<128x512xbf16>
    %cst_173 = arith.constant dense<0.000000e+00> : vector<8x512xf32>
    %532 = tpu.matmul %530, %531, %cst_173 {dimension_numbers = #tpu.dot_dimension_numbers<[1], [0], [0], [1], [0, 0, 1, 1], [], []>} : vector<8x128xbf16>, vector<128x512xbf16>, vector<8x512xf32> -> vector<8x512xf32>
    %533 = arith.addf %529, %532 : vector<8x512xf32>
    %534 = vector.extract_strided_slice %533 {offsets = [0, 0], sizes = [8, 128], strides = [1, 1]} : vector<8x512xf32> to vector<8x128xf32>
    %535 = arith.negf %534 : vector<8x128xf32>
    %536 = math.exp %535 : vector<8x128xf32>
    %cst_174 = arith.constant 1.000000e+00 : f32
    %537 = vector.broadcast %cst_174 : f32 to vector<8x128xf32>
    %538 = arith.addf %537, %536 : vector<8x128xf32>
    %539 = arith.divf %537, %538 : vector<8x128xf32>
    %540 = vector.extract_strided_slice %533 {offsets = [0, 128], sizes = [8, 128], strides = [1, 1]} : vector<8x512xf32> to vector<8x128xf32>
    %541 = arith.negf %540 : vector<8x128xf32>
    %542 = math.exp %541 : vector<8x128xf32>
    %cst_175 = arith.constant 1.000000e+00 : f32
    %543 = vector.broadcast %cst_175 : f32 to vector<8x128xf32>
    %544 = arith.addf %543, %542 : vector<8x128xf32>
    %545 = arith.divf %543, %544 : vector<8x128xf32>
    %546 = vector.extract_strided_slice %533 {offsets = [0, 256], sizes = [8, 128], strides = [1, 1]} : vector<8x512xf32> to vector<8x128xf32>
    %547 = math.tanh %546 : vector<8x128xf32>
    %548 = vector.extract_strided_slice %533 {offsets = [0, 384], sizes = [8, 128], strides = [1, 1]} : vector<8x512xf32> to vector<8x128xf32>
    %549 = arith.negf %548 : vector<8x128xf32>
    %550 = math.exp %549 : vector<8x128xf32>
    %cst_176 = arith.constant 1.000000e+00 : f32
    %551 = vector.broadcast %cst_176 : f32 to vector<8x128xf32>
    %552 = arith.addf %551, %550 : vector<8x128xf32>
    %553 = arith.divf %551, %552 : vector<8x128xf32>
    %554 = arith.mulf %545, %519 : vector<8x128xf32>
    %555 = arith.mulf %539, %547 : vector<8x128xf32>
    %556 = arith.addf %554, %555 : vector<8x128xf32>
    %557 = math.tanh %556 : vector<8x128xf32>
    %558 = arith.mulf %553, %557 : vector<8x128xf32>
    %cst_177 = arith.constant 0.000000e+00 : f32
    %559 = vector.broadcast %cst_177 : f32 to vector<8x128xf32>
    %560 = arith.maximumf %558, %559 : vector<8x128xf32>
    %561 = arith.index_cast %527 : i32 to index
    %c0_178 = arith.constant 0 : index
    %562 = vector.load %arg8[%561, %c0_178] : memref<64x128xf32, #tpu.memory_space<vmem>>, vector<8x128xf32>
    tpu.vector_store %arg8[%561, %c0_178], %560 {strides = array<i32>} : memref<64x128xf32, #tpu.memory_space<vmem>>, vector<8x128xf32>,
    %c7_i32_179 = arith.constant 7 : i32
    %c8_i32_180 = arith.constant 8 : i32
    %563 = arith.muli %c7_i32_179, %c8_i32_180 : i32
    %564 = tpu.assume_multiple %563, 8 : i32
    %565 = arith.index_cast %564 : i32 to index
    %c0_181 = arith.constant 0 : index
    %566 = vector.load %arg9[%565, %c0_181] : memref<64x512xf32, #tpu.memory_space<vmem>>, vector<8x512xf32>
    %567 = arith.truncf %558 : vector<8x128xf32> to vector<8x128xbf16>
    %c0_182 = arith.constant 0 : index
    %c0_183 = arith.constant 0 : index
    %568 = vector.load %arg6[%c0_182, %c0_183] : memref<128x512xbf16, #tpu.memory_space<vmem>>, vector<128x512xbf16>
    %cst_184 = arith.constant dense<0.000000e+00> : vector<8x512xf32>
    %569 = tpu.matmul %567, %568, %cst_184 {dimension_numbers = #tpu.dot_dimension_numbers<[1], [0], [0], [1], [0, 0, 1, 1], [], []>} : vector<8x128xbf16>, vector<128x512xbf16>, vector<8x512xf32> -> vector<8x512xf32>
    %570 = arith.addf %566, %569 : vector<8x512xf32>
    %571 = vector.extract_strided_slice %570 {offsets = [0, 0], sizes = [8, 128], strides = [1, 1]} : vector<8x512xf32> to vector<8x128xf32>
    %572 = arith.negf %571 : vector<8x128xf32>
    %573 = math.exp %572 : vector<8x128xf32>
    %cst_185 = arith.constant 1.000000e+00 : f32
    %574 = vector.broadcast %cst_185 : f32 to vector<8x128xf32>
    %575 = arith.addf %574, %573 : vector<8x128xf32>
    %576 = arith.divf %574, %575 : vector<8x128xf32>
    %577 = vector.extract_strided_slice %570 {offsets = [0, 128], sizes = [8, 128], strides = [1, 1]} : vector<8x512xf32> to vector<8x128xf32>
    %578 = arith.negf %577 : vector<8x128xf32>
    %579 = math.exp %578 : vector<8x128xf32>
    %cst_186 = arith.constant 1.000000e+00 : f32
    %580 = vector.broadcast %cst_186 : f32 to vector<8x128xf32>
    %581 = arith.addf %580, %579 : vector<8x128xf32>
    %582 = arith.divf %580, %581 : vector<8x128xf32>
    %583 = vector.extract_strided_slice %570 {offsets = [0, 256], sizes = [8, 128], strides = [1, 1]} : vector<8x512xf32> to vector<8x128xf32>
    %584 = math.tanh %583 : vector<8x128xf32>
    %585 = vector.extract_strided_slice %570 {offsets = [0, 384], sizes = [8, 128], strides = [1, 1]} : vector<8x512xf32> to vector<8x128xf32>
    %586 = arith.negf %585 : vector<8x128xf32>
    %587 = math.exp %586 : vector<8x128xf32>
    %cst_187 = arith.constant 1.000000e+00 : f32
    %588 = vector.broadcast %cst_187 : f32 to vector<8x128xf32>
    %589 = arith.addf %588, %587 : vector<8x128xf32>
    %590 = arith.divf %588, %589 : vector<8x128xf32>
    %591 = arith.mulf %582, %556 : vector<8x128xf32>
    %592 = arith.mulf %576, %584 : vector<8x128xf32>
    %593 = arith.addf %591, %592 : vector<8x128xf32>
    %594 = math.tanh %593 : vector<8x128xf32>
    %595 = arith.mulf %590, %594 : vector<8x128xf32>
    %cst_188 = arith.constant 0.000000e+00 : f32
    %596 = vector.broadcast %cst_188 : f32 to vector<8x128xf32>
    %597 = arith.maximumf %595, %596 : vector<8x128xf32>
    %598 = arith.index_cast %564 : i32 to index
    %c0_189 = arith.constant 0 : index
    %599 = vector.load %arg8[%598, %c0_189] : memref<64x128xf32, #tpu.memory_space<vmem>>, vector<8x128xf32>
    tpu.vector_store %arg8[%598, %c0_189], %597 {strides = array<i32>} : memref<64x128xf32, #tpu.memory_space<vmem>>, vector<8x128xf32>,
    %c8_i32_190 = arith.constant 8 : i32
    %c0_191 = arith.constant 0 : index
    %c0_192 = arith.constant 0 : index
    %600 = vector.load %arg13[%c0_191, %c0_192] : memref<8x128xf32, #tpu.memory_space<vmem>>, vector<8x128xf32>
    tpu.vector_store %arg13[%c0_191, %c0_192], %595 {strides = array<i32>} : memref<8x128xf32, #tpu.memory_space<vmem>>, vector<8x128xf32>,
    %c0_193 = arith.constant 0 : index
    %c0_194 = arith.constant 0 : index
    %601 = vector.load %arg14[%c0_193, %c0_194] : memref<8x128xf32, #tpu.memory_space<vmem>>, vector<8x128xf32>
    tpu.vector_store %arg14[%c0_193, %c0_194], %593 {strides = array<i32>} : memref<8x128xf32, #tpu.memory_space<vmem>>, vector<8x128xf32>,
    return
  }
  func.func @transform_0(%arg0: i32) -> (i32, i32) {
    %c0_i32 = arith.constant 0 : i32
    %c0_i32_0 = arith.constant 0 : i32
    return %arg0, %c0_i32 : i32, i32
  }
  func.func @transform_1(%arg0: i32) -> (i32, i32) {
    %c0_i32 = arith.constant 0 : i32
    %c0_i32_0 = arith.constant 0 : i32
    %c0_i32_1 = arith.constant 0 : i32
    return %c0_i32, %c0_i32_0 : i32, i32
  }
  func.func @transform_2(%arg0: i32) -> (i32, i32) {
    %c0_i32 = arith.constant 0 : i32
    %c0_i32_0 = arith.constant 0 : i32
    %c0_i32_1 = arith.constant 0 : i32
    return %c0_i32, %c0_i32_0 : i32, i32
  }
  func.func @transform_3(%arg0: i32) -> (i32, i32) {
    %c0_i32 = arith.constant 0 : i32
    %c0_i32_0 = arith.constant 0 : i32
    %c0_i32_1 = arith.constant 0 : i32
    return %c0_i32, %c0_i32_0 : i32, i32
  }
  func.func @transform_4(%arg0: i32) -> (i32, i32) {
    %c0_i32 = arith.constant 0 : i32
    %c0_i32_0 = arith.constant 0 : i32
    %c0_i32_1 = arith.constant 0 : i32
    return %c0_i32, %c0_i32_0 : i32, i32
  }
  func.func @transform_5(%arg0: i32) -> (i32, i32) {
    %c0_i32 = arith.constant 0 : i32
    %c0_i32_0 = arith.constant 0 : i32
    %c0_i32_1 = arith.constant 0 : i32
    return %c0_i32, %c0_i32_0 : i32, i32
  }
  func.func @transform_6(%arg0: i32) -> (i32, i32) {
    %c0_i32 = arith.constant 0 : i32
    %c0_i32_0 = arith.constant 0 : i32
    %c0_i32_1 = arith.constant 0 : i32
    return %c0_i32, %c0_i32_0 : i32, i32
  }
  func.func @transform_7(%arg0: i32) -> (i32, i32) {
    %c0_i32 = arith.constant 0 : i32
    %c0_i32_0 = arith.constant 0 : i32
    return %arg0, %c0_i32 : i32, i32
  }
}

</mosaic_0001>

<llo_original>
// kernel: vd_encoder_forward.1
$region0: #{vd_encoder_forward.1}
  #allocation0 [shape = 'u32[]', space=smem, size = 0x4, offset = 0x4, fixed_abs, tag = 'smem constant byte address 0x4 - core index']
  #allocation1 [shape = 'u32[72,128]{1,0:T(1,128)}', space=vmem, size = 0x9000, scoped, tag = 'internal scratch']
  #allocation2 [shape = 'f32[64,512]{1,0:T(8,128)}', space=vmem, size = 0x20000, scoped, tag = 'scratch operand']
  #allocation3 [shape = 'f32[64,128]{1,0:T(8,128)}', space=vmem, size = 0x8000, scoped, tag = 'scratch operand']
  #allocation4 [shape = 'f32[8,128]{1,0:T(8,128)}', space=vmem, size = 0x1000, scoped, tag = 'scratch operand']
  #allocation5 [shape = 'f32[8,128]{1,0:T(8,128)}', space=vmem, size = 0x1000, scoped, tag = 'scratch operand']
  #allocation6 [shape = 'f32[8,128]{1,0:T(8,128)}', space=vmem, size = 0x1000, scoped, tag = 'scratch operand']
  #allocation7 [shape = 'f32[8,128]{1,0:T(8,128)}', space=vmem, size = 0x1000, scoped, tag = 'scratch operand']
  %s0 = inlined_call_operand.vmem [shape: bf16[64,32], index: 0, kind: input, shape index: {}]
  %s1 = inlined_call_operand.vmem [shape: bf16[32,512], index: 1, kind: input, shape index: {}]
  %s2 = inlined_call_operand.vmem [shape: f32[1,512], index: 2, kind: input, shape index: {}]
  %s3 = inlined_call_operand.vmem [shape: bf16[128,512], index: 3, kind: input, shape index: {}]
  %s4 = inlined_call_operand.vmem [shape: bf16[128,512], index: 4, kind: input, shape index: {}]
  %s5 = inlined_call_operand.vmem [shape: bf16[128,512], index: 5, kind: input, shape index: {}]
  %s6 = inlined_call_operand.vmem [shape: f32[1,512], index: 6, kind: input, shape index: {}]
  %s7 = inlined_call_operand.vmem [shape: f32[64,128], index: 7, kind: output, shape index: {}]
  %s8 = sld [smem:[#allocation0]]
  $region42: #{vd_encoder_forward.1} parent=0
    _
  %s10 = ssub.s32 1, %s8
  %s11 = scalar_select 0, %s10, %s8
  // Predicated region
  $region2: #{vd_encoder_forward.1} parent=0 // pred_check
    _
  $region3: #{vd_encoder_forward.1} parent=0 // pred_check_branch
    %13 = sbr.rel (0) target = $region5
  $region4: #{vd_encoder_forward.1} parent=0 // pred_region
    _
  $region5: #{vd_encoder_forward.1} parent=0 // pred_fallthru
    _
  // Predicated region
  $region6: #{vd_encoder_forward.1} parent=0 // pred_check
    _
  $region7: #{vd_encoder_forward.1} parent=0 // pred_check_branch
    %15 = sbr.rel (0) target = $region9
  $region8: #{vd_encoder_forward.1} parent=0 // pred_region
    _
  $region9: #{vd_encoder_forward.1} parent=0 // pred_fallthru
    _
  // Predicated region
  $region10: #{vd_encoder_forward.1} parent=0 // pred_check
    _
  $region11: #{vd_encoder_forward.1} parent=0 // pred_check_branch
    %17 = sbr.rel (0) target = $region13
  $region12: #{vd_encoder_forward.1} parent=0 // pred_region
    _
  $region13: #{vd_encoder_forward.1} parent=0 // pred_fallthru
    _
  // Predicated region
  $region14: #{vd_encoder_forward.1} parent=0 // pred_check
    _
  $region15: #{vd_encoder_forward.1} parent=0 // pred_check_branch
    %19 = sbr.rel (0) target = $region17
  $region16: #{vd_encoder_forward.1} parent=0 // pred_region
    _
  $region17: #{vd_encoder_forward.1} parent=0 // pred_fallthru
    _
  // Predicated region
  $region18: #{vd_encoder_forward.1} parent=0 // pred_check
    _
  $region19: #{vd_encoder_forward.1} parent=0 // pred_check_branch
    %21 = sbr.rel (0) target = $region21
  $region20: #{vd_encoder_forward.1} parent=0 // pred_region
    _
  $region21: #{vd_encoder_forward.1} parent=0 // pred_fallthru
    _
  // Predicated region
  $region22: #{vd_encoder_forward.1} parent=0 // pred_check
    _
  $region23: #{vd_encoder_forward.1} parent=0 // pred_check_branch
    %23 = sbr.rel (0) target = $region25
  $region24: #{vd_encoder_forward.1} parent=0 // pred_region
    _
  $region25: #{vd_encoder_forward.1} parent=0 // pred_fallthru
    _
  // Predicated region
  $region26: #{vd_encoder_forward.1} parent=0 // pred_check
    _
  $region27: #{vd_encoder_forward.1} parent=0 // pred_check_branch
    %25 = sbr.rel (0) target = $region29
  $region28: #{vd_encoder_forward.1} parent=0 // pred_region
    _
  $region29: #{vd_encoder_forward.1} parent=0 // pred_fallthru
    _
  %p27 = scmp.eq.s32.totalorder 0, 0
  // Predicated region
  $region30: #{vd_encoder_forward.1} parent=0 // pred_check
    %p28 = pneg %p27
  $region31: #{vd_encoder_forward.1} parent=0 // pred_check_branch
    %30 = sbr.rel (%p28) target = $region33
  $region32: #{vd_encoder_forward.1} parent=0 // pred_region
    %31 = vst [vmem:[#allocation4] sm:$0xff] 0.0
    %32 = vst [vmem:[#allocation5] sm:$0xff] 0.0
    %33 = vst [vmem:[#allocation6] sm:$0xff] 0.0
    %34 = vst [vmem:[#allocation7] sm:$0xff] 0.0
  $region33: #{vd_encoder_forward.1} parent=0 // pred_fallthru
    _
  %v35 = vld [vmem:[%s0] sm:$0xf]
  %v36 = vld [vmem:[%s0 + $0x4] sm:$0xf]
  %v37 = vld [vmem:[%s0 + $0x8] sm:$0xf]
  %v38 = vld [vmem:[%s0 + $0xc] sm:$0xf]
  %v39 = vld [vmem:[%s0 + $0x10] sm:$0xf]
  %v40 = vld [vmem:[%s0 + $0x14] sm:$0xf]
  %v41 = vld [vmem:[%s0 + $0x18] sm:$0xf]
  %v42 = vld [vmem:[%s0 + $0x1c] sm:$0xf]
  %v43 = vld [vmem:[%s1] sm:$0xff]
  %v44 = vld [vmem:[%s1 + $0x8] sm:$0xff]
  %v45 = vld [vmem:[%s1 + $0x10] sm:$0xff]
  %v46 = vld [vmem:[%s1 + $0x18] sm:$0xff]
  %v47 = vld [vmem:[%s1 + $0x20] sm:$0xff]
  %v48 = vld [vmem:[%s1 + $0x28] sm:$0xff]
  %v49 = vld [vmem:[%s1 + $0x30] sm:$0xff]
  %v50 = vld [vmem:[%s1 + $0x38] sm:$0xff]
  %v51 = vld [vmem:[%s2] sm:$0xf]
  %v53 = vperm.slane %v51, 0
  %v54 = vperm.slane %v51, 1
  %v55 = vperm.slane %v51, 2
  %v56 = vperm.slane %v51, 3
  %v69 = vunpack.c.l.b16 %v35
  %v70 = vunpack.c.l.b16 %v36
  %v71 = vunpack.c.l.b16 %v37
  %v72 = vunpack.c.l.b16 %v38
  %v73 = vunpack.c.l.b16 %v39
  %v74 = vunpack.c.l.b16 %v40
  %v75 = vunpack.c.l.b16 %v41
  %v76 = vunpack.c.l.b16 %v42
  %v77 = vpack.c.b16 %v70, %v69
  %v78 = vpack.c.b16 %v72, %v71
  %v79 = vpack.c.b16 %v74, %v73
  %v80 = vpack.c.b16 %v76, %v75
  %v89 = vunpack.c.l.b16 %v43
  %v90 = vunpack.c.h.b16 %v43
  %v91 = vunpack.c.l.b16 %v44
  %v92 = vunpack.c.h.b16 %v44
  %v93 = vunpack.c.l.b16 %v45
  %v94 = vunpack.c.h.b16 %v45
  %v95 = vunpack.c.l.b16 %v46
  %v96 = vunpack.c.h.b16 %v46
  %v97 = vunpack.c.l.b16 %v47
  %v98 = vunpack.c.h.b16 %v47
  %v99 = vunpack.c.l.b16 %v48
  %v100 = vunpack.c.h.b16 %v48
  %v101 = vunpack.c.l.b16 %v49
  %v102 = vunpack.c.h.b16 %v49
  %v103 = vunpack.c.l.b16 %v50
  %v104 = vunpack.c.h.b16 %v50
  %v105 = vpack.c.b16 %v93, %v89
  %v106 = vpack.c.b16 %v94, %v90
  %v107 = vpack.c.b16 %v95, %v91
  %v108 = vpack.c.b16 %v96, %v92
  %v109 = vpack.c.b16 %v101, %v97
  %v110 = vpack.c.b16 %v102, %v98
  %v111 = vpack.c.b16 %v103, %v99
  %v112 = vpack.c.b16 %v104, %v100
  %vm121 = vcmask 261120
  %v123 = vsel %vm121, %v77, 0
  %v126 = vsel %vm121, %v78, 0
  %v129 = vsel %vm121, %v79, 0
  %v132 = vsel %vm121, %v80, 0
  %134 = vmatpush.bf16.msra.mxu0 0
  %135 = vmatpush.bf16.msra.mxu0 0
  %136 = vmatpush.bf16.msra.mxu0 0
  %137 = vmatpush.bf16.msra.mxu0 0
  %138 = vmatpush.bf16.msra.mxu0 0
  %139 = vmatpush.bf16.msra.mxu0 0
  %140 = vmatpush.bf16.msra.mxu0 %v109
  %141 = vmatpush.bf16.msra.mxu0 %v105
  %142 = vmatmul.bf16.gmra.mxu0 %v123
  %v143 = vpop.f32.mrf.mxu0
  %v144 = vadd.f32 %v53, %v143
  %v145 = vpop.f32.mrf.mxu0
  %v146 = vadd.f32 %v53, %v145
  %147 = vmatmul.bf16.gmra.mxu0 %v126
  %v148 = vpop.f32.mrf.mxu0
  %v149 = vadd.f32 %v53, %v148
  %v150 = vpop.f32.mrf.mxu0
  %v151 = vadd.f32 %v53, %v150
  %152 = vmatmul.bf16.gmra.mxu0 %v129
  %v153 = vpop.f32.mrf.mxu0
  %v154 = vadd.f32 %v53, %v153
  %v155 = vpop.f32.mrf.mxu0
  %v156 = vadd.f32 %v53, %v155
  %157 = vmatmul.bf16.gmra.mxu0 %v132
  %v158 = vpop.f32.mrf.mxu0
  %v159 = vadd.f32 %v53, %v158
  %v160 = vpop.f32.mrf.mxu0
  %v161 = vadd.f32 %v53, %v160
  %162 = vdwg.mxu0
  %163 = vmatpush.bf16.msra.mxu0 0
  %164 = vmatpush.bf16.msra.mxu0 0
  %165 = vmatpush.bf16.msra.mxu0 0
  %166 = vmatpush.bf16.msra.mxu0 0
  %167 = vmatpush.bf16.msra.mxu0 0
  %168 = vmatpush.bf16.msra.mxu0 0
  %169 = vmatpush.bf16.msra.mxu0 %v110
  %170 = vmatpush.bf16.msra.mxu0 %v106
  %171 = vmatmul.bf16.gmra.mxu0 %v123
  %v172 = vpop.f32.mrf.mxu0
  %v173 = vadd.f32 %v54, %v172
  %v174 = vpop.f32.mrf.mxu0
  %v175 = vadd.f32 %v54, %v174
  %176 = vmatmul.bf16.gmra.mxu0 %v126
  %v177 = vpop.f32.mrf.mxu0
  %v178 = vadd.f32 %v54, %v177
  %v179 = vpop.f32.mrf.mxu0
  %v180 = vadd.f32 %v54, %v179
  %181 = vmatmul.bf16.gmra.mxu0 %v129
  %v182 = vpop.f32.mrf.mxu0
  %v183 = vadd.f32 %v54, %v182
  %v184 = vpop.f32.mrf.mxu0
  %v185 = vadd.f32 %v54, %v184
  %186 = vmatmul.bf16.gmra.mxu0 %v132
  %v187 = vpop.f32.mrf.mxu0
  %v188 = vadd.f32 %v54, %v187
  %v189 = vpop.f32.mrf.mxu0
  %v190 = vadd.f32 %v54, %v189
  %191 = vdwg.mxu0
  %192 = vmatpush.bf16.msra.mxu0 0
  %193 = vmatpush.bf16.msra.mxu0 0
  %194 = vmatpush.bf16.msra.mxu0 0
  %195 = vmatpush.bf16.msra.mxu0 0
  %196 = vmatpush.bf16.msra.mxu0 0
  %197 = vmatpush.bf16.msra.mxu0 0
  %198 = vmatpush.bf16.msra.mxu0 %v111
  %199 = vmatpush.bf16.msra.mxu0 %v107
  %200 = vmatmul.bf16.gmra.mxu0 %v123
  %v201 = vpop.f32.mrf.mxu0
  %v202 = vadd.f32 %v55, %v201
  %v203 = vpop.f32.mrf.mxu0
  %v204 = vadd.f32 %v55, %v203
  %205 = vmatmul.bf16.gmra.mxu0 %v126
  %v206 = vpop.f32.mrf.mxu0
  %v207 = vadd.f32 %v55, %v206
  %v208 = vpop.f32.mrf.mxu0
  %v209 = vadd.f32 %v55, %v208
  %210 = vmatmul.bf16.gmra.mxu0 %v129
  %v211 = vpop.f32.mrf.mxu0
  %v212 = vadd.f32 %v55, %v211
  %v213 = vpop.f32.mrf.mxu0
  %v214 = vadd.f32 %v55, %v213
  %215 = vmatmul.bf16.gmra.mxu0 %v132
  %v216 = vpop.f32.mrf.mxu0
  %v217 = vadd.f32 %v55, %v216
  %v218 = vpop.f32.mrf.mxu0
  %v219 = vadd.f32 %v55, %v218
  %220 = vdwg.mxu0
  %221 = vmatpush.bf16.msra.mxu0 0
  %222 = vmatpush.bf16.msra.mxu0 0
  %223 = vmatpush.bf16.msra.mxu0 0
  %224 = vmatpush.bf16.msra.mxu0 0
  %225 = vmatpush.bf16.msra.mxu0 0
  %226 = vmatpush.bf16.msra.mxu0 0
  %227 = vmatpush.bf16.msra.mxu0 %v112
  %228 = vmatpush.bf16.msra.mxu0 %v108
  %229 = vmatmul.bf16.gmra.mxu0 %v123
  %v230 = vpop.f32.mrf.mxu0
  %v231 = vadd.f32 %v56, %v230
  %v232 = vpop.f32.mrf.mxu0
  %v233 = vadd.f32 %v56, %v232
  %234 = vmatmul.bf16.gmra.mxu0 %v126
  %v235 = vpop.f32.mrf.mxu0
  %v236 = vadd.f32 %v56, %v235
  %v237 = vpop.f32.mrf.mxu0
  %v238 = vadd.f32 %v56, %v237
  %239 = vmatmul.bf16.gmra.mxu0 %v129
  %v240 = vpop.f32.mrf.mxu0
  %v241 = vadd.f32 %v56, %v240
  %v242 = vpop.f32.mrf.mxu0
  %v243 = vadd.f32 %v56, %v242
  %244 = vmatmul.bf16.gmra.mxu0 %v132
  %v245 = vpop.f32.mrf.mxu0
  %v246 = vadd.f32 %v56, %v245
  %v247 = vpop.f32.mrf.mxu0
  %v248 = vadd.f32 %v56, %v247
  %249 = vdwg.mxu0
  %250 = vst [vmem:[#allocation2] sm:$0xff] %v144
  %251 = vst [vmem:[#allocation2 + $0x8] sm:$0xff] %v173
  %252 = vst [vmem:[#allocation2 + $0x10] sm:$0xff] %v202
  %253 = vst [vmem:[#allocation2 + $0x18] sm:$0xff] %v231
  %254 = vst [vmem:[#allocation2 + $0x20] sm:$0xff] %v146
  %255 = vst [vmem:[#allocation2 + $0x28] sm:$0xff] %v175
  %256 = vst [vmem:[#allocation2 + $0x30] sm:$0xff] %v204
  %257 = vst [vmem:[#allocation2 + $0x38] sm:$0xff] %v233
  %258 = vst [vmem:[#allocation2 + $0x40] sm:$0xff] %v149
  %259 = vst [vmem:[#allocation2 + $0x48] sm:$0xff] %v178
  %260 = vst [vmem:[#allocation2 + $0x50] sm:$0xff] %v207
  %261 = vst [vmem:[#allocation2 + $0x58] sm:$0xff] %v236
  %262 = vst [vmem:[#allocation2 + $0x60] sm:$0xff] %v151
  %263 = vst [vmem:[#allocation2 + $0x68] sm:$0xff] %v180
  %264 = vst [vmem:[#allocation2 + $0x70] sm:$0xff] %v209
  %265 = vst [vmem:[#allocation2 + $0x78] sm:$0xff] %v238
  %266 = vst [vmem:[#allocation2 + $0x80] sm:$0xff] %v154
  %267 = vst [vmem:[#allocation2 + $0x88] sm:$0xff] %v183
  %268 = vst [vmem:[#allocation2 + $0x90] sm:$0xff] %v212
  %269 = vst [vmem:[#allocation2 + $0x98] sm:$0xff] %v241
  %270 = vst [vmem:[#allocation2 + $0xa0] sm:$0xff] %v156
  %271 = vst [vmem:[#allocation2 + $0xa8] sm:$0xff] %v185
  %272 = vst [vmem:[#allocation2 + $0xb0] sm:$0xff] %v214
  %273 = vst [vmem:[#allocation2 + $0xb8] sm:$0xff] %v243
  %274 = vst [vmem:[#allocation2 + $0xc0] sm:$0xff] %v159
  %275 = vst [vmem:[#allocation2 + $0xc8] sm:$0xff] %v188
  %276 = vst [vmem:[#allocation2 + $0xd0] sm:$0xff] %v217
  %277 = vst [vmem:[#allocation2 + $0xd8] sm:$0xff] %v246
  %278 = vst [vmem:[#allocation2 + $0xe0] sm:$0xff] %v161
  %279 = vst [vmem:[#allocation2 + $0xe8] sm:$0xff] %v190
  %280 = vst [vmem:[#allocation2 + $0xf0] sm:$0xff] %v219
  %281 = vst [vmem:[#allocation2 + $0xf8] sm:$0xff] %v248
  %v282 = vld [vmem:[#allocation4] sm:$0xff]
  %v283 = vld [vmem:[#allocation5] sm:$0xff]
  %s284 = smul.u32 0, 4
  %s285 = smul.addr %s284, 8
  %s286 = scalar_lea.vmem [#allocation2], %s285
  %v287 = vld [vmem:[%s286] sm:$0xff]
  %v288 = vld [vmem:[%s286 + $0x8] sm:$0xff]
  %v289 = vld [vmem:[%s286 + $0x10] sm:$0xff]
  %v290 = vld [vmem:[%s286 + $0x18] sm:$0xff]
  %v291 = vpack.c.bf16 %v282, %v282
  %v292 = vld [vmem:[%s3] sm:$0xff]
  %v293 = vld [vmem:[%s3 + $0x8] sm:$0xff]
  %v294 = vld [vmem:[%s3 + $0x10] sm:$0xff]
  %v295 = vld [vmem:[%s3 + $0x18] sm:$0xff]
  %v296 = vld [vmem:[%s3 + $0x20] sm:$0xff]
  %v297 = vld [vmem:[%s3 + $0x28] sm:$0xff]
  %v298 = vld [vmem:[%s3 + $0x30] sm:$0xff]
  %v299 = vld [vmem:[%s3 + $0x38] sm:$0xff]
  %v300 = vld [vmem:[%s3 + $0x40] sm:$0xff]
  %v301 = vld [vmem:[%s3 + $0x48] sm:$0xff]
  %v302 = vld [vmem:[%s3 + $0x50] sm:$0xff]
  %v303 = vld [vmem:[%s3 + $0x58] sm:$0xff]
  %v304 = vld [vmem:[%s3 + $0x60] sm:$0xff]
  %v305 = vld [vmem:[%s3 + $0x68] sm:$0xff]
  %v306 = vld [vmem:[%s3 + $0x70] sm:$0xff]
  %v307 = vld [vmem:[%s3 + $0x78] sm:$0xff]
  %v308 = vld [vmem:[%s3 + $0x80] sm:$0xff]
  %v309 = vld [vmem:[%s3 + $0x88] sm:$0xff]
  %v310 = vld [vmem:[%s3 + $0x90] sm:$0xff]
  %v311 = vld [vmem:[%s3 + $0x98] sm:$0xff]
  %v312 = vld [vmem:[%s3 + $0xa0] sm:$0xff]
  %v313 = vld [vmem:[%s3 + $0xa8] sm:$0xff]
  %v314 = vld [vmem:[%s3 + $0xb0] sm:$0xff]
  %v315 = vld [vmem:[%s3 + $0xb8] sm:$0xff]
  %v316 = vld [vmem:[%s3 + $0xc0] sm:$0xff]
  %v317 = vld [vmem:[%s3 + $0xc8] sm:$0xff]
  %v318 = vld [vmem:[%s3 + $0xd0] sm:$0xff]
  %v319 = vld [vmem:[%s3 + $0xd8] sm:$0xff]
  %v320 = vld [vmem:[%s3 + $0xe0] sm:$0xff]
  %v321 = vld [vmem:[%s3 + $0xe8] sm:$0xff]
  %v322 = vld [vmem:[%s3 + $0xf0] sm:$0xff]
  %v323 = vld [vmem:[%s3 + $0xf8] sm:$0xff]
  %v356 = vunpack.c.l.b16 %v292
  %v357 = vunpack.c.h.b16 %v292
  %v358 = vunpack.c.l.b16 %v293
  %v359 = vunpack.c.h.b16 %v293
  %v360 = vunpack.c.l.b16 %v294
  %v361 = vunpack.c.h.b16 %v294
  %v362 = vunpack.c.l.b16 %v295
  %v363 = vunpack.c.h.b16 %v295
  %v364 = vunpack.c.l.b16 %v296
  %v365 = vunpack.c.h.b16 %v296
  %v366 = vunpack.c.l.b16 %v297
  %v367 = vunpack.c.h.b16 %v297
  %v368 = vunpack.c.l.b16 %v298
  %v369 = vunpack.c.h.b16 %v298
  %v370 = vunpack.c.l.b16 %v299
  %v371 = vunpack.c.h.b16 %v299
  %v372 = vunpack.c.l.b16 %v300
  %v373 = vunpack.c.h.b16 %v300
  %v374 = vunpack.c.l.b16 %v301
  %v375 = vunpack.c.h.b16 %v301
  %v376 = vunpack.c.l.b16 %v302
  %v377 = vunpack.c.h.b16 %v302
  %v378 = vunpack.c.l.b16 %v303
  %v379 = vunpack.c.h.b16 %v303
  %v380 = vunpack.c.l.b16 %v304
  %v381 = vunpack.c.h.b16 %v304
  %v382 = vunpack.c.l.b16 %v305
  %v383 = vunpack.c.h.b16 %v305
  %v384 = vunpack.c.l.b16 %v306
  %v385 = vunpack.c.h.b16 %v306
  %v386 = vunpack.c.l.b16 %v307
  %v387 = vunpack.c.h.b16 %v307
  %v388 = vunpack.c.l.b16 %v308
  %v389 = vunpack.c.h.b16 %v308
  %v390 = vunpack.c.l.b16 %v309
  %v391 = vunpack.c.h.b16 %v309
  %v392 = vunpack.c.l.b16 %v310
  %v393 = vunpack.c.h.b16 %v310
  %v394 = vunpack.c.l.b16 %v311
  %v395 = vunpack.c.h.b16 %v311
  %v396 = vunpack.c.l.b16 %v312
  %v397 = vunpack.c.h.b16 %v312
  %v398 = vunpack.c.l.b16 %v313
  %v399 = vunpack.c.h.b16 %v313
  %v400 = vunpack.c.l.b16 %v314
  %v401 = vunpack.c.h.b16 %v314
  %v402 = vunpack.c.l.b16 %v315
  %v403 = vunpack.c.h.b16 %v315
  %v404 = vunpack.c.l.b16 %v316
  %v405 = vunpack.c.h.b16 %v316
  %v406 = vunpack.c.l.b16 %v317
  %v407 = vunpack.c.h.b16 %v317
  %v408 = vunpack.c.l.b16 %v318
  %v409 = vunpack.c.h.b16 %v318
  %v410 = vunpack.c.l.b16 %v319
  %v411 = vunpack.c.h.b16 %v319
  %v412 = vunpack.c.l.b16 %v320
  %v413 = vunpack.c.h.b16 %v320
  %v414 = vunpack.c.l.b16 %v321
  %v415 = vunpack.c.h.b16 %v321
  %v416 = vunpack.c.l.b16 %v322
  %v417 = vunpack.c.h.b16 %v322
  %v418 = vunpack.c.l.b16 %v323
  %v419 = vunpack.c.h.b16 %v323
  %v420 = vpack.c.b16 %v360, %v356
  %v421 = vpack.c.b16 %v361, %v357
  %v422 = vpack.c.b16 %v362, %v358
  %v423 = vpack.c.b16 %v363, %v359
  %v424 = vpack.c.b16 %v368, %v364
  %v425 = vpack.c.b16 %v369, %v365
  %v426 = vpack.c.b16 %v370, %v366
  %v427 = vpack.c.b16 %v371, %v367
  %v428 = vpack.c.b16 %v376, %v372
  %v429 = vpack.c.b16 %v377, %v373
  %v430 = vpack.c.b16 %v378, %v374
  %v431 = vpack.c.b16 %v379, %v375
  %v432 = vpack.c.b16 %v384, %v380
  %v433 = vpack.c.b16 %v385, %v381
  %v434 = vpack.c.b16 %v386, %v382
  %v435 = vpack.c.b16 %v387, %v383
  %v436 = vpack.c.b16 %v392, %v388
  %v437 = vpack.c.b16 %v393, %v389
  %v438 = vpack.c.b16 %v394, %v390
  %v439 = vpack.c.b16 %v395, %v391
  %v440 = vpack.c.b16 %v400, %v396
  %v441 = vpack.c.b16 %v401, %v397
  %v442 = vpack.c.b16 %v402, %v398
  %v443 = vpack.c.b16 %v403, %v399
  %v444 = vpack.c.b16 %v408, %v404
  %v445 = vpack.c.b16 %v409, %v405
  %v446 = vpack.c.b16 %v410, %v406
  %v447 = vpack.c.b16 %v411, %v407
  %v448 = vpack.c.b16 %v416, %v412
  %v449 = vpack.c.b16 %v417, %v413
  %v450 = vpack.c.b16 %v418, %v414
  %v451 = vpack.c.b16 %v419, %v415
  %484 = vmatpush.bf16.msra.mxu0 %v448
  %485 = vmatpush.bf16.msra.mxu0 %v444
  %486 = vmatpush.bf16.msra.mxu0 %v440
  %487 = vmatpush.bf16.msra.mxu0 %v436
  %488 = vmatpush.bf16.msra.mxu0 %v432
  %489 = vmatpush.bf16.msra.mxu0 %v428
  %490 = vmatpush.bf16.msra.mxu0 %v424
  %491 = vmatpush.bf16.msra.mxu0 %v420
  %492 = vmatmul.bf16.gmra.mxu0 %v291
  %v493 = vpop.f32.mrf.mxu0
  %v494 = vadd.f32 0.0, %v493
  %v495 = vpop.f32.mrf.mxu0
  %496 = vdwg.mxu0
  %497 = vmatpush.bf16.msra.mxu0 %v449
  %498 = vmatpush.bf16.msra.mxu0 %v445
  %499 = vmatpush.bf16.msra.mxu0 %v441
  %500 = vmatpush.bf16.msra.mxu0 %v437
  %501 = vmatpush.bf16.msra.mxu0 %v433
  %502 = vmatpush.bf16.msra.mxu0 %v429
  %503 = vmatpush.bf16.msra.mxu0 %v425
  %504 = vmatpush.bf16.msra.mxu0 %v421
  %505 = vmatmul.bf16.gmra.mxu0 %v291
  %v506 = vpop.f32.mrf.mxu0
  %v507 = vadd.f32 0.0, %v506
  %v508 = vpop.f32.mrf.mxu0
  %509 = vdwg.mxu0
  %510 = vmatpush.bf16.msra.mxu0 %v450
  %511 = vmatpush.bf16.msra.mxu0 %v446
  %512 = vmatpush.bf16.msra.mxu0 %v442
  %513 = vmatpush.bf16.msra.mxu0 %v438
  %514 = vmatpush.bf16.msra.mxu0 %v434
  %515 = vmatpush.bf16.msra.mxu0 %v430
  %516 = vmatpush.bf16.msra.mxu0 %v426
  %517 = vmatpush.bf16.msra.mxu0 %v422
  %518 = vmatmul.bf16.gmra.mxu0 %v291
  %v519 = vpop.f32.mrf.mxu0
  %v520 = vadd.f32 0.0, %v519
  %v521 = vpop.f32.mrf.mxu0
  %522 = vdwg.mxu0
  %523 = vmatpush.bf16.msra.mxu0 %v451
  %524 = vmatpush.bf16.msra.mxu0 %v447
  %525 = vmatpush.bf16.msra.mxu0 %v443
  %526 = vmatpush.bf16.msra.mxu0 %v439
  %527 = vmatpush.bf16.msra.mxu0 %v435
  %528 = vmatpush.bf16.msra.mxu0 %v431
  %529 = vmatpush.bf16.msra.mxu0 %v427
  %530 = vmatpush.bf16.msra.mxu0 %v423
  %531 = vmatmul.bf16.gmra.mxu0 %v291
  %v532 = vpop.f32.mrf.mxu0
  %v533 = vadd.f32 0.0, %v532
  %v534 = vpop.f32.mrf.mxu0
  %535 = vdwg.mxu0
  %v536 = vadd.f32 %v287, %v494
  %v537 = vadd.f32 %v288, %v507
  %v538 = vadd.f32 %v289, %v520
  %v539 = vadd.f32 %v290, %v533
  %v540 = vxor.u32 %v536, 2147483648
  %v541 = vmul.f32 %v540, 1.442695
  %v542 = vpow.pop %v541
  %v543 = vadd.f32 %v542, 1.0
  %v544 = vrcp.pop %v543
  %v545 = vmul.f32 %v543, %v544
  %v546 = vsub.f32 1.0, %v545
  %v547 = vmul.f32 %v544, %v546
  %v548 = vadd.f32 %v544, %v547
  %vm549 = vweird.f32 %v543
  %vm550 = vweird.f32 %v544
  %vm551 = vmor %vm549, %vm550
  %v552 = vsel %vm551, %v544, %v548
  %v553 = vand.u32 2147483647, %v543
  %vm554 = vcmp.eq.f32.partialorder %v553, 8.507059e+37
  %v555 = vand.u32 %v543, 2147483648
  %v556 = vor.u32 1.1754944e-38, %v555
  %v557 = vsel %vm554, %v556, %v552
  %v558 = vmul.f32 1.0, %v557
  %v559 = vxor.u32 %v537, 2147483648
  %v560 = vmul.f32 %v559, 1.442695
  %v561 = vpow.pop %v560
  %v562 = vadd.f32 %v561, 1.0
  %v563 = vrcp.pop %v562
  %v564 = vmul.f32 %v562, %v563
  %v565 = vsub.f32 1.0, %v564
  %v566 = vmul.f32 %v563, %v565
  %v567 = vadd.f32 %v563, %v566
  %vm568 = vweird.f32 %v562
  %vm569 = vweird.f32 %v563
  %vm570 = vmor %vm568, %vm569
  %v571 = vsel %vm570, %v563, %v567
  %v572 = vand.u32 2147483647, %v562
  %vm573 = vcmp.eq.f32.partialorder %v572, 8.507059e+37
  %v574 = vand.u32 %v562, 2147483648
  %v575 = vor.u32 1.1754944e-38, %v574
  %v576 = vsel %vm573, %v575, %v571
  %v577 = vmul.f32 1.0, %v576
  %v578 = vtanh.pop %v538
  %v579 = vxor.u32 %v539, 2147483648
  %v580 = vmul.f32 %v579, 1.442695
  %v581 = vpow.pop %v580
  %v582 = vadd.f32 %v581, 1.0
  %v583 = vrcp.pop %v582
  %v584 = vmul.f32 %v582, %v583
  %v585 = vsub.f32 1.0, %v584
  %v586 = vmul.f32 %v583, %v585
  %v587 = vadd.f32 %v583, %v586
  %vm588 = vweird.f32 %v582
  %vm589 = vweird.f32 %v583
  %vm590 = vmor %vm588, %vm589
  %v591 = vsel %vm590, %v583, %v587
  %v592 = vand.u32 2147483647, %v582
  %vm593 = vcmp.eq.f32.partialorder %v592, 8.507059e+37
  %v594 = vand.u32 %v582, 2147483648
  %v595 = vor.u32 1.1754944e-38, %v594
  %v596 = vsel %vm593, %v595, %v591
  %v597 = vmul.f32 1.0, %v596
  %v598 = vmul.f32 %v577, %v283
  %v599 = vmul.f32 %v558, %v578
  %v600 = vadd.f32 %v598, %v599
  %v601 = vtanh.pop %v600
  %v602 = vmul.f32 %v597, %v601
  %603 = vst [vmem:[#allocation3] sm:$0xff] %v602
  %s604 = smul.u32 1, 4
  %s605 = smul.addr %s604, 8
  %s606 = scalar_lea.vmem [#allocation2], %s605
  %v607 = vld [vmem:[%s606] sm:$0xff]
  %v608 = vld [vmem:[%s606 + $0x8] sm:$0xff]
  %v609 = vld [vmem:[%s606 + $0x10] sm:$0xff]
  %v610 = vld [vmem:[%s606 + $0x18] sm:$0xff]
  %v611 = vpack.c.bf16 %v602, %v602
  %v612 = vld [vmem:[%s3] sm:$0xff]
  %v613 = vld [vmem:[%s3 + $0x8] sm:$0xff]
  %v614 = vld [vmem:[%s3 + $0x10] sm:$0xff]
  %v615 = vld [vmem:[%s3 + $0x18] sm:$0xff]
  %v616 = vld [vmem:[%s3 + $0x20] sm:$0xff]
  %v617 = vld [vmem:[%s3 + $0x28] sm:$0xff]
  %v618 = vld [vmem:[%s3 + $0x30] sm:$0xff]
  %v619 = vld [vmem:[%s3 + $0x38] sm:$0xff]
  %v620 = vld [vmem:[%s3 + $0x40] sm:$0xff]
  %v621 = vld [vmem:[%s3 + $0x48] sm:$0xff]
  %v622 = vld [vmem:[%s3 + $0x50] sm:$0xff]
  %v623 = vld [vmem:[%s3 + $0x58] sm:$0xff]
  %v624 = vld [vmem:[%s3 + $0x60] sm:$0xff]
  %v625 = vld [vmem:[%s3 + $0x68] sm:$0xff]
  %v626 = vld [vmem:[%s3 + $0x70] sm:$0xff]
  %v627 = vld [vmem:[%s3 + $0x78] sm:$0xff]
  %v628 = vld [vmem:[%s3 + $0x80] sm:$0xff]
  %v629 = vld [vmem:[%s3 + $0x88] sm:$0xff]
  %v630 = vld [vmem:[%s3 + $0x90] sm:$0xff]
  %v631 = vld [vmem:[%s3 + $0x98] sm:$0xff]
  %v632 = vld [vmem:[%s3 + $0xa0] sm:$0xff]
  %v633 = vld [vmem:[%s3 + $0xa8] sm:$0xff]
  %v634 = vld [vmem:[%s3 + $0xb0] sm:$0xff]
  %v635 = vld [vmem:[%s3 + $0xb8] sm:$0xff]
  %v636 = vld [vmem:[%s3 + $0xc0] sm:$0xff]
  %v637 = vld [vmem:[%s3 + $0xc8] sm:$0xff]
  %v638 = vld [vmem:[%s3 + $0xd0] sm:$0xff]
  %v639 = vld [vmem:[%s3 + $0xd8] sm:$0xff]
  %v640 = vld [vmem:[%s3 + $0xe0] sm:$0xff]
  %v641 = vld [vmem:[%s3 + $0xe8] sm:$0xff]
  %v642 = vld [vmem:[%s3 + $0xf0] sm:$0xff]
  %v643 = vld [vmem:[%s3 + $0xf8] sm:$0xff]
  %v676 = vunpack.c.l.b16 %v612
  %v677 = vunpack.c.h.b16 %v612
  %v678 = vunpack.c.l.b16 %v613
  %v679 = vunpack.c.h.b16 %v613
  %v680 = vunpack.c.l.b16 %v614
  %v681 = vunpack.c.h.b16 %v614
  %v682 = vunpack.c.l.b16 %v615
  %v683 = vunpack.c.h.b16 %v615
  %v684 = vunpack.c.l.b16 %v616
  %v685 = vunpack.c.h.b16 %v616
  %v686 = vunpack.c.l.b16 %v617
  %v687 = vunpack.c.h.b16 %v617
  %v688 = vunpack.c.l.b16 %v618
  %v689 = vunpack.c.h.b16 %v618
  %v690 = vunpack.c.l.b16 %v619
  %v691 = vunpack.c.h.b16 %v619
  %v692 = vunpack.c.l.b16 %v620
  %v693 = vunpack.c.h.b16 %v620
  %v694 = vunpack.c.l.b16 %v621
  %v695 = vunpack.c.h.b16 %v621
  %v696 = vunpack.c.l.b16 %v622
  %v697 = vunpack.c.h.b16 %v622
  %v698 = vunpack.c.l.b16 %v623
  %v699 = vunpack.c.h.b16 %v623
  %v700 = vunpack.c.l.b16 %v624
  %v701 = vunpack.c.h.b16 %v624
  %v702 = vunpack.c.l.b16 %v625
  %v703 = vunpack.c.h.b16 %v625
  %v704 = vunpack.c.l.b16 %v626
  %v705 = vunpack.c.h.b16 %v626
  %v706 = vunpack.c.l.b16 %v627
  %v707 = vunpack.c.h.b16 %v627
  %v708 = vunpack.c.l.b16 %v628
  %v709 = vunpack.c.h.b16 %v628
  %v710 = vunpack.c.l.b16 %v629
  %v711 = vunpack.c.h.b16 %v629
  %v712 = vunpack.c.l.b16 %v630
  %v713 = vunpack.c.h.b16 %v630
  %v714 = vunpack.c.l.b16 %v631
  %v715 = vunpack.c.h.b16 %v631
  %v716 = vunpack.c.l.b16 %v632
  %v717 = vunpack.c.h.b16 %v632
  %v718 = vunpack.c.l.b16 %v633
  %v719 = vunpack.c.h.b16 %v633
  %v720 = vunpack.c.l.b16 %v634
  %v721 = vunpack.c.h.b16 %v634
  %v722 = vunpack.c.l.b16 %v635
  %v723 = vunpack.c.h.b16 %v635
  %v724 = vunpack.c.l.b16 %v636
  %v725 = vunpack.c.h.b16 %v636
  %v726 = vunpack.c.l.b16 %v637
  %v727 = vunpack.c.h.b16 %v637
  %v728 = vunpack.c.l.b16 %v638
  %v729 = vunpack.c.h.b16 %v638
  %v730 = vunpack.c.l.b16 %v639
  %v731 = vunpack.c.h.b16 %v639
  %v732 = vunpack.c.l.b16 %v640
  %v733 = vunpack.c.h.b16 %v640
  %v734 = vunpack.c.l.b16 %v641
  %v735 = vunpack.c.h.b16 %v641
  %v736 = vunpack.c.l.b16 %v642
  %v737 = vunpack.c.h.b16 %v642
  %v738 = vunpack.c.l.b16 %v643
  %v739 = vunpack.c.h.b16 %v643
  %v740 = vpack.c.b16 %v680, %v676
  %v741 = vpack.c.b16 %v681, %v677
  %v742 = vpack.c.b16 %v682, %v678
  %v743 = vpack.c.b16 %v683, %v679
  %v744 = vpack.c.b16 %v688, %v684
  %v745 = vpack.c.b16 %v689, %v685
  %v746 = vpack.c.b16 %v690, %v686
  %v747 = vpack.c.b16 %v691, %v687
  %v748 = vpack.c.b16 %v696, %v692
  %v749 = vpack.c.b16 %v697, %v693
  %v750 = vpack.c.b16 %v698, %v694
  %v751 = vpack.c.b16 %v699, %v695
  %v752 = vpack.c.b16 %v704, %v700
  %v753 = vpack.c.b16 %v705, %v701
  %v754 = vpack.c.b16 %v706, %v702
  %v755 = vpack.c.b16 %v707, %v703
  %v756 = vpack.c.b16 %v712, %v708
  %v757 = vpack.c.b16 %v713, %v709
  %v758 = vpack.c.b16 %v714, %v710
  %v759 = vpack.c.b16 %v715, %v711
  %v760 = vpack.c.b16 %v720, %v716
  %v761 = vpack.c.b16 %v721, %v717
  %v762 = vpack.c.b16 %v722, %v718
  %v763 = vpack.c.b16 %v723, %v719
  %v764 = vpack.c.b16 %v728, %v724
  %v765 = vpack.c.b16 %v729, %v725
  %v766 = vpack.c.b16 %v730, %v726
  %v767 = vpack.c.b16 %v731, %v727
  %v768 = vpack.c.b16 %v736, %v732
  %v769 = vpack.c.b16 %v737, %v733
  %v770 = vpack.c.b16 %v738, %v734
  %v771 = vpack.c.b16 %v739, %v735
  %804 = vmatpush.bf16.msra.mxu0 %v768
  %805 = vmatpush.bf16.msra.mxu0 %v764
  %806 = vmatpush.bf16.msra.mxu0 %v760
  %807 = vmatpush.bf16.msra.mxu0 %v756
  %808 = vmatpush.bf16.msra.mxu0 %v752
  %809 = vmatpush.bf16.msra.mxu0 %v748
  %810 = vmatpush.bf16.msra.mxu0 %v744
  %811 = vmatpush.bf16.msra.mxu0 %v740
  %812 = vmatmul.bf16.gmra.mxu0 %v611
  %v813 = vpop.f32.mrf.mxu0
  %v814 = vadd.f32 0.0, %v813
  %v815 = vpop.f32.mrf.mxu0
  %816 = vdwg.mxu0
  %817 = vmatpush.bf16.msra.mxu0 %v769
  %818 = vmatpush.bf16.msra.mxu0 %v765
  %819 = vmatpush.bf16.msra.mxu0 %v761
  %820 = vmatpush.bf16.msra.mxu0 %v757
  %821 = vmatpush.bf16.msra.mxu0 %v753
  %822 = vmatpush.bf16.msra.mxu0 %v749
  %823 = vmatpush.bf16.msra.mxu0 %v745
  %824 = vmatpush.bf16.msra.mxu0 %v741
  %825 = vmatmul.bf16.gmra.mxu0 %v611
  %v826 = vpop.f32.mrf.mxu0
  %v827 = vadd.f32 0.0, %v826
  %v828 = vpop.f32.mrf.mxu0
  %829 = vdwg.mxu0
  %830 = vmatpush.bf16.msra.mxu0 %v770
  %831 = vmatpush.bf16.msra.mxu0 %v766
  %832 = vmatpush.bf16.msra.mxu0 %v762
  %833 = vmatpush.bf16.msra.mxu0 %v758
  %834 = vmatpush.bf16.msra.mxu0 %v754
  %835 = vmatpush.bf16.msra.mxu0 %v750
  %836 = vmatpush.bf16.msra.mxu0 %v746
  %837 = vmatpush.bf16.msra.mxu0 %v742
  %838 = vmatmul.bf16.gmra.mxu0 %v611
  %v839 = vpop.f32.mrf.mxu0
  %v840 = vadd.f32 0.0, %v839
  %v841 = vpop.f32.mrf.mxu0
  %842 = vdwg.mxu0
  %843 = vmatpush.bf16.msra.mxu0 %v771
  %844 = vmatpush.bf16.msra.mxu0 %v767
  %845 = vmatpush.bf16.msra.mxu0 %v763
  %846 = vmatpush.bf16.msra.mxu0 %v759
  %847 = vmatpush.bf16.msra.mxu0 %v755
  %848 = vmatpush.bf16.msra.mxu0 %v751
  %849 = vmatpush.bf16.msra.mxu0 %v747
  %850 = vmatpush.bf16.msra.mxu0 %v743
  %851 = vmatmul.bf16.gmra.mxu0 %v611
  %v852 = vpop.f32.mrf.mxu0
  %v853 = vadd.f32 0.0, %v852
  %v854 = vpop.f32.mrf.mxu0
  %855 = vdwg.mxu0
  %v856 = vadd.f32 %v607, %v814
  %v857 = vadd.f32 %v608, %v827
  %v858 = vadd.f32 %v609, %v840
  %v859 = vadd.f32 %v610, %v853
  %v860 = vxor.u32 %v856, 2147483648
  %v861 = vmul.f32 %v860, 1.442695
  %v862 = vpow.pop %v861
  %v863 = vadd.f32 %v862, 1.0
  %v864 = vrcp.pop %v863
  %v865 = vmul.f32 %v863, %v864
  %v866 = vsub.f32 1.0, %v865
  %v867 = vmul.f32 %v864, %v866
  %v868 = vadd.f32 %v864, %v867
  %vm869 = vweird.f32 %v863
  %vm870 = vweird.f32 %v864
  %vm871 = vmor %vm869, %vm870
  %v872 = vsel %vm871, %v864, %v868
  %v873 = vand.u32 2147483647, %v863
  %vm874 = vcmp.eq.f32.partialorder %v873, 8.507059e+37
  %v875 = vand.u32 %v863, 2147483648
  %v876 = vor.u32 1.1754944e-38, %v875
  %v877 = vsel %vm874, %v876, %v872
  %v878 = vmul.f32 1.0, %v877
  %v879 = vxor.u32 %v857, 2147483648
  %v880 = vmul.f32 %v879, 1.442695
  %v881 = vpow.pop %v880
  %v882 = vadd.f32 %v881, 1.0
  %v883 = vrcp.pop %v882
  %v884 = vmul.f32 %v882, %v883
  %v885 = vsub.f32 1.0, %v884
  %v886 = vmul.f32 %v883, %v885
  %v887 = vadd.f32 %v883, %v886
  %vm888 = vweird.f32 %v882
  %vm889 = vweird.f32 %v883
  %vm890 = vmor %vm888, %vm889
  %v891 = vsel %vm890, %v883, %v887
  %v892 = vand.u32 2147483647, %v882
  %vm893 = vcmp.eq.f32.partialorder %v892, 8.507059e+37
  %v894 = vand.u32 %v882, 2147483648
  %v895 = vor.u32 1.1754944e-38, %v894
  %v896 = vsel %vm893, %v895, %v891
  %v897 = vmul.f32 1.0, %v896
  %v898 = vtanh.pop %v858
  %v899 = vxor.u32 %v859, 2147483648
  %v900 = vmul.f32 %v899, 1.442695
  %v901 = vpow.pop %v900
  %v902 = vadd.f32 %v901, 1.0
  %v903 = vrcp.pop %v902
  %v904 = vmul.f32 %v902, %v903
  %v905 = vsub.f32 1.0, %v904
  %v906 = vmul.f32 %v903, %v905
  %v907 = vadd.f32 %v903, %v906
  %vm908 = vweird.f32 %v902
  %vm909 = vweird.f32 %v903
  %vm910 = vmor %vm908, %vm909
  %v911 = vsel %vm910, %v903, %v907
  %v912 = vand.u32 2147483647, %v902
  %vm913 = vcmp.eq.f32.partialorder %v912, 8.507059e+37
  %v914 = vand.u32 %v902, 2147483648
  %v915 = vor.u32 1.1754944e-38, %v914
  %v916 = vsel %vm913, %v915, %v911
  %v917 = vmul.f32 1.0, %v916
  %v918 = vmul.f32 %v897, %v600
  %v919 = vmul.f32 %v878, %v898
  %v920 = vadd.f32 %v918, %v919
  %v921 = vtanh.pop %v920
  %v922 = vmul.f32 %v917, %v921
  %s923 = scalar_lea.vmem [#allocation3], 8
  %924 = vst [vmem:[%s923] sm:$0xff] %v922
  %s925 = smul.u32 2, 4
  %s926 = smul.addr %s925, 8
  %s927 = scalar_lea.vmem [#allocation2], %s926
  %v928 = vld [vmem:[%s927] sm:$0xff]
  %v929 = vld [vmem:[%s927 + $0x8] sm:$0xff]
  %v930 = vld [vmem:[%s927 + $0x10] sm:$0xff]
  %v931 = vld [vmem:[%s927 + $0x18] sm:$0xff]
  %v932 = vpack.c.bf16 %v922, %v922
  %v933 = vld [vmem:[%s3] sm:$0xff]
  %v934 = vld [vmem:[%s3 + $0x8] sm:$0xff]
  %v935 = vld [vmem:[%s3 + $0x10] sm:$0xff]
  %v936 = vld [vmem:[%s3 + $0x18] sm:$0xff]
  %v937 = vld [vmem:[%s3 + $0x20] sm:$0xff]
  %v938 = vld [vmem:[%s3 + $0x28] sm:$0xff]
  %v939 = vld [vmem:[%s3 + $0x30] sm:$0xff]
  %v940 = vld [vmem:[%s3 + $0x38] sm:$0xff]
  %v941 = vld [vmem:[%s3 + $0x40] sm:$0xff]
  %v942 = vld [vmem:[%s3 + $0x48] sm:$0xff]
  %v943 = vld [vmem:[%s3 + $0x50] sm:$0xff]
  %v944 = vld [vmem:[%s3 + $0x58] sm:$0xff]
  %v945 = vld [vmem:[%s3 + $0x60] sm:$0xff]
  %v946 = vld [vmem:[%s3 + $0x68] sm:$0xff]
  %v947 = vld [vmem:[%s3 + $0x70] sm:$0xff]
  %v948 = vld [vmem:[%s3 + $0x78] sm:$0xff]
  %v949 = vld [vmem:[%s3 + $0x80] sm:$0xff]
  %v950 = vld [vmem:[%s3 + $0x88] sm:$0xff]
  %v951 = vld [vmem:[%s3 + $0x90] sm:$0xff]
  %v952 = vld [vmem:[%s3 + $0x98] sm:$0xff]
  %v953 = vld [vmem:[%s3 + $0xa0] sm:$0xff]
  %v954 = vld [vmem:[%s3 + $0xa8] sm:$0xff]
  %v955 = vld [vmem:[%s3 + $0xb0] sm:$0xff]
  %v956 = vld [vmem:[%s3 + $0xb8] sm:$0xff]
  %v957 = vld [vmem:[%s3 + $0xc0] sm:$0xff]
  %v958 = vld [vmem:[%s3 + $0xc8] sm:$0xff]
  %v959 = vld [vmem:[%s3 + $0xd0] sm:$0xff]
  %v960 = vld [vmem:[%s3 + $0xd8] sm:$0xff]
  %v961 = vld [vmem:[%s3 + $0xe0] sm:$0xff]
  %v962 = vld [vmem:[%s3 + $0xe8] sm:$0xff]
  %v963 = vld [vmem:[%s3 + $0xf0] sm:$0xff]
  %v964 = vld [vmem:[%s3 + $0xf8] sm:$0xff]
  %v997 = vunpack.c.l.b16 %v933
  %v998 = vunpack.c.h.b16 %v933
  %v999 = vunpack.c.l.b16 %v934
  %v1000 = vunpack.c.h.b16 %v934
  %v1001 = vunpack.c.l.b16 %v935
  %v1002 = vunpack.c.h.b16 %v935
  %v1003 = vunpack.c.l.b16 %v936
  %v1004 = vunpack.c.h.b16 %v936
  %v1005 = vunpack.c.l.b16 %v937
  %v1006 = vunpack.c.h.b16 %v937
  %v1007 = vunpack.c.l.b16 %v938
  %v1008 = vunpack.c.h.b16 %v938
  %v1009 = vunpack.c.l.b16 %v939
  %v1010 = vunpack.c.h.b16 %v939
  %v1011 = vunpack.c.l.b16 %v940
  %v1012 = vunpack.c.h.b16 %v940
  %v1013 = vunpack.c.l.b16 %v941
  %v1014 = vunpack.c.h.b16 %v941
  %v1015 = vunpack.c.l.b16 %v942
  %v1016 = vunpack.c.h.b16 %v942
  %v1017 = vunpack.c.l.b16 %v943
  %v1018 = vunpack.c.h.b16 %v943
  %v1019 = vunpack.c.l.b16 %v944
  %v1020 = vunpack.c.h.b16 %v944
  %v1021 = vunpack.c.l.b16 %v945
  %v1022 = vunpack.c.h.b16 %v945
  %v1023 = vunpack.c.l.b16 %v946
  %v1024 = vunpack.c.h.b16 %v946
  %v1025 = vunpack.c.l.b16 %v947
  %v1026 = vunpack.c.h.b16 %v947
  %v1027 = vunpack.c.l.b16 %v948
  %v1028 = vunpack.c.h.b16 %v948
  %v1029 = vunpack.c.l.b16 %v949
  %v1030 = vunpack.c.h.b16 %v949
  %v1031 = vunpack.c.l.b16 %v950
  %v1032 = vunpack.c.h.b16 %v950
  %v1033 = vunpack.c.l.b16 %v951
  %v1034 = vunpack.c.h.b16 %v951
  %v1035 = vunpack.c.l.b16 %v952
  %v1036 = vunpack.c.h.b16 %v952
  %v1037 = vunpack.c.l.b16 %v953
  %v1038 = vunpack.c.h.b16 %v953
  %v1039 = vunpack.c.l.b16 %v954
  %v1040 = vunpack.c.h.b16 %v954
  %v1041 = vunpack.c.l.b16 %v955
  %v1042 = vunpack.c.h.b16 %v955
  %v1043 = vunpack.c.l.b16 %v956
  %v1044 = vunpack.c.h.b16 %v956
  %v1045 = vunpack.c.l.b16 %v957
  %v1046 = vunpack.c.h.b16 %v957
  %v1047 = vunpack.c.l.b16 %v958
  %v1048 = vunpack.c.h.b16 %v958
  %v1049 = vunpack.c.l.b16 %v959
  %v1050 = vunpack.c.h.b16 %v959
  %v1051 = vunpack.c.l.b16 %v960
  %v1052 = vunpack.c.h.b16 %v960
  %v1053 = vunpack.c.l.b16 %v961
  %v1054 = vunpack.c.h.b16 %v961
  %v1055 = vunpack.c.l.b16 %v962
  %v1056 = vunpack.c.h.b16 %v962
  %v1057 = vunpack.c.l.b16 %v963
  %v1058 = vunpack.c.h.b16 %v963
  %v1059 = vunpack.c.l.b16 %v964
  %v1060 = vunpack.c.h.b16 %v964
  %v1061 = vpack.c.b16 %v1001, %v997
  %v1062 = vpack.c.b16 %v1002, %v998
  %v1063 = vpack.c.b16 %v1003, %v999
  %v1064 = vpack.c.b16 %v1004, %v1000
  %v1065 = vpack.c.b16 %v1009, %v1005
  %v1066 = vpack.c.b16 %v1010, %v1006
  %v1067 = vpack.c.b16 %v1011, %v1007
  %v1068 = vpack.c.b16 %v1012, %v1008
  %v1069 = vpack.c.b16 %v1017, %v1013
  %v1070 = vpack.c.b16 %v1018, %v1014
  %v1071 = vpack.c.b16 %v1019, %v1015
  %v1072 = vpack.c.b16 %v1020, %v1016
  %v1073 = vpack.c.b16 %v1025, %v1021
  %v1074 = vpack.c.b16 %v1026, %v1022
  %v1075 = vpack.c.b16 %v1027, %v1023
  %v1076 = vpack.c.b16 %v1028, %v1024
  %v1077 = vpack.c.b16 %v1033, %v1029
  %v1078 = vpack.c.b16 %v1034, %v1030
  %v1079 = vpack.c.b16 %v1035, %v1031
  %v1080 = vpack.c.b16 %v1036, %v1032
  %v1081 = vpack.c.b16 %v1041, %v1037
  %v1082 = vpack.c.b16 %v1042, %v1038
  %v1083 = vpack.c.b16 %v1043, %v1039
  %v1084 = vpack.c.b16 %v1044, %v1040
  %v1085 = vpack.c.b16 %v1049, %v1045
  %v1086 = vpack.c.b16 %v1050, %v1046
  %v1087 = vpack.c.b16 %v1051, %v1047
  %v1088 = vpack.c.b16 %v1052, %v1048
  %v1089 = vpack.c.b16 %v1057, %v1053
  %v1090 = vpack.c.b16 %v1058, %v1054
  %v1091 = vpack.c.b16 %v1059, %v1055
  %v1092 = vpack.c.b16 %v1060, %v1056
  %1125 = vmatpush.bf16.msra.mxu0 %v1089
  %1126 = vmatpush.bf16.msra.mxu0 %v1085
  %1127 = vmatpush.bf16.msra.mxu0 %v1081
  %1128 = vmatpush.bf16.msra.mxu0 %v1077
  %1129 = vmatpush.bf16.msra.mxu0 %v1073
  %1130 = vmatpush.bf16.msra.mxu0 %v1069
  %1131 = vmatpush.bf16.msra.mxu0 %v1065
  %1132 = vmatpush.bf16.msra.mxu0 %v1061
  %1133 = vmatmul.bf16.gmra.mxu0 %v932
  %v1134 = vpop.f32.mrf.mxu0
  %v1135 = vadd.f32 0.0, %v1134
  %v1136 = vpop.f32.mrf.mxu0
  %1137 = vdwg.mxu0
  %1138 = vmatpush.bf16.msra.mxu0 %v1090
  %1139 = vmatpush.bf16.msra.mxu0 %v1086
  %1140 = vmatpush.bf16.msra.mxu0 %v1082
  %1141 = vmatpush.bf16.msra.mxu0 %v1078
  %1142 = vmatpush.bf16.msra.mxu0 %v1074
  %1143 = vmatpush.bf16.msra.mxu0 %v1070
  %1144 = vmatpush.bf16.msra.mxu0 %v1066
  %1145 = vmatpush.bf16.msra.mxu0 %v1062
  %1146 = vmatmul.bf16.gmra.mxu0 %v932
  %v1147 = vpop.f32.mrf.mxu0
  %v1148 = vadd.f32 0.0, %v1147
  %v1149 = vpop.f32.mrf.mxu0
  %1150 = vdwg.mxu0
  %1151 = vmatpush.bf16.msra.mxu0 %v1091
  %1152 = vmatpush.bf16.msra.mxu0 %v1087
  %1153 = vmatpush.bf16.msra.mxu0 %v1083
  %1154 = vmatpush.bf16.msra.mxu0 %v1079
  %1155 = vmatpush.bf16.msra.mxu0 %v1075
  %1156 = vmatpush.bf16.msra.mxu0 %v1071
  %1157 = vmatpush.bf16.msra.mxu0 %v1067
  %1158 = vmatpush.bf16.msra.mxu0 %v1063
  %1159 = vmatmul.bf16.gmra.mxu0 %v932
  %v1160 = vpop.f32.mrf.mxu0
  %v1161 = vadd.f32 0.0, %v1160
  %v1162 = vpop.f32.mrf.mxu0
  %1163 = vdwg.mxu0
  %1164 = vmatpush.bf16.msra.mxu0 %v1092
  %1165 = vmatpush.bf16.msra.mxu0 %v1088
  %1166 = vmatpush.bf16.msra.mxu0 %v1084
  %1167 = vmatpush.bf16.msra.mxu0 %v1080
  %1168 = vmatpush.bf16.msra.mxu0 %v1076
  %1169 = vmatpush.bf16.msra.mxu0 %v1072
  %1170 = vmatpush.bf16.msra.mxu0 %v1068
  %1171 = vmatpush.bf16.msra.mxu0 %v1064
  %1172 = vmatmul.bf16.gmra.mxu0 %v932
  %v1173 = vpop.f32.mrf.mxu0
  %v1174 = vadd.f32 0.0, %v1173
  %v1175 = vpop.f32.mrf.mxu0
  %1176 = vdwg.mxu0
  %v1177 = vadd.f32 %v928, %v1135
  %v1178 = vadd.f32 %v929, %v1148
  %v1179 = vadd.f32 %v930, %v1161
  %v1180 = vadd.f32 %v931, %v1174
  %v1181 = vxor.u32 %v1177, 2147483648
  %v1182 = vmul.f32 %v1181, 1.442695
  %v1183 = vpow.pop %v1182
  %v1184 = vadd.f32 %v1183, 1.0
  %v1185 = vrcp.pop %v1184
  %v1186 = vmul.f32 %v1184, %v1185
  %v1187 = vsub.f32 1.0, %v1186
  %v1188 = vmul.f32 %v1185, %v1187
  %v1189 = vadd.f32 %v1185, %v1188
  %vm1190 = vweird.f32 %v1184
  %vm1191 = vweird.f32 %v1185
  %vm1192 = vmor %vm1190, %vm1191
  %v1193 = vsel %vm1192, %v1185, %v1189
  %v1194 = vand.u32 2147483647, %v1184
  %vm1195 = vcmp.eq.f32.partialorder %v1194, 8.507059e+37
  %v1196 = vand.u32 %v1184, 2147483648
  %v1197 = vor.u32 1.1754944e-38, %v1196
  %v1198 = vsel %vm1195, %v1197, %v1193
  %v1199 = vmul.f32 1.0, %v1198
  %v1200 = vxor.u32 %v1178, 2147483648
  %v1201 = vmul.f32 %v1200, 1.442695
  %v1202 = vpow.pop %v1201
  %v1203 = vadd.f32 %v1202, 1.0
  %v1204 = vrcp.pop %v1203
  %v1205 = vmul.f32 %v1203, %v1204
  %v1206 = vsub.f32 1.0, %v1205
  %v1207 = vmul.f32 %v1204, %v1206
  %v1208 = vadd.f32 %v1204, %v1207
  %vm1209 = vweird.f32 %v1203
  %vm1210 = vweird.f32 %v1204
  %vm1211 = vmor %vm1209, %vm1210
  %v1212 = vsel %vm1211, %v1204, %v1208
  %v1213 = vand.u32 2147483647, %v1203
  %vm1214 = vcmp.eq.f32.partialorder %v1213, 8.507059e+37
  %v1215 = vand.u32 %v1203, 2147483648
  %v1216 = vor.u32 1.1754944e-38, %v1215
  %v1217 = vsel %vm1214, %v1216, %v1212
  %v1218 = vmul.f32 1.0, %v1217
  %v1219 = vtanh.pop %v1179
  %v1220 = vxor.u32 %v1180, 2147483648
  %v1221 = vmul.f32 %v1220, 1.442695
  %v1222 = vpow.pop %v1221
  %v1223 = vadd.f32 %v1222, 1.0
  %v1224 = vrcp.pop %v1223
  %v1225 = vmul.f32 %v1223, %v1224
  %v1226 = vsub.f32 1.0, %v1225
  %v1227 = vmul.f32 %v1224, %v1226
  %v1228 = vadd.f32 %v1224, %v1227
  %vm1229 = vweird.f32 %v1223
  %vm1230 = vweird.f32 %v1224
  %vm1231 = vmor %vm1229, %vm1230
  %v1232 = vsel %vm1231, %v1224, %v1228
  %v1233 = vand.u32 2147483647, %v1223
  %vm1234 = vcmp.eq.f32.partialorder %v1233, 8.507059e+37
  %v1235 = vand.u32 %v1223, 2147483648
  %v1236 = vor.u32 1.1754944e-38, %v1235
  %v1237 = vsel %vm1234, %v1236, %v1232
  %v1238 = vmul.f32 1.0, %v1237
  %v1239 = vmul.f32 %v1218, %v920
  %v1240 = vmul.f32 %v1199, %v1219
  %v1241 = vadd.f32 %v1239, %v1240
  %v1242 = vtanh.pop %v1241
  %v1243 = vmul.f32 %v1238, %v1242
  %s1244 = scalar_lea.vmem [#allocation3], 16
  %1245 = vst [vmem:[%s1244] sm:$0xff] %v1243
  %s1246 = smul.u32 3, 4
  %s1247 = smul.addr %s1246, 8
  %s1248 = scalar_lea.vmem [#allocation2], %s1247
  %v1249 = vld [vmem:[%s1248] sm:$0xff]
  %v1250 = vld [vmem:[%s1248 + $0x8] sm:$0xff]
  %v1251 = vld [vmem:[%s1248 + $0x10] sm:$0xff]
  %v1252 = vld [vmem:[%s1248 + $0x18] sm:$0xff]
  %v1253 = vpack.c.bf16 %v1243, %v1243
  %v1254 = vld [vmem:[%s3] sm:$0xff]
  %v1255 = vld [vmem:[%s3 + $0x8] sm:$0xff]
  %v1256 = vld [vmem:[%s3 + $0x10] sm:$0xff]
  %v1257 = vld [vmem:[%s3 + $0x18] sm:$0xff]
  %v1258 = vld [vmem:[%s3 + $0x20] sm:$0xff]
  %v1259 = vld [vmem:[%s3 + $0x28] sm:$0xff]
  %v1260 = vld [vmem:[%s3 + $0x30] sm:$0xff]
  %v1261 = vld [vmem:[%s3 + $0x38] sm:$0xff]
  %v1262 = vld [vmem:[%s3 + $0x40] sm:$0xff]
  %v1263 = vld [vmem:[%s3 + $0x48] sm:$0xff]
  %v1264 = vld [vmem:[%s3 + $0x50] sm:$0xff]
  %v1265 = vld [vmem:[%s3 + $0x58] sm:$0xff]
  %v1266 = vld [vmem:[%s3 + $0x60] sm:$0xff]
  %v1267 = vld [vmem:[%s3 + $0x68] sm:$0xff]
  %v1268 = vld [vmem:[%s3 + $0x70] sm:$0xff]
  %v1269 = vld [vmem:[%s3 + $0x78] sm:$0xff]
  %v1270 = vld [vmem:[%s3 + $0x80] sm:$0xff]
  %v1271 = vld [vmem:[%s3 + $0x88] sm:$0xff]
  %v1272 = vld [vmem:[%s3 + $0x90] sm:$0xff]
  %v1273 = vld [vmem:[%s3 + $0x98] sm:$0xff]
  %v1274 = vld [vmem:[%s3 + $0xa0] sm:$0xff]
  %v1275 = vld [vmem:[%s3 + $0xa8] sm:$0xff]
  %v1276 = vld [vmem:[%s3 + $0xb0] sm:$0xff]
  %v1277 = vld [vmem:[%s3 + $0xb8] sm:$0xff]
  %v1278 = vld [vmem:[%s3 + $0xc0] sm:$0xff]
  %v1279 = vld [vmem:[%s3 + $0xc8] sm:$0xff]
  %v1280 = vld [vmem:[%s3 + $0xd0] sm:$0xff]
  %v1281 = vld [vmem:[%s3 + $0xd8] sm:$0xff]
  %v1282 = vld [vmem:[%s3 + $0xe0] sm:$0xff]
  %v1283 = vld [vmem:[%s3 + $0xe8] sm:$0xff]
  %v1284 = vld [vmem:[%s3 + $0xf0] sm:$0xff]
  %v1285 = vld [vmem:[%s3 + $0xf8] sm:$0xff]
  %v1318 = vunpack.c.l.b16 %v1254
  %v1319 = vunpack.c.h.b16 %v1254
  %v1320 = vunpack.c.l.b16 %v1255
  %v1321 = vunpack.c.h.b16 %v1255
  %v1322 = vunpack.c.l.b16 %v1256
  %v1323 = vunpack.c.h.b16 %v1256
  %v1324 = vunpack.c.l.b16 %v1257
  %v1325 = vunpack.c.h.b16 %v1257
  %v1326 = vunpack.c.l.b16 %v1258
  %v1327 = vunpack.c.h.b16 %v1258
  %v1328 = vunpack.c.l.b16 %v1259
  %v1329 = vunpack.c.h.b16 %v1259
  %v1330 = vunpack.c.l.b16 %v1260
  %v1331 = vunpack.c.h.b16 %v1260
  %v1332 = vunpack.c.l.b16 %v1261
  %v1333 = vunpack.c.h.b16 %v1261
  %v1334 = vunpack.c.l.b16 %v1262
  %v1335 = vunpack.c.h.b16 %v1262
  %v1336 = vunpack.c.l.b16 %v1263
  %v1337 = vunpack.c.h.b16 %v1263
  %v1338 = vunpack.c.l.b16 %v1264
  %v1339 = vunpack.c.h.b16 %v1264
  %v1340 = vunpack.c.l.b16 %v1265
  %v1341 = vunpack.c.h.b16 %v1265
  %v1342 = vunpack.c.l.b16 %v1266
  %v1343 = vunpack.c.h.b16 %v1266
  %v1344 = vunpack.c.l.b16 %v1267
  %v1345 = vunpack.c.h.b16 %v1267
  %v1346 = vunpack.c.l.b16 %v1268
  %v1347 = vunpack.c.h.b16 %v1268
  %v1348 = vunpack.c.l.b16 %v1269
  %v1349 = vunpack.c.h.b16 %v1269
  %v1350 = vunpack.c.l.b16 %v1270
  %v1351 = vunpack.c.h.b16 %v1270
  %v1352 = vunpack.c.l.b16 %v1271
  %v1353 = vunpack.c.h.b16 %v1271
  %v1354 = vunpack.c.l.b16 %v1272
  %v1355 = vunpack.c.h.b16 %v1272
  %v1356 = vunpack.c.l.b16 %v1273
  %v1357 = vunpack.c.h.b16 %v1273
  %v1358 = vunpack.c.l.b16 %v1274
  %v1359 = vunpack.c.h.b16 %v1274
  %v1360 = vunpack.c.l.b16 %v1275
  %v1361 = vunpack.c.h.b16 %v1275
  %v1362 = vunpack.c.l.b16 %v1276
  %v1363 = vunpack.c.h.b16 %v1276
  %v1364 = vunpack.c.l.b16 %v1277
  %v1365 = vunpack.c.h.b16 %v1277
  %v1366 = vunpack.c.l.b16 %v1278
  %v1367 = vunpack.c.h.b16 %v1278
  %v1368 = vunpack.c.l.b16 %v1279
  %v1369 = vunpack.c.h.b16 %v1279
  %v1370 = vunpack.c.l.b16 %v1280
  %v1371 = vunpack.c.h.b16 %v1280
  %v1372 = vunpack.c.l.b16 %v1281
  %v1373 = vunpack.c.h.b16 %v1281
  %v1374 = vunpack.c.l.b16 %v1282
  %v1375 = vunpack.c.h.b16 %v1282
  %v1376 = vunpack.c.l.b16 %v1283
  %v1377 = vunpack.c.h.b16 %v1283
  %v1378 = vunpack.c.l.b16 %v1284
  %v1379 = vunpack.c.h.b16 %v1284
  %v1380 = vunpack.c.l.b16 %v1285
  %v1381 = vunpack.c.h.b16 %v1285
  %v1382 = vpack.c.b16 %v1322, %v1318
  %v1383 = vpack.c.b16 %v1323, %v1319
  %v1384 = vpack.c.b16 %v1324, %v1320
  %v1385 = vpack.c.b16 %v1325, %v1321
  %v1386 = vpack.c.b16 %v1330, %v1326
  %v1387 = vpack.c.b16 %v1331, %v1327
  %v1388 = vpack.c.b16 %v1332, %v1328
  %v1389 = vpack.c.b16 %v1333, %v1329
  %v1390 = vpack.c.b16 %v1338, %v1334
  %v1391 = vpack.c.b16 %v1339, %v1335
  %v1392 = vpack.c.b16 %v1340, %v1336
  %v1393 = vpack.c.b16 %v1341, %v1337
  %v1394 = vpack.c.b16 %v1346, %v1342
  %v1395 = vpack.c.b16 %v1347, %v1343
  %v1396 = vpack.c.b16 %v1348, %v1344
  %v1397 = vpack.c.b16 %v1349, %v1345
  %v1398 = vpack.c.b16 %v1354, %v1350
  %v1399 = vpack.c.b16 %v1355, %v1351
  %v1400 = vpack.c.b16 %v1356, %v1352
  %v1401 = vpack.c.b16 %v1357, %v1353
  %v1402 = vpack.c.b16 %v1362, %v1358
  %v1403 = vpack.c.b16 %v1363, %v1359
  %v1404 = vpack.c.b16 %v1364, %v1360
  %v1405 = vpack.c.b16 %v1365, %v1361
  %v1406 = vpack.c.b16 %v1370, %v1366
  %v1407 = vpack.c.b16 %v1371, %v1367
  %v1408 = vpack.c.b16 %v1372, %v1368
  %v1409 = vpack.c.b16 %v1373, %v1369
  %v1410 = vpack.c.b16 %v1378, %v1374
  %v1411 = vpack.c.b16 %v1379, %v1375
  %v1412 = vpack.c.b16 %v1380, %v1376
  %v1413 = vpack.c.b16 %v1381, %v1377
  %1446 = vmatpush.bf16.msra.mxu0 %v1410
  %1447 = vmatpush.bf16.msra.mxu0 %v1406
  %1448 = vmatpush.bf16.msra.mxu0 %v1402
  %1449 = vmatpush.bf16.msra.mxu0 %v1398
  %1450 = vmatpush.bf16.msra.mxu0 %v1394
  %1451 = vmatpush.bf16.msra.mxu0 %v1390
  %1452 = vmatpush.bf16.msra.mxu0 %v1386
  %1453 = vmatpush.bf16.msra.mxu0 %v1382
  %1454 = vmatmul.bf16.gmra.mxu0 %v1253
  %v1455 = vpop.f32.mrf.mxu0
  %v1456 = vadd.f32 0.0, %v1455
  %v1457 = vpop.f32.mrf.mxu0
  %1458 = vdwg.mxu0
  %1459 = vmatpush.bf16.msra.mxu0 %v1411
  %1460 = vmatpush.bf16.msra.mxu0 %v1407
  %1461 = vmatpush.bf16.msra.mxu0 %v1403
  %1462 = vmatpush.bf16.msra.mxu0 %v1399
  %1463 = vmatpush.bf16.msra.mxu0 %v1395
  %1464 = vmatpush.bf16.msra.mxu0 %v1391
  %1465 = vmatpush.bf16.msra.mxu0 %v1387
  %1466 = vmatpush.bf16.msra.mxu0 %v1383
  %1467 = vmatmul.bf16.gmra.mxu0 %v1253
  %v1468 = vpop.f32.mrf.mxu0
  %v1469 = vadd.f32 0.0, %v1468
  %v1470 = vpop.f32.mrf.mxu0
  %1471 = vdwg.mxu0
  %1472 = vmatpush.bf16.msra.mxu0 %v1412
  %1473 = vmatpush.bf16.msra.mxu0 %v1408
  %1474 = vmatpush.bf16.msra.mxu0 %v1404
  %1475 = vmatpush.bf16.msra.mxu0 %v1400
  %1476 = vmatpush.bf16.msra.mxu0 %v1396
  %1477 = vmatpush.bf16.msra.mxu0 %v1392
  %1478 = vmatpush.bf16.msra.mxu0 %v1388
  %1479 = vmatpush.bf16.msra.mxu0 %v1384
  %1480 = vmatmul.bf16.gmra.mxu0 %v1253
  %v1481 = vpop.f32.mrf.mxu0
  %v1482 = vadd.f32 0.0, %v1481
  %v1483 = vpop.f32.mrf.mxu0
  %1484 = vdwg.mxu0
  %1485 = vmatpush.bf16.msra.mxu0 %v1413
  %1486 = vmatpush.bf16.msra.mxu0 %v1409
  %1487 = vmatpush.bf16.msra.mxu0 %v1405
  %1488 = vmatpush.bf16.msra.mxu0 %v1401
  %1489 = vmatpush.bf16.msra.mxu0 %v1397
  %1490 = vmatpush.bf16.msra.mxu0 %v1393
  %1491 = vmatpush.bf16.msra.mxu0 %v1389
  %1492 = vmatpush.bf16.msra.mxu0 %v1385
  %1493 = vmatmul.bf16.gmra.mxu0 %v1253
  %v1494 = vpop.f32.mrf.mxu0
  %v1495 = vadd.f32 0.0, %v1494
  %v1496 = vpop.f32.mrf.mxu0
  %1497 = vdwg.mxu0
  %v1498 = vadd.f32 %v1249, %v1456
  %v1499 = vadd.f32 %v1250, %v1469
  %v1500 = vadd.f32 %v1251, %v1482
  %v1501 = vadd.f32 %v1252, %v1495
  %v1502 = vxor.u32 %v1498, 2147483648
  %v1503 = vmul.f32 %v1502, 1.442695
  %v1504 = vpow.pop %v1503
  %v1505 = vadd.f32 %v1504, 1.0
  %v1506 = vrcp.pop %v1505
  %v1507 = vmul.f32 %v1505, %v1506
  %v1508 = vsub.f32 1.0, %v1507
  %v1509 = vmul.f32 %v1506, %v1508
  %v1510 = vadd.f32 %v1506, %v1509
  %vm1511 = vweird.f32 %v1505
  %vm1512 = vweird.f32 %v1506
  %vm1513 = vmor %vm1511, %vm1512
  %v1514 = vsel %vm1513, %v1506, %v1510
  %v1515 = vand.u32 2147483647, %v1505
  %vm1516 = vcmp.eq.f32.partialorder %v1515, 8.507059e+37
  %v1517 = vand.u32 %v1505, 2147483648
  %v1518 = vor.u32 1.1754944e-38, %v1517
  %v1519 = vsel %vm1516, %v1518, %v1514
  %v1520 = vmul.f32 1.0, %v1519
  %v1521 = vxor.u32 %v1499, 2147483648
  %v1522 = vmul.f32 %v1521, 1.442695
  %v1523 = vpow.pop %v1522
  %v1524 = vadd.f32 %v1523, 1.0
  %v1525 = vrcp.pop %v1524
  %v1526 = vmul.f32 %v1524, %v1525
  %v1527 = vsub.f32 1.0, %v1526
  %v1528 = vmul.f32 %v1525, %v1527
  %v1529 = vadd.f32 %v1525, %v1528
  %vm1530 = vweird.f32 %v1524
  %vm1531 = vweird.f32 %v1525
  %vm1532 = vmor %vm1530, %vm1531
  %v1533 = vsel %vm1532, %v1525, %v1529
  %v1534 = vand.u32 2147483647, %v1524
  %vm1535 = vcmp.eq.f32.partialorder %v1534, 8.507059e+37
  %v1536 = vand.u32 %v1524, 2147483648
  %v1537 = vor.u32 1.1754944e-38, %v1536
  %v1538 = vsel %vm1535, %v1537, %v1533
  %v1539 = vmul.f32 1.0, %v1538
  %v1540 = vtanh.pop %v1500
  %v1541 = vxor.u32 %v1501, 2147483648
  %v1542 = vmul.f32 %v1541, 1.442695
  %v1543 = vpow.pop %v1542
  %v1544 = vadd.f32 %v1543, 1.0
  %v1545 = vrcp.pop %v1544
  %v1546 = vmul.f32 %v1544, %v1545
  %v1547 = vsub.f32 1.0, %v1546
  %v1548 = vmul.f32 %v1545, %v1547
  %v1549 = vadd.f32 %v1545, %v1548
  %vm1550 = vweird.f32 %v1544
  %vm1551 = vweird.f32 %v1545
  %vm1552 = vmor %vm1550, %vm1551
  %v1553 = vsel %vm1552, %v1545, %v1549
  %v1554 = vand.u32 2147483647, %v1544
  %vm1555 = vcmp.eq.f32.partialorder %v1554, 8.507059e+37
  %v1556 = vand.u32 %v1544, 2147483648
  %v1557 = vor.u32 1.1754944e-38, %v1556
  %v1558 = vsel %vm1555, %v1557, %v1553
  %v1559 = vmul.f32 1.0, %v1558
  %v1560 = vmul.f32 %v1539, %v1241
  %v1561 = vmul.f32 %v1520, %v1540
  %v1562 = vadd.f32 %v1560, %v1561
  %v1563 = vtanh.pop %v1562
  %v1564 = vmul.f32 %v1559, %v1563
  %s1565 = scalar_lea.vmem [#allocation3], 24
  %1566 = vst [vmem:[%s1565] sm:$0xff] %v1564
  %s1567 = smul.u32 4, 4
  %s1568 = smul.addr %s1567, 8
  %s1569 = scalar_lea.vmem [#allocation2], %s1568
  %v1570 = vld [vmem:[%s1569] sm:$0xff]
  %v1571 = vld [vmem:[%s1569 + $0x8] sm:$0xff]
  %v1572 = vld [vmem:[%s1569 + $0x10] sm:$0xff]
  %v1573 = vld [vmem:[%s1569 + $0x18] sm:$0xff]
  %v1574 = vpack.c.bf16 %v1564, %v1564
  %v1575 = vld [vmem:[%s3] sm:$0xff]
  %v1576 = vld [vmem:[%s3 + $0x8] sm:$0xff]
  %v1577 = vld [vmem:[%s3 + $0x10] sm:$0xff]
  %v1578 = vld [vmem:[%s3 + $0x18] sm:$0xff]
  %v1579 = vld [vmem:[%s3 + $0x20] sm:$0xff]
  %v1580 = vld [vmem:[%s3 + $0x28] sm:$0xff]
  %v1581 = vld [vmem:[%s3 + $0x30] sm:$0xff]
  %v1582 = vld [vmem:[%s3 + $0x38] sm:$0xff]
  %v1583 = vld [vmem:[%s3 + $0x40] sm:$0xff]
  %v1584 = vld [vmem:[%s3 + $0x48] sm:$0xff]
  %v1585 = vld [vmem:[%s3 + $0x50] sm:$0xff]
  %v1586 = vld [vmem:[%s3 + $0x58] sm:$0xff]
  %v1587 = vld [vmem:[%s3 + $0x60] sm:$0xff]
  %v1588 = vld [vmem:[%s3 + $0x68] sm:$0xff]
  %v1589 = vld [vmem:[%s3 + $0x70] sm:$0xff]
  %v1590 = vld [vmem:[%s3 + $0x78] sm:$0xff]
  %v1591 = vld [vmem:[%s3 + $0x80] sm:$0xff]
  %v1592 = vld [vmem:[%s3 + $0x88] sm:$0xff]
  %v1593 = vld [vmem:[%s3 + $0x90] sm:$0xff]
  %v1594 = vld [vmem:[%s3 + $0x98] sm:$0xff]
  %v1595 = vld [vmem:[%s3 + $0xa0] sm:$0xff]
  %v1596 = vld [vmem:[%s3 + $0xa8] sm:$0xff]
  %v1597 = vld [vmem:[%s3 + $0xb0] sm:$0xff]
  %v1598 = vld [vmem:[%s3 + $0xb8] sm:$0xff]
  %v1599 = vld [vmem:[%s3 + $0xc0] sm:$0xff]
  %v1600 = vld [vmem:[%s3 + $0xc8] sm:$0xff]
  %v1601 = vld [vmem:[%s3 + $0xd0] sm:$0xff]
  %v1602 = vld [vmem:[%s3 + $0xd8] sm:$0xff]
  %v1603 = vld [vmem:[%s3 + $0xe0] sm:$0xff]
  %v1604 = vld [vmem:[%s3 + $0xe8] sm:$0xff]
  %v1605 = vld [vmem:[%s3 + $0xf0] sm:$0xff]
  %v1606 = vld [vmem:[%s3 + $0xf8] sm:$0xff]
  %v1639 = vunpack.c.l.b16 %v1575
  %v1640 = vunpack.c.h.b16 %v1575
  %v1641 = vunpack.c.l.b16 %v1576
  %v1642 = vunpack.c.h.b16 %v1576
  %v1643 = vunpack.c.l.b16 %v1577
  %v1644 = vunpack.c.h.b16 %v1577
  %v1645 = vunpack.c.l.b16 %v1578
  %v1646 = vunpack.c.h.b16 %v1578
  %v1647 = vunpack.c.l.b16 %v1579
  %v1648 = vunpack.c.h.b16 %v1579
  %v1649 = vunpack.c.l.b16 %v1580
  %v1650 = vunpack.c.h.b16 %v1580
  %v1651 = vunpack.c.l.b16 %v1581
  %v1652 = vunpack.c.h.b16 %v1581
  %v1653 = vunpack.c.l.b16 %v1582
  %v1654 = vunpack.c.h.b16 %v1582
  %v1655 = vunpack.c.l.b16 %v1583
  %v1656 = vunpack.c.h.b16 %v1583
  %v1657 = vunpack.c.l.b16 %v1584
  %v1658 = vunpack.c.h.b16 %v1584
  %v1659 = vunpack.c.l.b16 %v1585
  %v1660 = vunpack.c.h.b16 %v1585
  %v1661 = vunpack.c.l.b16 %v1586
  %v1662 = vunpack.c.h.b16 %v1586
  %v1663 = vunpack.c.l.b16 %v1587
  %v1664 = vunpack.c.h.b16 %v1587
  %v1665 = vunpack.c.l.b16 %v1588
  %v1666 = vunpack.c.h.b16 %v1588
  %v1667 = vunpack.c.l.b16 %v1589
  %v1668 = vunpack.c.h.b16 %v1589
  %v1669 = vunpack.c.l.b16 %v1590
  %v1670 = vunpack.c.h.b16 %v1590
  %v1671 = vunpack.c.l.b16 %v1591
  %v1672 = vunpack.c.h.b16 %v1591
  %v1673 = vunpack.c.l.b16 %v1592
  %v1674 = vunpack.c.h.b16 %v1592
  %v1675 = vunpack.c.l.b16 %v1593
  %v1676 = vunpack.c.h.b16 %v1593
  %v1677 = vunpack.c.l.b16 %v1594
  %v1678 = vunpack.c.h.b16 %v1594
  %v1679 = vunpack.c.l.b16 %v1595
  %v1680 = vunpack.c.h.b16 %v1595
  %v1681 = vunpack.c.l.b16 %v1596
  %v1682 = vunpack.c.h.b16 %v1596
  %v1683 = vunpack.c.l.b16 %v1597
  %v1684 = vunpack.c.h.b16 %v1597
  %v1685 = vunpack.c.l.b16 %v1598
  %v1686 = vunpack.c.h.b16 %v1598
  %v1687 = vunpack.c.l.b16 %v1599
  %v1688 = vunpack.c.h.b16 %v1599
  %v1689 = vunpack.c.l.b16 %v1600
  %v1690 = vunpack.c.h.b16 %v1600
  %v1691 = vunpack.c.l.b16 %v1601
  %v1692 = vunpack.c.h.b16 %v1601
  %v1693 = vunpack.c.l.b16 %v1602
  %v1694 = vunpack.c.h.b16 %v1602
  %v1695 = vunpack.c.l.b16 %v1603
  %v1696 = vunpack.c.h.b16 %v1603
  %v1697 = vunpack.c.l.b16 %v1604
  %v1698 = vunpack.c.h.b16 %v1604
  %v1699 = vunpack.c.l.b16 %v1605
  %v1700 = vunpack.c.h.b16 %v1605
  %v1701 = vunpack.c.l.b16 %v1606
  %v1702 = vunpack.c.h.b16 %v1606
  %v1703 = vpack.c.b16 %v1643, %v1639
  %v1704 = vpack.c.b16 %v1644, %v1640
  %v1705 = vpack.c.b16 %v1645, %v1641
  %v1706 = vpack.c.b16 %v1646, %v1642
  %v1707 = vpack.c.b16 %v1651, %v1647
  %v1708 = vpack.c.b16 %v1652, %v1648
  %v1709 = vpack.c.b16 %v1653, %v1649
  %v1710 = vpack.c.b16 %v1654, %v1650
  %v1711 = vpack.c.b16 %v1659, %v1655
  %v1712 = vpack.c.b16 %v1660, %v1656
  %v1713 = vpack.c.b16 %v1661, %v1657
  %v1714 = vpack.c.b16 %v1662, %v1658
  %v1715 = vpack.c.b16 %v1667, %v1663
  %v1716 = vpack.c.b16 %v1668, %v1664
  %v1717 = vpack.c.b16 %v1669, %v1665
  %v1718 = vpack.c.b16 %v1670, %v1666
  %v1719 = vpack.c.b16 %v1675, %v1671
  %v1720 = vpack.c.b16 %v1676, %v1672
  %v1721 = vpack.c.b16 %v1677, %v1673
  %v1722 = vpack.c.b16 %v1678, %v1674
  %v1723 = vpack.c.b16 %v1683, %v1679
  %v1724 = vpack.c.b16 %v1684, %v1680
  %v1725 = vpack.c.b16 %v1685, %v1681
  %v1726 = vpack.c.b16 %v1686, %v1682
  %v1727 = vpack.c.b16 %v1691, %v1687
  %v1728 = vpack.c.b16 %v1692, %v1688
  %v1729 = vpack.c.b16 %v1693, %v1689
  %v1730 = vpack.c.b16 %v1694, %v1690
  %v1731 = vpack.c.b16 %v1699, %v1695
  %v1732 = vpack.c.b16 %v1700, %v1696
  %v1733 = vpack.c.b16 %v1701, %v1697
  %v1734 = vpack.c.b16 %v1702, %v1698
  %1767 = vmatpush.bf16.msra.mxu0 %v1731
  %1768 = vmatpush.bf16.msra.mxu0 %v1727
  %1769 = vmatpush.bf16.msra.mxu0 %v1723
  %1770 = vmatpush.bf16.msra.mxu0 %v1719
  %1771 = vmatpush.bf16.msra.mxu0 %v1715
  %1772 = vmatpush.bf16.msra.mxu0 %v1711
  %1773 = vmatpush.bf16.msra.mxu0 %v1707
  %1774 = vmatpush.bf16.msra.mxu0 %v1703
  %1775 = vmatmul.bf16.gmra.mxu0 %v1574
  %v1776 = vpop.f32.mrf.mxu0
  %v1777 = vadd.f32 0.0, %v1776
  %v1778 = vpop.f32.mrf.mxu0
  %1779 = vdwg.mxu0
  %1780 = vmatpush.bf16.msra.mxu0 %v1732
  %1781 = vmatpush.bf16.msra.mxu0 %v1728
  %1782 = vmatpush.bf16.msra.mxu0 %v1724
  %1783 = vmatpush.bf16.msra.mxu0 %v1720
  %1784 = vmatpush.bf16.msra.mxu0 %v1716
  %1785 = vmatpush.bf16.msra.mxu0 %v1712
  %1786 = vmatpush.bf16.msra.mxu0 %v1708
  %1787 = vmatpush.bf16.msra.mxu0 %v1704
  %1788 = vmatmul.bf16.gmra.mxu0 %v1574
  %v1789 = vpop.f32.mrf.mxu0
  %v1790 = vadd.f32 0.0, %v1789
  %v1791 = vpop.f32.mrf.mxu0
  %1792 = vdwg.mxu0
  %1793 = vmatpush.bf16.msra.mxu0 %v1733
  %1794 = vmatpush.bf16.msra.mxu0 %v1729
  %1795 = vmatpush.bf16.msra.mxu0 %v1725
  %1796 = vmatpush.bf16.msra.mxu0 %v1721
  %1797 = vmatpush.bf16.msra.mxu0 %v1717
  %1798 = vmatpush.bf16.msra.mxu0 %v1713
  %1799 = vmatpush.bf16.msra.mxu0 %v1709
  %1800 = vmatpush.bf16.msra.mxu0 %v1705
  %1801 = vmatmul.bf16.gmra.mxu0 %v1574
  %v1802 = vpop.f32.mrf.mxu0
  %v1803 = vadd.f32 0.0, %v1802
  %v1804 = vpop.f32.mrf.mxu0
  %1805 = vdwg.mxu0
  %1806 = vmatpush.bf16.msra.mxu0 %v1734
  %1807 = vmatpush.bf16.msra.mxu0 %v1730
  %1808 = vmatpush.bf16.msra.mxu0 %v1726
  %1809 = vmatpush.bf16.msra.mxu0 %v1722
  %1810 = vmatpush.bf16.msra.mxu0 %v1718
  %1811 = vmatpush.bf16.msra.mxu0 %v1714
  %1812 = vmatpush.bf16.msra.mxu0 %v1710
  %1813 = vmatpush.bf16.msra.mxu0 %v1706
  %1814 = vmatmul.bf16.gmra.mxu0 %v1574
  %v1815 = vpop.f32.mrf.mxu0
  %v1816 = vadd.f32 0.0, %v1815
  %v1817 = vpop.f32.mrf.mxu0
  %1818 = vdwg.mxu0
  %v1819 = vadd.f32 %v1570, %v1777
  %v1820 = vadd.f32 %v1571, %v1790
  %v1821 = vadd.f32 %v1572, %v1803
  %v1822 = vadd.f32 %v1573, %v1816
  %v1823 = vxor.u32 %v1819, 2147483648
  %v1824 = vmul.f32 %v1823, 1.442695
  %v1825 = vpow.pop %v1824
  %v1826 = vadd.f32 %v1825, 1.0
  %v1827 = vrcp.pop %v1826
  %v1828 = vmul.f32 %v1826, %v1827
  %v1829 = vsub.f32 1.0, %v1828
  %v1830 = vmul.f32 %v1827, %v1829
  %v1831 = vadd.f32 %v1827, %v1830
  %vm1832 = vweird.f32 %v1826
  %vm1833 = vweird.f32 %v1827
  %vm1834 = vmor %vm1832, %vm1833
  %v1835 = vsel %vm1834, %v1827, %v1831
  %v1836 = vand.u32 2147483647, %v1826
  %vm1837 = vcmp.eq.f32.partialorder %v1836, 8.507059e+37
  %v1838 = vand.u32 %v1826, 2147483648
  %v1839 = vor.u32 1.1754944e-38, %v1838
  %v1840 = vsel %vm1837, %v1839, %v1835
  %v1841 = vmul.f32 1.0, %v1840
  %v1842 = vxor.u32 %v1820, 2147483648
  %v1843 = vmul.f32 %v1842, 1.442695
  %v1844 = vpow.pop %v1843
  %v1845 = vadd.f32 %v1844, 1.0
  %v1846 = vrcp.pop %v1845
  %v1847 = vmul.f32 %v1845, %v1846
  %v1848 = vsub.f32 1.0, %v1847
  %v1849 = vmul.f32 %v1846, %v1848
  %v1850 = vadd.f32 %v1846, %v1849
  %vm1851 = vweird.f32 %v1845
  %vm1852 = vweird.f32 %v1846
  %vm1853 = vmor %vm1851, %vm1852
  %v1854 = vsel %vm1853, %v1846, %v1850
  %v1855 = vand.u32 2147483647, %v1845
  %vm1856 = vcmp.eq.f32.partialorder %v1855, 8.507059e+37
  %v1857 = vand.u32 %v1845, 2147483648
  %v1858 = vor.u32 1.1754944e-38, %v1857
  %v1859 = vsel %vm1856, %v1858, %v1854
  %v1860 = vmul.f32 1.0, %v1859
  %v1861 = vtanh.pop %v1821
  %v1862 = vxor.u32 %v1822, 2147483648
  %v1863 = vmul.f32 %v1862, 1.442695
  %v1864 = vpow.pop %v1863
  %v1865 = vadd.f32 %v1864, 1.0
  %v1866 = vrcp.pop %v1865
  %v1867 = vmul.f32 %v1865, %v1866
  %v1868 = vsub.f32 1.0, %v1867
  %v1869 = vmul.f32 %v1866, %v1868
  %v1870 = vadd.f32 %v1866, %v1869
  %vm1871 = vweird.f32 %v1865
  %vm1872 = vweird.f32 %v1866
  %vm1873 = vmor %vm1871, %vm1872
  %v1874 = vsel %vm1873, %v1866, %v1870
  %v1875 = vand.u32 2147483647, %v1865
  %vm1876 = vcmp.eq.f32.partialorder %v1875, 8.507059e+37
  %v1877 = vand.u32 %v1865, 2147483648
  %v1878 = vor.u32 1.1754944e-38, %v1877
  %v1879 = vsel %vm1876, %v1878, %v1874
  %v1880 = vmul.f32 1.0, %v1879
  %v1881 = vmul.f32 %v1860, %v1562
  %v1882 = vmul.f32 %v1841, %v1861
  %v1883 = vadd.f32 %v1881, %v1882
  %v1884 = vtanh.pop %v1883
  %v1885 = vmul.f32 %v1880, %v1884
  %s1886 = scalar_lea.vmem [#allocation3], 32
  %1887 = vst [vmem:[%s1886] sm:$0xff] %v1885
  %s1888 = smul.u32 5, 4
  %s1889 = smul.addr %s1888, 8
  %s1890 = scalar_lea.vmem [#allocation2], %s1889
  %v1891 = vld [vmem:[%s1890] sm:$0xff]
  %v1892 = vld [vmem:[%s1890 + $0x8] sm:$0xff]
  %v1893 = vld [vmem:[%s1890 + $0x10] sm:$0xff]
  %v1894 = vld [vmem:[%s1890 + $0x18] sm:$0xff]
  %v1895 = vpack.c.bf16 %v1885, %v1885
  %v1896 = vld [vmem:[%s3] sm:$0xff]
  %v1897 = vld [vmem:[%s3 + $0x8] sm:$0xff]
  %v1898 = vld [vmem:[%s3 + $0x10] sm:$0xff]
  %v1899 = vld [vmem:[%s3 + $0x18] sm:$0xff]
  %v1900 = vld [vmem:[%s3 + $0x20] sm:$0xff]
  %v1901 = vld [vmem:[%s3 + $0x28] sm:$0xff]
  %v1902 = vld [vmem:[%s3 + $0x30] sm:$0xff]
  %v1903 = vld [vmem:[%s3 + $0x38] sm:$0xff]
  %v1904 = vld [vmem:[%s3 + $0x40] sm:$0xff]
  %v1905 = vld [vmem:[%s3 + $0x48] sm:$0xff]
  %v1906 = vld [vmem:[%s3 + $0x50] sm:$0xff]
  %v1907 = vld [vmem:[%s3 + $0x58] sm:$0xff]
  %v1908 = vld [vmem:[%s3 + $0x60] sm:$0xff]
  %v1909 = vld [vmem:[%s3 + $0x68] sm:$0xff]
  %v1910 = vld [vmem:[%s3 + $0x70] sm:$0xff]
  %v1911 = vld [vmem:[%s3 + $0x78] sm:$0xff]
  %v1912 = vld [vmem:[%s3 + $0x80] sm:$0xff]
  %v1913 = vld [vmem:[%s3 + $0x88] sm:$0xff]
  %v1914 = vld [vmem:[%s3 + $0x90] sm:$0xff]
  %v1915 = vld [vmem:[%s3 + $0x98] sm:$0xff]
  %v1916 = vld [vmem:[%s3 + $0xa0] sm:$0xff]
  %v1917 = vld [vmem:[%s3 + $0xa8] sm:$0xff]
  %v1918 = vld [vmem:[%s3 + $0xb0] sm:$0xff]
  %v1919 = vld [vmem:[%s3 + $0xb8] sm:$0xff]
  %v1920 = vld [vmem:[%s3 + $0xc0] sm:$0xff]
  %v1921 = vld [vmem:[%s3 + $0xc8] sm:$0xff]
  %v1922 = vld [vmem:[%s3 + $0xd0] sm:$0xff]
  %v1923 = vld [vmem:[%s3 + $0xd8] sm:$0xff]
  %v1924 = vld [vmem:[%s3 + $0xe0] sm:$0xff]
  %v1925 = vld [vmem:[%s3 + $0xe8] sm:$0xff]
  %v1926 = vld [vmem:[%s3 + $0xf0] sm:$0xff]
  %v1927 = vld [vmem:[%s3 + $0xf8] sm:$0xff]
  %v1960 = vunpack.c.l.b16 %v1896
  %v1961 = vunpack.c.h.b16 %v1896
  %v1962 = vunpack.c.l.b16 %v1897
  %v1963 = vunpack.c.h.b16 %v1897
  %v1964 = vunpack.c.l.b16 %v1898
  %v1965 = vunpack.c.h.b16 %v1898
  %v1966 = vunpack.c.l.b16 %v1899
  %v1967 = vunpack.c.h.b16 %v1899
  %v1968 = vunpack.c.l.b16 %v1900
  %v1969 = vunpack.c.h.b16 %v1900
  %v1970 = vunpack.c.l.b16 %v1901
  %v1971 = vunpack.c.h.b16 %v1901
  %v1972 = vunpack.c.l.b16 %v1902
  %v1973 = vunpack.c.h.b16 %v1902
  %v1974 = vunpack.c.l.b16 %v1903
  %v1975 = vunpack.c.h.b16 %v1903
  %v1976 = vunpack.c.l.b16 %v1904
  %v1977 = vunpack.c.h.b16 %v1904
  %v1978 = vunpack.c.l.b16 %v1905
  %v1979 = vunpack.c.h.b16 %v1905
  %v1980 = vunpack.c.l.b16 %v1906
  %v1981 = vunpack.c.h.b16 %v1906
  %v1982 = vunpack.c.l.b16 %v1907
  %v1983 = vunpack.c.h.b16 %v1907
  %v1984 = vunpack.c.l.b16 %v1908
  %v1985 = vunpack.c.h.b16 %v1908
  %v1986 = vunpack.c.l.b16 %v1909
  %v1987 = vunpack.c.h.b16 %v1909
  %v1988 = vunpack.c.l.b16 %v1910
  %v1989 = vunpack.c.h.b16 %v1910
  %v1990 = vunpack.c.l.b16 %v1911
  %v1991 = vunpack.c.h.b16 %v1911
  %v1992 = vunpack.c.l.b16 %v1912
  %v1993 = vunpack.c.h.b16 %v1912
  %v1994 = vunpack.c.l.b16 %v1913
  %v1995 = vunpack.c.h.b16 %v1913
  %v1996 = vunpack.c.l.b16 %v1914
  %v1997 = vunpack.c.h.b16 %v1914
  %v1998 = vunpack.c.l.b16 %v1915
  %v1999 = vunpack.c.h.b16 %v1915
  %v2000 = vunpack.c.l.b16 %v1916
  %v2001 = vunpack.c.h.b16 %v1916
  %v2002 = vunpack.c.l.b16 %v1917
  %v2003 = vunpack.c.h.b16 %v1917
  %v2004 = vunpack.c.l.b16 %v1918
  %v2005 = vunpack.c.h.b16 %v1918
  %v2006 = vunpack.c.l.b16 %v1919
  %v2007 = vunpack.c.h.b16 %v1919
  %v2008 = vunpack.c.l.b16 %v1920
  %v2009 = vunpack.c.h.b16 %v1920
  %v2010 = vunpack.c.l.b16 %v1921
  %v2011 = vunpack.c.h.b16 %v1921
  %v2012 = vunpack.c.l.b16 %v1922
  %v2013 = vunpack.c.h.b16 %v1922
  %v2014 = vunpack.c.l.b16 %v1923
  %v2015 = vunpack.c.h.b16 %v1923
  %v2016 = vunpack.c.l.b16 %v1924
  %v2017 = vunpack.c.h.b16 %v1924
  %v2018 = vunpack.c.l.b16 %v1925
  %v2019 = vunpack.c.h.b16 %v1925
  %v2020 = vunpack.c.l.b16 %v1926
  %v2021 = vunpack.c.h.b16 %v1926
  %v2022 = vunpack.c.l.b16 %v1927
  %v2023 = vunpack.c.h.b16 %v1927
  %v2024 = vpack.c.b16 %v1964, %v1960
  %v2025 = vpack.c.b16 %v1965, %v1961
  %v2026 = vpack.c.b16 %v1966, %v1962
  %v2027 = vpack.c.b16 %v1967, %v1963
  %v2028 = vpack.c.b16 %v1972, %v1968
  %v2029 = vpack.c.b16 %v1973, %v1969
  %v2030 = vpack.c.b16 %v1974, %v1970
  %v2031 = vpack.c.b16 %v1975, %v1971
  %v2032 = vpack.c.b16 %v1980, %v1976
  %v2033 = vpack.c.b16 %v1981, %v1977
  %v2034 = vpack.c.b16 %v1982, %v1978
  %v2035 = vpack.c.b16 %v1983, %v1979
  %v2036 = vpack.c.b16 %v1988, %v1984
  %v2037 = vpack.c.b16 %v1989, %v1985
  %v2038 = vpack.c.b16 %v1990, %v1986
  %v2039 = vpack.c.b16 %v1991, %v1987
  %v2040 = vpack.c.b16 %v1996, %v1992
  %v2041 = vpack.c.b16 %v1997, %v1993
  %v2042 = vpack.c.b16 %v1998, %v1994
  %v2043 = vpack.c.b16 %v1999, %v1995
  %v2044 = vpack.c.b16 %v2004, %v2000
  %v2045 = vpack.c.b16 %v2005, %v2001
  %v2046 = vpack.c.b16 %v2006, %v2002
  %v2047 = vpack.c.b16 %v2007, %v2003
  %v2048 = vpack.c.b16 %v2012, %v2008
  %v2049 = vpack.c.b16 %v2013, %v2009
  %v2050 = vpack.c.b16 %v2014, %v2010
  %v2051 = vpack.c.b16 %v2015, %v2011
  %v2052 = vpack.c.b16 %v2020, %v2016
  %v2053 = vpack.c.b16 %v2021, %v2017
  %v2054 = vpack.c.b16 %v2022, %v2018
  %v2055 = vpack.c.b16 %v2023, %v2019
  %2088 = vmatpush.bf16.msra.mxu0 %v2052
  %2089 = vmatpush.bf16.msra.mxu0 %v2048
  %2090 = vmatpush.bf16.msra.mxu0 %v2044
  %2091 = vmatpush.bf16.msra.mxu0 %v2040
  %2092 = vmatpush.bf16.msra.mxu0 %v2036
  %2093 = vmatpush.bf16.msra.mxu0 %v2032
  %2094 = vmatpush.bf16.msra.mxu0 %v2028
  %2095 = vmatpush.bf16.msra.mxu0 %v2024
  %2096 = vmatmul.bf16.gmra.mxu0 %v1895
  %v2097 = vpop.f32.mrf.mxu0
  %v2098 = vadd.f32 0.0, %v2097
  %v2099 = vpop.f32.mrf.mxu0
  %2100 = vdwg.mxu0
  %2101 = vmatpush.bf16.msra.mxu0 %v2053
  %2102 = vmatpush.bf16.msra.mxu0 %v2049
  %2103 = vmatpush.bf16.msra.mxu0 %v2045
  %2104 = vmatpush.bf16.msra.mxu0 %v2041
  %2105 = vmatpush.bf16.msra.mxu0 %v2037
  %2106 = vmatpush.bf16.msra.mxu0 %v2033
  %2107 = vmatpush.bf16.msra.mxu0 %v2029
  %2108 = vmatpush.bf16.msra.mxu0 %v2025
  %2109 = vmatmul.bf16.gmra.mxu0 %v1895
  %v2110 = vpop.f32.mrf.mxu0
  %v2111 = vadd.f32 0.0, %v2110
  %v2112 = vpop.f32.mrf.mxu0
  %2113 = vdwg.mxu0
  %2114 = vmatpush.bf16.msra.mxu0 %v2054
  %2115 = vmatpush.bf16.msra.mxu0 %v2050
  %2116 = vmatpush.bf16.msra.mxu0 %v2046
  %2117 = vmatpush.bf16.msra.mxu0 %v2042
  %2118 = vmatpush.bf16.msra.mxu0 %v2038
  %2119 = vmatpush.bf16.msra.mxu0 %v2034
  %2120 = vmatpush.bf16.msra.mxu0 %v2030
  %2121 = vmatpush.bf16.msra.mxu0 %v2026
  %2122 = vmatmul.bf16.gmra.mxu0 %v1895
  %v2123 = vpop.f32.mrf.mxu0
  %v2124 = vadd.f32 0.0, %v2123
  %v2125 = vpop.f32.mrf.mxu0
  %2126 = vdwg.mxu0
  %2127 = vmatpush.bf16.msra.mxu0 %v2055
  %2128 = vmatpush.bf16.msra.mxu0 %v2051
  %2129 = vmatpush.bf16.msra.mxu0 %v2047
  %2130 = vmatpush.bf16.msra.mxu0 %v2043
  %2131 = vmatpush.bf16.msra.mxu0 %v2039
  %2132 = vmatpush.bf16.msra.mxu0 %v2035
  %2133 = vmatpush.bf16.msra.mxu0 %v2031
  %2134 = vmatpush.bf16.msra.mxu0 %v2027
  %2135 = vmatmul.bf16.gmra.mxu0 %v1895
  %v2136 = vpop.f32.mrf.mxu0
  %v2137 = vadd.f32 0.0, %v2136
  %v2138 = vpop.f32.mrf.mxu0
  %2139 = vdwg.mxu0
  %v2140 = vadd.f32 %v1891, %v2098
  %v2141 = vadd.f32 %v1892, %v2111
  %v2142 = vadd.f32 %v1893, %v2124
  %v2143 = vadd.f32 %v1894, %v2137
  %v2144 = vxor.u32 %v2140, 2147483648
  %v2145 = vmul.f32 %v2144, 1.442695
  %v2146 = vpow.pop %v2145
  %v2147 = vadd.f32 %v2146, 1.0
  %v2148 = vrcp.pop %v2147
  %v2149 = vmul.f32 %v2147, %v2148
  %v2150 = vsub.f32 1.0, %v2149
  %v2151 = vmul.f32 %v2148, %v2150
  %v2152 = vadd.f32 %v2148, %v2151
  %vm2153 = vweird.f32 %v2147
  %vm2154 = vweird.f32 %v2148
  %vm2155 = vmor %vm2153, %vm2154
  %v2156 = vsel %vm2155, %v2148, %v2152
  %v2157 = vand.u32 2147483647, %v2147
  %vm2158 = vcmp.eq.f32.partialorder %v2157, 8.507059e+37
  %v2159 = vand.u32 %v2147, 2147483648
  %v2160 = vor.u32 1.1754944e-38, %v2159
  %v2161 = vsel %vm2158, %v2160, %v2156
  %v2162 = vmul.f32 1.0, %v2161
  %v2163 = vxor.u32 %v2141, 2147483648
  %v2164 = vmul.f32 %v2163, 1.442695
  %v2165 = vpow.pop %v2164
  %v2166 = vadd.f32 %v2165, 1.0
  %v2167 = vrcp.pop %v2166
  %v2168 = vmul.f32 %v2166, %v2167
  %v2169 = vsub.f32 1.0, %v2168
  %v2170 = vmul.f32 %v2167, %v2169
  %v2171 = vadd.f32 %v2167, %v2170
  %vm2172 = vweird.f32 %v2166
  %vm2173 = vweird.f32 %v2167
  %vm2174 = vmor %vm2172, %vm2173
  %v2175 = vsel %vm2174, %v2167, %v2171
  %v2176 = vand.u32 2147483647, %v2166
  %vm2177 = vcmp.eq.f32.partialorder %v2176, 8.507059e+37
  %v2178 = vand.u32 %v2166, 2147483648
  %v2179 = vor.u32 1.1754944e-38, %v2178
  %v2180 = vsel %vm2177, %v2179, %v2175
  %v2181 = vmul.f32 1.0, %v2180
  %v2182 = vtanh.pop %v2142
  %v2183 = vxor.u32 %v2143, 2147483648
  %v2184 = vmul.f32 %v2183, 1.442695
  %v2185 = vpow.pop %v2184
  %v2186 = vadd.f32 %v2185, 1.0
  %v2187 = vrcp.pop %v2186
  %v2188 = vmul.f32 %v2186, %v2187
  %v2189 = vsub.f32 1.0, %v2188
  %v2190 = vmul.f32 %v2187, %v2189
  %v2191 = vadd.f32 %v2187, %v2190
  %vm2192 = vweird.f32 %v2186
  %vm2193 = vweird.f32 %v2187
  %vm2194 = vmor %vm2192, %vm2193
  %v2195 = vsel %vm2194, %v2187, %v2191
  %v2196 = vand.u32 2147483647, %v2186
  %vm2197 = vcmp.eq.f32.partialorder %v2196, 8.507059e+37
  %v2198 = vand.u32 %v2186, 2147483648
  %v2199 = vor.u32 1.1754944e-38, %v2198
  %v2200 = vsel %vm2197, %v2199, %v2195
  %v2201 = vmul.f32 1.0, %v2200
  %v2202 = vmul.f32 %v2181, %v1883
  %v2203 = vmul.f32 %v2162, %v2182
  %v2204 = vadd.f32 %v2202, %v2203
  %v2205 = vtanh.pop %v2204
  %v2206 = vmul.f32 %v2201, %v2205
  %s2207 = scalar_lea.vmem [#allocation3], 40
  %2208 = vst [vmem:[%s2207] sm:$0xff] %v2206
  %s2209 = smul.u32 6, 4
  %s2210 = smul.addr %s2209, 8
  %s2211 = scalar_lea.vmem [#allocation2], %s2210
  %v2212 = vld [vmem:[%s2211] sm:$0xff]
  %v2213 = vld [vmem:[%s2211 + $0x8] sm:$0xff]
  %v2214 = vld [vmem:[%s2211 + $0x10] sm:$0xff]
  %v2215 = vld [vmem:[%s2211 + $0x18] sm:$0xff]
  %v2216 = vpack.c.bf16 %v2206, %v2206
  %v2217 = vld [vmem:[%s3] sm:$0xff]
  %v2218 = vld [vmem:[%s3 + $0x8] sm:$0xff]
  %v2219 = vld [vmem:[%s3 + $0x10] sm:$0xff]
  %v2220 = vld [vmem:[%s3 + $0x18] sm:$0xff]
  %v2221 = vld [vmem:[%s3 + $0x20] sm:$0xff]
  %v2222 = vld [vmem:[%s3 + $0x28] sm:$0xff]
  %v2223 = vld [vmem:[%s3 + $0x30] sm:$0xff]
  %v2224 = vld [vmem:[%s3 + $0x38] sm:$0xff]
  %v2225 = vld [vmem:[%s3 + $0x40] sm:$0xff]
  %v2226 = vld [vmem:[%s3 + $0x48] sm:$0xff]
  %v2227 = vld [vmem:[%s3 + $0x50] sm:$0xff]
  %v2228 = vld [vmem:[%s3 + $0x58] sm:$0xff]
  %v2229 = vld [vmem:[%s3 + $0x60] sm:$0xff]
  %v2230 = vld [vmem:[%s3 + $0x68] sm:$0xff]
  %v2231 = vld [vmem:[%s3 + $0x70] sm:$0xff]
  %v2232 = vld [vmem:[%s3 + $0x78] sm:$0xff]
  %v2233 = vld [vmem:[%s3 + $0x80] sm:$0xff]
  %v2234 = vld [vmem:[%s3 + $0x88] sm:$0xff]
  %v2235 = vld [vmem:[%s3 + $0x90] sm:$0xff]
  %v2236 = vld [vmem:[%s3 + $0x98] sm:$0xff]
  %v2237 = vld [vmem:[%s3 + $0xa0] sm:$0xff]
  %v2238 = vld [vmem:[%s3 + $0xa8] sm:$0xff]
  %v2239 = vld [vmem:[%s3 + $0xb0] sm:$0xff]
  %v2240 = vld [vmem:[%s3 + $0xb8] sm:$0xff]
  %v2241 = vld [vmem:[%s3 + $0xc0] sm:$0xff]
  %v2242 = vld [vmem:[%s3 + $0xc8] sm:$0xff]
  %v2243 = vld [vmem:[%s3 + $0xd0] sm:$0xff]
  %v2244 = vld [vmem:[%s3 + $0xd8] sm:$0xff]
  %v2245 = vld [vmem:[%s3 + $0xe0] sm:$0xff]
  %v2246 = vld [vmem:[%s3 + $0xe8] sm:$0xff]
  %v2247 = vld [vmem:[%s3 + $0xf0] sm:$0xff]
  %v2248 = vld [vmem:[%s3 + $0xf8] sm:$0xff]
  %v2281 = vunpack.c.l.b16 %v2217
  %v2282 = vunpack.c.h.b16 %v2217
  %v2283 = vunpack.c.l.b16 %v2218
  %v2284 = vunpack.c.h.b16 %v2218
  %v2285 = vunpack.c.l.b16 %v2219
  %v2286 = vunpack.c.h.b16 %v2219
  %v2287 = vunpack.c.l.b16 %v2220
  %v2288 = vunpack.c.h.b16 %v2220
  %v2289 = vunpack.c.l.b16 %v2221
  %v2290 = vunpack.c.h.b16 %v2221
  %v2291 = vunpack.c.l.b16 %v2222
  %v2292 = vunpack.c.h.b16 %v2222
  %v2293 = vunpack.c.l.b16 %v2223
  %v2294 = vunpack.c.h.b16 %v2223
  %v2295 = vunpack.c.l.b16 %v2224
  %v2296 = vunpack.c.h.b16 %v2224
  %v2297 = vunpack.c.l.b16 %v2225
  %v2298 = vunpack.c.h.b16 %v2225
  %v2299 = vunpack.c.l.b16 %v2226
  %v2300 = vunpack.c.h.b16 %v2226
  %v2301 = vunpack.c.l.b16 %v2227
  %v2302 = vunpack.c.h.b16 %v2227
  %v2303 = vunpack.c.l.b16 %v2228
  %v2304 = vunpack.c.h.b16 %v2228
  %v2305 = vunpack.c.l.b16 %v2229
  %v2306 = vunpack.c.h.b16 %v2229
  %v2307 = vunpack.c.l.b16 %v2230
  %v2308 = vunpack.c.h.b16 %v2230
  %v2309 = vunpack.c.l.b16 %v2231
  %v2310 = vunpack.c.h.b16 %v2231
  %v2311 = vunpack.c.l.b16 %v2232
  %v2312 = vunpack.c.h.b16 %v2232
  %v2313 = vunpack.c.l.b16 %v2233
  %v2314 = vunpack.c.h.b16 %v2233
  %v2315 = vunpack.c.l.b16 %v2234
  %v2316 = vunpack.c.h.b16 %v2234
  %v2317 = vunpack.c.l.b16 %v2235
  %v2318 = vunpack.c.h.b16 %v2235
  %v2319 = vunpack.c.l.b16 %v2236
  %v2320 = vunpack.c.h.b16 %v2236
  %v2321 = vunpack.c.l.b16 %v2237
  %v2322 = vunpack.c.h.b16 %v2237
  %v2323 = vunpack.c.l.b16 %v2238
  %v2324 = vunpack.c.h.b16 %v2238
  %v2325 = vunpack.c.l.b16 %v2239
  %v2326 = vunpack.c.h.b16 %v2239
  %v2327 = vunpack.c.l.b16 %v2240
  %v2328 = vunpack.c.h.b16 %v2240
  %v2329 = vunpack.c.l.b16 %v2241
  %v2330 = vunpack.c.h.b16 %v2241
  %v2331 = vunpack.c.l.b16 %v2242
  %v2332 = vunpack.c.h.b16 %v2242
  %v2333 = vunpack.c.l.b16 %v2243
  %v2334 = vunpack.c.h.b16 %v2243
  %v2335 = vunpack.c.l.b16 %v2244
  %v2336 = vunpack.c.h.b16 %v2244
  %v2337 = vunpack.c.l.b16 %v2245
  %v2338 = vunpack.c.h.b16 %v2245
  %v2339 = vunpack.c.l.b16 %v2246
  %v2340 = vunpack.c.h.b16 %v2246
  %v2341 = vunpack.c.l.b16 %v2247
  %v2342 = vunpack.c.h.b16 %v2247
  %v2343 = vunpack.c.l.b16 %v2248
  %v2344 = vunpack.c.h.b16 %v2248
  %v2345 = vpack.c.b16 %v2285, %v2281
  %v2346 = vpack.c.b16 %v2286, %v2282
  %v2347 = vpack.c.b16 %v2287, %v2283
  %v2348 = vpack.c.b16 %v2288, %v2284
  %v2349 = vpack.c.b16 %v2293, %v2289
  %v2350 = vpack.c.b16 %v2294, %v2290
  %v2351 = vpack.c.b16 %v2295, %v2291
  %v2352 = vpack.c.b16 %v2296, %v2292
  %v2353 = vpack.c.b16 %v2301, %v2297
  %v2354 = vpack.c.b16 %v2302, %v2298
  %v2355 = vpack.c.b16 %v2303, %v2299
  %v2356 = vpack.c.b16 %v2304, %v2300
  %v2357 = vpack.c.b16 %v2309, %v2305
  %v2358 = vpack.c.b16 %v2310, %v2306
  %v2359 = vpack.c.b16 %v2311, %v2307
  %v2360 = vpack.c.b16 %v2312, %v2308
  %v2361 = vpack.c.b16 %v2317, %v2313
  %v2362 = vpack.c.b16 %v2318, %v2314
  %v2363 = vpack.c.b16 %v2319, %v2315
  %v2364 = vpack.c.b16 %v2320, %v2316
  %v2365 = vpack.c.b16 %v2325, %v2321
  %v2366 = vpack.c.b16 %v2326, %v2322
  %v2367 = vpack.c.b16 %v2327, %v2323
  %v2368 = vpack.c.b16 %v2328, %v2324
  %v2369 = vpack.c.b16 %v2333, %v2329
  %v2370 = vpack.c.b16 %v2334, %v2330
  %v2371 = vpack.c.b16 %v2335, %v2331
  %v2372 = vpack.c.b16 %v2336, %v2332
  %v2373 = vpack.c.b16 %v2341, %v2337
  %v2374 = vpack.c.b16 %v2342, %v2338
  %v2375 = vpack.c.b16 %v2343, %v2339
  %v2376 = vpack.c.b16 %v2344, %v2340
  %2409 = vmatpush.bf16.msra.mxu0 %v2373
  %2410 = vmatpush.bf16.msra.mxu0 %v2369
  %2411 = vmatpush.bf16.msra.mxu0 %v2365
  %2412 = vmatpush.bf16.msra.mxu0 %v2361
  %2413 = vmatpush.bf16.msra.mxu0 %v2357
  %2414 = vmatpush.bf16.msra.mxu0 %v2353
  %2415 = vmatpush.bf16.msra.mxu0 %v2349
  %2416 = vmatpush.bf16.msra.mxu0 %v2345
  %2417 = vmatmul.bf16.gmra.mxu0 %v2216
  %v2418 = vpop.f32.mrf.mxu0
  %v2419 = vadd.f32 0.0, %v2418
  %v2420 = vpop.f32.mrf.mxu0
  %2421 = vdwg.mxu0
  %2422 = vmatpush.bf16.msra.mxu0 %v2374
  %2423 = vmatpush.bf16.msra.mxu0 %v2370
  %2424 = vmatpush.bf16.msra.mxu0 %v2366
  %2425 = vmatpush.bf16.msra.mxu0 %v2362
  %2426 = vmatpush.bf16.msra.mxu0 %v2358
  %2427 = vmatpush.bf16.msra.mxu0 %v2354
  %2428 = vmatpush.bf16.msra.mxu0 %v2350
  %2429 = vmatpush.bf16.msra.mxu0 %v2346
  %2430 = vmatmul.bf16.gmra.mxu0 %v2216
  %v2431 = vpop.f32.mrf.mxu0
  %v2432 = vadd.f32 0.0, %v2431
  %v2433 = vpop.f32.mrf.mxu0
  %2434 = vdwg.mxu0
  %2435 = vmatpush.bf16.msra.mxu0 %v2375
  %2436 = vmatpush.bf16.msra.mxu0 %v2371
  %2437 = vmatpush.bf16.msra.mxu0 %v2367
  %2438 = vmatpush.bf16.msra.mxu0 %v2363
  %2439 = vmatpush.bf16.msra.mxu0 %v2359
  %2440 = vmatpush.bf16.msra.mxu0 %v2355
  %2441 = vmatpush.bf16.msra.mxu0 %v2351
  %2442 = vmatpush.bf16.msra.mxu0 %v2347
  %2443 = vmatmul.bf16.gmra.mxu0 %v2216
  %v2444 = vpop.f32.mrf.mxu0
  %v2445 = vadd.f32 0.0, %v2444
  %v2446 = vpop.f32.mrf.mxu0
  %2447 = vdwg.mxu0
  %2448 = vmatpush.bf16.msra.mxu0 %v2376
  %2449 = vmatpush.bf16.msra.mxu0 %v2372
  %2450 = vmatpush.bf16.msra.mxu0 %v2368
  %2451 = vmatpush.bf16.msra.mxu0 %v2364
  %2452 = vmatpush.bf16.msra.mxu0 %v2360
  %2453 = vmatpush.bf16.msra.mxu0 %v2356
  %2454 = vmatpush.bf16.msra.mxu0 %v2352
  %2455 = vmatpush.bf16.msra.mxu0 %v2348
  %2456 = vmatmul.bf16.gmra.mxu0 %v2216
  %v2457 = vpop.f32.mrf.mxu0
  %v2458 = vadd.f32 0.0, %v2457
  %v2459 = vpop.f32.mrf.mxu0
  %2460 = vdwg.mxu0
  %v2461 = vadd.f32 %v2212, %v2419
  %v2462 = vadd.f32 %v2213, %v2432
  %v2463 = vadd.f32 %v2214, %v2445
  %v2464 = vadd.f32 %v2215, %v2458
  %v2465 = vxor.u32 %v2461, 2147483648
  %v2466 = vmul.f32 %v2465, 1.442695
  %v2467 = vpow.pop %v2466
  %v2468 = vadd.f32 %v2467, 1.0
  %v2469 = vrcp.pop %v2468
  %v2470 = vmul.f32 %v2468, %v2469
  %v2471 = vsub.f32 1.0, %v2470
  %v2472 = vmul.f32 %v2469, %v2471
  %v2473 = vadd.f32 %v2469, %v2472
  %vm2474 = vweird.f32 %v2468
  %vm2475 = vweird.f32 %v2469
  %vm2476 = vmor %vm2474, %vm2475
  %v2477 = vsel %vm2476, %v2469, %v2473
  %v2478 = vand.u32 2147483647, %v2468
  %vm2479 = vcmp.eq.f32.partialorder %v2478, 8.507059e+37
  %v2480 = vand.u32 %v2468, 2147483648
  %v2481 = vor.u32 1.1754944e-38, %v2480
  %v2482 = vsel %vm2479, %v2481, %v2477
  %v2483 = vmul.f32 1.0, %v2482
  %v2484 = vxor.u32 %v2462, 2147483648
  %v2485 = vmul.f32 %v2484, 1.442695
  %v2486 = vpow.pop %v2485
  %v2487 = vadd.f32 %v2486, 1.0
  %v2488 = vrcp.pop %v2487
  %v2489 = vmul.f32 %v2487, %v2488
  %v2490 = vsub.f32 1.0, %v2489
  %v2491 = vmul.f32 %v2488, %v2490
  %v2492 = vadd.f32 %v2488, %v2491
  %vm2493 = vweird.f32 %v2487
  %vm2494 = vweird.f32 %v2488
  %vm2495 = vmor %vm2493, %vm2494
  %v2496 = vsel %vm2495, %v2488, %v2492
  %v2497 = vand.u32 2147483647, %v2487
  %vm2498 = vcmp.eq.f32.partialorder %v2497, 8.507059e+37
  %v2499 = vand.u32 %v2487, 2147483648
  %v2500 = vor.u32 1.1754944e-38, %v2499
  %v2501 = vsel %vm2498, %v2500, %v2496
  %v2502 = vmul.f32 1.0, %v2501
  %v2503 = vtanh.pop %v2463
  %v2504 = vxor.u32 %v2464, 2147483648
  %v2505 = vmul.f32 %v2504, 1.442695
  %v2506 = vpow.pop %v2505
  %v2507 = vadd.f32 %v2506, 1.0
  %v2508 = vrcp.pop %v2507
  %v2509 = vmul.f32 %v2507, %v2508
  %v2510 = vsub.f32 1.0, %v2509
  %v2511 = vmul.f32 %v2508, %v2510
  %v2512 = vadd.f32 %v2508, %v2511
  %vm2513 = vweird.f32 %v2507
  %vm2514 = vweird.f32 %v2508
  %vm2515 = vmor %vm2513, %vm2514
  %v2516 = vsel %vm2515, %v2508, %v2512
  %v2517 = vand.u32 2147483647, %v2507
  %vm2518 = vcmp.eq.f32.partialorder %v2517, 8.507059e+37
  %v2519 = vand.u32 %v2507, 2147483648
  %v2520 = vor.u32 1.1754944e-38, %v2519
  %v2521 = vsel %vm2518, %v2520, %v2516
  %v2522 = vmul.f32 1.0, %v2521
  %v2523 = vmul.f32 %v2502, %v2204
  %v2524 = vmul.f32 %v2483, %v2503
  %v2525 = vadd.f32 %v2523, %v2524
  %v2526 = vtanh.pop %v2525
  %v2527 = vmul.f32 %v2522, %v2526
  %s2528 = scalar_lea.vmem [#allocation3], 48
  %2529 = vst [vmem:[%s2528] sm:$0xff] %v2527
  %s2530 = smul.u32 7, 4
  %s2531 = smul.addr %s2530, 8
  %s2532 = scalar_lea.vmem [#allocation2], %s2531
  %v2533 = vld [vmem:[%s2532] sm:$0xff]
  %v2534 = vld [vmem:[%s2532 + $0x8] sm:$0xff]
  %v2535 = vld [vmem:[%s2532 + $0x10] sm:$0xff]
  %v2536 = vld [vmem:[%s2532 + $0x18] sm:$0xff]
  %v2537 = vpack.c.bf16 %v2527, %v2527
  %v2538 = vld [vmem:[%s3] sm:$0xff]
  %v2539 = vld [vmem:[%s3 + $0x8] sm:$0xff]
  %v2540 = vld [vmem:[%s3 + $0x10] sm:$0xff]
  %v2541 = vld [vmem:[%s3 + $0x18] sm:$0xff]
  %v2542 = vld [vmem:[%s3 + $0x20] sm:$0xff]
  %v2543 = vld [vmem:[%s3 + $0x28] sm:$0xff]
  %v2544 = vld [vmem:[%s3 + $0x30] sm:$0xff]
  %v2545 = vld [vmem:[%s3 + $0x38] sm:$0xff]
  %v2546 = vld [vmem:[%s3 + $0x40] sm:$0xff]
  %v2547 = vld [vmem:[%s3 + $0x48] sm:$0xff]
  %v2548 = vld [vmem:[%s3 + $0x50] sm:$0xff]
  %v2549 = vld [vmem:[%s3 + $0x58] sm:$0xff]
  %v2550 = vld [vmem:[%s3 + $0x60] sm:$0xff]
  %v2551 = vld [vmem:[%s3 + $0x68] sm:$0xff]
  %v2552 = vld [vmem:[%s3 + $0x70] sm:$0xff]
  %v2553 = vld [vmem:[%s3 + $0x78] sm:$0xff]
  %v2554 = vld [vmem:[%s3 + $0x80] sm:$0xff]
  %v2555 = vld [vmem:[%s3 + $0x88] sm:$0xff]
  %v2556 = vld [vmem:[%s3 + $0x90] sm:$0xff]
  %v2557 = vld [vmem:[%s3 + $0x98] sm:$0xff]
  %v2558 = vld [vmem:[%s3 + $0xa0] sm:$0xff]
  %v2559 = vld [vmem:[%s3 + $0xa8] sm:$0xff]
  %v2560 = vld [vmem:[%s3 + $0xb0] sm:$0xff]
  %v2561 = vld [vmem:[%s3 + $0xb8] sm:$0xff]
  %v2562 = vld [vmem:[%s3 + $0xc0] sm:$0xff]
  %v2563 = vld [vmem:[%s3 + $0xc8] sm:$0xff]
  %v2564 = vld [vmem:[%s3 + $0xd0] sm:$0xff]
  %v2565 = vld [vmem:[%s3 + $0xd8] sm:$0xff]
  %v2566 = vld [vmem:[%s3 + $0xe0] sm:$0xff]
  %v2567 = vld [vmem:[%s3 + $0xe8] sm:$0xff]
  %v2568 = vld [vmem:[%s3 + $0xf0] sm:$0xff]
  %v2569 = vld [vmem:[%s3 + $0xf8] sm:$0xff]
  %v2602 = vunpack.c.l.b16 %v2538
  %v2603 = vunpack.c.h.b16 %v2538
  %v2604 = vunpack.c.l.b16 %v2539
  %v2605 = vunpack.c.h.b16 %v2539
  %v2606 = vunpack.c.l.b16 %v2540
  %v2607 = vunpack.c.h.b16 %v2540
  %v2608 = vunpack.c.l.b16 %v2541
  %v2609 = vunpack.c.h.b16 %v2541
  %v2610 = vunpack.c.l.b16 %v2542
  %v2611 = vunpack.c.h.b16 %v2542
  %v2612 = vunpack.c.l.b16 %v2543
  %v2613 = vunpack.c.h.b16 %v2543
  %v2614 = vunpack.c.l.b16 %v2544
  %v2615 = vunpack.c.h.b16 %v2544
  %v2616 = vunpack.c.l.b16 %v2545
  %v2617 = vunpack.c.h.b16 %v2545
  %v2618 = vunpack.c.l.b16 %v2546
  %v2619 = vunpack.c.h.b16 %v2546
  %v2620 = vunpack.c.l.b16 %v2547
  %v2621 = vunpack.c.h.b16 %v2547
  %v2622 = vunpack.c.l.b16 %v2548
  %v2623 = vunpack.c.h.b16 %v2548
  %v2624 = vunpack.c.l.b16 %v2549
  %v2625 = vunpack.c.h.b16 %v2549
  %v2626 = vunpack.c.l.b16 %v2550
  %v2627 = vunpack.c.h.b16 %v2550
  %v2628 = vunpack.c.l.b16 %v2551
  %v2629 = vunpack.c.h.b16 %v2551
  %v2630 = vunpack.c.l.b16 %v2552
  %v2631 = vunpack.c.h.b16 %v2552
  %v2632 = vunpack.c.l.b16 %v2553
  %v2633 = vunpack.c.h.b16 %v2553
  %v2634 = vunpack.c.l.b16 %v2554
  %v2635 = vunpack.c.h.b16 %v2554
  %v2636 = vunpack.c.l.b16 %v2555
  %v2637 = vunpack.c.h.b16 %v2555
  %v2638 = vunpack.c.l.b16 %v2556
  %v2639 = vunpack.c.h.b16 %v2556
  %v2640 = vunpack.c.l.b16 %v2557
  %v2641 = vunpack.c.h.b16 %v2557
  %v2642 = vunpack.c.l.b16 %v2558
  %v2643 = vunpack.c.h.b16 %v2558
  %v2644 = vunpack.c.l.b16 %v2559
  %v2645 = vunpack.c.h.b16 %v2559
  %v2646 = vunpack.c.l.b16 %v2560
  %v2647 = vunpack.c.h.b16 %v2560
  %v2648 = vunpack.c.l.b16 %v2561
  %v2649 = vunpack.c.h.b16 %v2561
  %v2650 = vunpack.c.l.b16 %v2562
  %v2651 = vunpack.c.h.b16 %v2562
  %v2652 = vunpack.c.l.b16 %v2563
  %v2653 = vunpack.c.h.b16 %v2563
  %v2654 = vunpack.c.l.b16 %v2564
  %v2655 = vunpack.c.h.b16 %v2564
  %v2656 = vunpack.c.l.b16 %v2565
  %v2657 = vunpack.c.h.b16 %v2565
  %v2658 = vunpack.c.l.b16 %v2566
  %v2659 = vunpack.c.h.b16 %v2566
  %v2660 = vunpack.c.l.b16 %v2567
  %v2661 = vunpack.c.h.b16 %v2567
  %v2662 = vunpack.c.l.b16 %v2568
  %v2663 = vunpack.c.h.b16 %v2568
  %v2664 = vunpack.c.l.b16 %v2569
  %v2665 = vunpack.c.h.b16 %v2569
  %v2666 = vpack.c.b16 %v2606, %v2602
  %v2667 = vpack.c.b16 %v2607, %v2603
  %v2668 = vpack.c.b16 %v2608, %v2604
  %v2669 = vpack.c.b16 %v2609, %v2605
  %v2670 = vpack.c.b16 %v2614, %v2610
  %v2671 = vpack.c.b16 %v2615, %v2611
  %v2672 = vpack.c.b16 %v2616, %v2612
  %v2673 = vpack.c.b16 %v2617, %v2613
  %v2674 = vpack.c.b16 %v2622, %v2618
  %v2675 = vpack.c.b16 %v2623, %v2619
  %v2676 = vpack.c.b16 %v2624, %v2620
  %v2677 = vpack.c.b16 %v2625, %v2621
  %v2678 = vpack.c.b16 %v2630, %v2626
  %v2679 = vpack.c.b16 %v2631, %v2627
  %v2680 = vpack.c.b16 %v2632, %v2628
  %v2681 = vpack.c.b16 %v2633, %v2629
  %v2682 = vpack.c.b16 %v2638, %v2634
  %v2683 = vpack.c.b16 %v2639, %v2635
  %v2684 = vpack.c.b16 %v2640, %v2636
  %v2685 = vpack.c.b16 %v2641, %v2637
  %v2686 = vpack.c.b16 %v2646, %v2642
  %v2687 = vpack.c.b16 %v2647, %v2643
  %v2688 = vpack.c.b16 %v2648, %v2644
  %v2689 = vpack.c.b16 %v2649, %v2645
  %v2690 = vpack.c.b16 %v2654, %v2650
  %v2691 = vpack.c.b16 %v2655, %v2651
  %v2692 = vpack.c.b16 %v2656, %v2652
  %v2693 = vpack.c.b16 %v2657, %v2653
  %v2694 = vpack.c.b16 %v2662, %v2658
  %v2695 = vpack.c.b16 %v2663, %v2659
  %v2696 = vpack.c.b16 %v2664, %v2660
  %v2697 = vpack.c.b16 %v2665, %v2661
  %2730 = vmatpush.bf16.msra.mxu0 %v2694
  %2731 = vmatpush.bf16.msra.mxu0 %v2690
  %2732 = vmatpush.bf16.msra.mxu0 %v2686
  %2733 = vmatpush.bf16.msra.mxu0 %v2682
  %2734 = vmatpush.bf16.msra.mxu0 %v2678
  %2735 = vmatpush.bf16.msra.mxu0 %v2674
  %2736 = vmatpush.bf16.msra.mxu0 %v2670
  %2737 = vmatpush.bf16.msra.mxu0 %v2666
  %2738 = vmatmul.bf16.gmra.mxu0 %v2537
  %v2739 = vpop.f32.mrf.mxu0
  %v2740 = vadd.f32 0.0, %v2739
  %v2741 = vpop.f32.mrf.mxu0
  %2742 = vdwg.mxu0
  %2743 = vmatpush.bf16.msra.mxu0 %v2695
  %2744 = vmatpush.bf16.msra.mxu0 %v2691
  %2745 = vmatpush.bf16.msra.mxu0 %v2687
  %2746 = vmatpush.bf16.msra.mxu0 %v2683
  %2747 = vmatpush.bf16.msra.mxu0 %v2679
  %2748 = vmatpush.bf16.msra.mxu0 %v2675
  %2749 = vmatpush.bf16.msra.mxu0 %v2671
  %2750 = vmatpush.bf16.msra.mxu0 %v2667
  %2751 = vmatmul.bf16.gmra.mxu0 %v2537
  %v2752 = vpop.f32.mrf.mxu0
  %v2753 = vadd.f32 0.0, %v2752
  %v2754 = vpop.f32.mrf.mxu0
  %2755 = vdwg.mxu0
  %2756 = vmatpush.bf16.msra.mxu0 %v2696
  %2757 = vmatpush.bf16.msra.mxu0 %v2692
  %2758 = vmatpush.bf16.msra.mxu0 %v2688
  %2759 = vmatpush.bf16.msra.mxu0 %v2684
  %2760 = vmatpush.bf16.msra.mxu0 %v2680
  %2761 = vmatpush.bf16.msra.mxu0 %v2676
  %2762 = vmatpush.bf16.msra.mxu0 %v2672
  %2763 = vmatpush.bf16.msra.mxu0 %v2668
  %2764 = vmatmul.bf16.gmra.mxu0 %v2537
  %v2765 = vpop.f32.mrf.mxu0
  %v2766 = vadd.f32 0.0, %v2765
  %v2767 = vpop.f32.mrf.mxu0
  %2768 = vdwg.mxu0
  %2769 = vmatpush.bf16.msra.mxu0 %v2697
  %2770 = vmatpush.bf16.msra.mxu0 %v2693
  %2771 = vmatpush.bf16.msra.mxu0 %v2689
  %2772 = vmatpush.bf16.msra.mxu0 %v2685
  %2773 = vmatpush.bf16.msra.mxu0 %v2681
  %2774 = vmatpush.bf16.msra.mxu0 %v2677
  %2775 = vmatpush.bf16.msra.mxu0 %v2673
  %2776 = vmatpush.bf16.msra.mxu0 %v2669
  %2777 = vmatmul.bf16.gmra.mxu0 %v2537
  %v2778 = vpop.f32.mrf.mxu0
  %v2779 = vadd.f32 0.0, %v2778
  %v2780 = vpop.f32.mrf.mxu0
  %2781 = vdwg.mxu0
  %v2782 = vadd.f32 %v2533, %v2740
  %v2783 = vadd.f32 %v2534, %v2753
  %v2784 = vadd.f32 %v2535, %v2766
  %v2785 = vadd.f32 %v2536, %v2779
  %v2786 = vxor.u32 %v2782, 2147483648
  %v2787 = vmul.f32 %v2786, 1.442695
  %v2788 = vpow.pop %v2787
  %v2789 = vadd.f32 %v2788, 1.0
  %v2790 = vrcp.pop %v2789
  %v2791 = vmul.f32 %v2789, %v2790
  %v2792 = vsub.f32 1.0, %v2791
  %v2793 = vmul.f32 %v2790, %v2792
  %v2794 = vadd.f32 %v2790, %v2793
  %vm2795 = vweird.f32 %v2789
  %vm2796 = vweird.f32 %v2790
  %vm2797 = vmor %vm2795, %vm2796
  %v2798 = vsel %vm2797, %v2790, %v2794
  %v2799 = vand.u32 2147483647, %v2789
  %vm2800 = vcmp.eq.f32.partialorder %v2799, 8.507059e+37
  %v2801 = vand.u32 %v2789, 2147483648
  %v2802 = vor.u32 1.1754944e-38, %v2801
  %v2803 = vsel %vm2800, %v2802, %v2798
  %v2804 = vmul.f32 1.0, %v2803
  %v2805 = vxor.u32 %v2783, 2147483648
  %v2806 = vmul.f32 %v2805, 1.442695
  %v2807 = vpow.pop %v2806
  %v2808 = vadd.f32 %v2807, 1.0
  %v2809 = vrcp.pop %v2808
  %v2810 = vmul.f32 %v2808, %v2809
  %v2811 = vsub.f32 1.0, %v2810
  %v2812 = vmul.f32 %v2809, %v2811
  %v2813 = vadd.f32 %v2809, %v2812
  %vm2814 = vweird.f32 %v2808
  %vm2815 = vweird.f32 %v2809
  %vm2816 = vmor %vm2814, %vm2815
  %v2817 = vsel %vm2816, %v2809, %v2813
  %v2818 = vand.u32 2147483647, %v2808
  %vm2819 = vcmp.eq.f32.partialorder %v2818, 8.507059e+37
  %v2820 = vand.u32 %v2808, 2147483648
  %v2821 = vor.u32 1.1754944e-38, %v2820
  %v2822 = vsel %vm2819, %v2821, %v2817
  %v2823 = vmul.f32 1.0, %v2822
  %v2824 = vtanh.pop %v2784
  %v2825 = vxor.u32 %v2785, 2147483648
  %v2826 = vmul.f32 %v2825, 1.442695
  %v2827 = vpow.pop %v2826
  %v2828 = vadd.f32 %v2827, 1.0
  %v2829 = vrcp.pop %v2828
  %v2830 = vmul.f32 %v2828, %v2829
  %v2831 = vsub.f32 1.0, %v2830
  %v2832 = vmul.f32 %v2829, %v2831
  %v2833 = vadd.f32 %v2829, %v2832
  %vm2834 = vweird.f32 %v2828
  %vm2835 = vweird.f32 %v2829
  %vm2836 = vmor %vm2834, %vm2835
  %v2837 = vsel %vm2836, %v2829, %v2833
  %v2838 = vand.u32 2147483647, %v2828
  %vm2839 = vcmp.eq.f32.partialorder %v2838, 8.507059e+37
  %v2840 = vand.u32 %v2828, 2147483648
  %v2841 = vor.u32 1.1754944e-38, %v2840
  %v2842 = vsel %vm2839, %v2841, %v2837
  %v2843 = vmul.f32 1.0, %v2842
  %v2844 = vmul.f32 %v2823, %v2525
  %v2845 = vmul.f32 %v2804, %v2824
  %v2846 = vadd.f32 %v2844, %v2845
  %v2847 = vtanh.pop %v2846
  %v2848 = vmul.f32 %v2843, %v2847
  %s2849 = scalar_lea.vmem [#allocation3], 56
  %2850 = vst [vmem:[%s2849] sm:$0xff] %v2848
  %2851 = vst [vmem:[#allocation4] sm:$0xff] %v2848
  %2852 = vst [vmem:[#allocation5] sm:$0xff] %v2846
  %v2853 = vld [vmem:[#allocation3] sm:$0xff]
  %v2854 = vld [vmem:[#allocation3 + $0x8] sm:$0xff]
  %v2855 = vld [vmem:[#allocation3 + $0x10] sm:$0xff]
  %v2856 = vld [vmem:[#allocation3 + $0x18] sm:$0xff]
  %v2857 = vld [vmem:[#allocation3 + $0x20] sm:$0xff]
  %v2858 = vld [vmem:[#allocation3 + $0x28] sm:$0xff]
  %v2859 = vld [vmem:[#allocation3 + $0x30] sm:$0xff]
  %v2860 = vld [vmem:[#allocation3 + $0x38] sm:$0xff]
  %v2861 = vpack.c.bf16 %v2854, %v2853
  %v2862 = vpack.c.bf16 %v2856, %v2855
  %v2863 = vpack.c.bf16 %v2858, %v2857
  %v2864 = vpack.c.bf16 %v2860, %v2859
  %v2865 = vld [vmem:[%s4] sm:$0xff]
  %v2866 = vld [vmem:[%s4 + $0x8] sm:$0xff]
  %v2867 = vld [vmem:[%s4 + $0x10] sm:$0xff]
  %v2868 = vld [vmem:[%s4 + $0x18] sm:$0xff]
  %v2869 = vld [vmem:[%s4 + $0x20] sm:$0xff]
  %v2870 = vld [vmem:[%s4 + $0x28] sm:$0xff]
  %v2871 = vld [vmem:[%s4 + $0x30] sm:$0xff]
  %v2872 = vld [vmem:[%s4 + $0x38] sm:$0xff]
  %v2873 = vld [vmem:[%s4 + $0x40] sm:$0xff]
  %v2874 = vld [vmem:[%s4 + $0x48] sm:$0xff]
  %v2875 = vld [vmem:[%s4 + $0x50] sm:$0xff]
  %v2876 = vld [vmem:[%s4 + $0x58] sm:$0xff]
  %v2877 = vld [vmem:[%s4 + $0x60] sm:$0xff]
  %v2878 = vld [vmem:[%s4 + $0x68] sm:$0xff]
  %v2879 = vld [vmem:[%s4 + $0x70] sm:$0xff]
  %v2880 = vld [vmem:[%s4 + $0x78] sm:$0xff]
  %v2881 = vld [vmem:[%s4 + $0x80] sm:$0xff]
  %v2882 = vld [vmem:[%s4 + $0x88] sm:$0xff]
  %v2883 = vld [vmem:[%s4 + $0x90] sm:$0xff]
  %v2884 = vld [vmem:[%s4 + $0x98] sm:$0xff]
  %v2885 = vld [vmem:[%s4 + $0xa0] sm:$0xff]
  %v2886 = vld [vmem:[%s4 + $0xa8] sm:$0xff]
  %v2887 = vld [vmem:[%s4 + $0xb0] sm:$0xff]
  %v2888 = vld [vmem:[%s4 + $0xb8] sm:$0xff]
  %v2889 = vld [vmem:[%s4 + $0xc0] sm:$0xff]
  %v2890 = vld [vmem:[%s4 + $0xc8] sm:$0xff]
  %v2891 = vld [vmem:[%s4 + $0xd0] sm:$0xff]
  %v2892 = vld [vmem:[%s4 + $0xd8] sm:$0xff]
  %v2893 = vld [vmem:[%s4 + $0xe0] sm:$0xff]
  %v2894 = vld [vmem:[%s4 + $0xe8] sm:$0xff]
  %v2895 = vld [vmem:[%s4 + $0xf0] sm:$0xff]
  %v2896 = vld [vmem:[%s4 + $0xf8] sm:$0xff]
  %v2897 = vld [vmem:[%s6] sm:$0xf]
  %v2899 = vperm.slane %v2897, 0
  %v2900 = vperm.slane %v2897, 1
  %v2901 = vperm.slane %v2897, 2
  %v2902 = vperm.slane %v2897, 3
  %v2939 = vunpack.c.l.b16 %v2865
  %v2940 = vunpack.c.h.b16 %v2865
  %v2941 = vunpack.c.l.b16 %v2866
  %v2942 = vunpack.c.h.b16 %v2866
  %v2943 = vunpack.c.l.b16 %v2867
  %v2944 = vunpack.c.h.b16 %v2867
  %v2945 = vunpack.c.l.b16 %v2868
  %v2946 = vunpack.c.h.b16 %v2868
  %v2947 = vunpack.c.l.b16 %v2869
  %v2948 = vunpack.c.h.b16 %v2869
  %v2949 = vunpack.c.l.b16 %v2870
  %v2950 = vunpack.c.h.b16 %v2870
  %v2951 = vunpack.c.l.b16 %v2871
  %v2952 = vunpack.c.h.b16 %v2871
  %v2953 = vunpack.c.l.b16 %v2872
  %v2954 = vunpack.c.h.b16 %v2872
  %v2955 = vunpack.c.l.b16 %v2873
  %v2956 = vunpack.c.h.b16 %v2873
  %v2957 = vunpack.c.l.b16 %v2874
  %v2958 = vunpack.c.h.b16 %v2874
  %v2959 = vunpack.c.l.b16 %v2875
  %v2960 = vunpack.c.h.b16 %v2875
  %v2961 = vunpack.c.l.b16 %v2876
  %v2962 = vunpack.c.h.b16 %v2876
  %v2963 = vunpack.c.l.b16 %v2877
  %v2964 = vunpack.c.h.b16 %v2877
  %v2965 = vunpack.c.l.b16 %v2878
  %v2966 = vunpack.c.h.b16 %v2878
  %v2967 = vunpack.c.l.b16 %v2879
  %v2968 = vunpack.c.h.b16 %v2879
  %v2969 = vunpack.c.l.b16 %v2880
  %v2970 = vunpack.c.h.b16 %v2880
  %v2971 = vunpack.c.l.b16 %v2881
  %v2972 = vunpack.c.h.b16 %v2881
  %v2973 = vunpack.c.l.b16 %v2882
  %v2974 = vunpack.c.h.b16 %v2882
  %v2975 = vunpack.c.l.b16 %v2883
  %v2976 = vunpack.c.h.b16 %v2883
  %v2977 = vunpack.c.l.b16 %v2884
  %v2978 = vunpack.c.h.b16 %v2884
  %v2979 = vunpack.c.l.b16 %v2885
  %v2980 = vunpack.c.h.b16 %v2885
  %v2981 = vunpack.c.l.b16 %v2886
  %v2982 = vunpack.c.h.b16 %v2886
  %v2983 = vunpack.c.l.b16 %v2887
  %v2984 = vunpack.c.h.b16 %v2887
  %v2985 = vunpack.c.l.b16 %v2888
  %v2986 = vunpack.c.h.b16 %v2888
  %v2987 = vunpack.c.l.b16 %v2889
  %v2988 = vunpack.c.h.b16 %v2889
  %v2989 = vunpack.c.l.b16 %v2890
  %v2990 = vunpack.c.h.b16 %v2890
  %v2991 = vunpack.c.l.b16 %v2891
  %v2992 = vunpack.c.h.b16 %v2891
  %v2993 = vunpack.c.l.b16 %v2892
  %v2994 = vunpack.c.h.b16 %v2892
  %v2995 = vunpack.c.l.b16 %v2893
  %v2996 = vunpack.c.h.b16 %v2893
  %v2997 = vunpack.c.l.b16 %v2894
  %v2998 = vunpack.c.h.b16 %v2894
  %v2999 = vunpack.c.l.b16 %v2895
  %v3000 = vunpack.c.h.b16 %v2895
  %v3001 = vunpack.c.l.b16 %v2896
  %v3002 = vunpack.c.h.b16 %v2896
  %v3003 = vpack.c.b16 %v2943, %v2939
  %v3004 = vpack.c.b16 %v2944, %v2940
  %v3005 = vpack.c.b16 %v2945, %v2941
  %v3006 = vpack.c.b16 %v2946, %v2942
  %v3007 = vpack.c.b16 %v2951, %v2947
  %v3008 = vpack.c.b16 %v2952, %v2948
  %v3009 = vpack.c.b16 %v2953, %v2949
  %v3010 = vpack.c.b16 %v2954, %v2950
  %v3011 = vpack.c.b16 %v2959, %v2955
  %v3012 = vpack.c.b16 %v2960, %v2956
  %v3013 = vpack.c.b16 %v2961, %v2957
  %v3014 = vpack.c.b16 %v2962, %v2958
  %v3015 = vpack.c.b16 %v2967, %v2963
  %v3016 = vpack.c.b16 %v2968, %v2964
  %v3017 = vpack.c.b16 %v2969, %v2965
  %v3018 = vpack.c.b16 %v2970, %v2966
  %v3019 = vpack.c.b16 %v2975, %v2971
  %v3020 = vpack.c.b16 %v2976, %v2972
  %v3021 = vpack.c.b16 %v2977, %v2973
  %v3022 = vpack.c.b16 %v2978, %v2974
  %v3023 = vpack.c.b16 %v2983, %v2979
  %v3024 = vpack.c.b16 %v2984, %v2980
  %v3025 = vpack.c.b16 %v2985, %v2981
  %v3026 = vpack.c.b16 %v2986, %v2982
  %v3027 = vpack.c.b16 %v2991, %v2987
  %v3028 = vpack.c.b16 %v2992, %v2988
  %v3029 = vpack.c.b16 %v2993, %v2989
  %v3030 = vpack.c.b16 %v2994, %v2990
  %v3031 = vpack.c.b16 %v2999, %v2995
  %v3032 = vpack.c.b16 %v3000, %v2996
  %v3033 = vpack.c.b16 %v3001, %v2997
  %v3034 = vpack.c.b16 %v3002, %v2998
  %3067 = vmatpush.bf16.msra.mxu0 %v3031
  %3068 = vmatpush.bf16.msra.mxu0 %v3027
  %3069 = vmatpush.bf16.msra.mxu0 %v3023
  %3070 = vmatpush.bf16.msra.mxu0 %v3019
  %3071 = vmatpush.bf16.msra.mxu0 %v3015
  %3072 = vmatpush.bf16.msra.mxu0 %v3011
  %3073 = vmatpush.bf16.msra.mxu0 %v3007
  %3074 = vmatpush.bf16.msra.mxu0 %v3003
  %3075 = vmatmul.bf16.gmra.mxu0 %v2861
  %v3076 = vpop.f32.mrf.mxu0
  %v3077 = vadd.f32 %v2899, %v3076
  %v3078 = vpop.f32.mrf.mxu0
  %v3079 = vadd.f32 %v2899, %v3078
  %3080 = vmatmul.bf16.gmra.mxu0 %v2862
  %v3081 = vpop.f32.mrf.mxu0
  %v3082 = vadd.f32 %v2899, %v3081
  %v3083 = vpop.f32.mrf.mxu0
  %v3084 = vadd.f32 %v2899, %v3083
  %3085 = vmatmul.bf16.gmra.mxu0 %v2863
  %v3086 = vpop.f32.mrf.mxu0
  %v3087 = vadd.f32 %v2899, %v3086
  %v3088 = vpop.f32.mrf.mxu0
  %v3089 = vadd.f32 %v2899, %v3088
  %3090 = vmatmul.bf16.gmra.mxu0 %v2864
  %v3091 = vpop.f32.mrf.mxu0
  %v3092 = vadd.f32 %v2899, %v3091
  %v3093 = vpop.f32.mrf.mxu0
  %v3094 = vadd.f32 %v2899, %v3093
  %3095 = vdwg.mxu0
  %3096 = vmatpush.bf16.msra.mxu0 %v3032
  %3097 = vmatpush.bf16.msra.mxu0 %v3028
  %3098 = vmatpush.bf16.msra.mxu0 %v3024
  %3099 = vmatpush.bf16.msra.mxu0 %v3020
  %3100 = vmatpush.bf16.msra.mxu0 %v3016
  %3101 = vmatpush.bf16.msra.mxu0 %v3012
  %3102 = vmatpush.bf16.msra.mxu0 %v3008
  %3103 = vmatpush.bf16.msra.mxu0 %v3004
  %3104 = vmatmul.bf16.gmra.mxu0 %v2861
  %v3105 = vpop.f32.mrf.mxu0
  %v3106 = vadd.f32 %v2900, %v3105
  %v3107 = vpop.f32.mrf.mxu0
  %v3108 = vadd.f32 %v2900, %v3107
  %3109 = vmatmul.bf16.gmra.mxu0 %v2862
  %v3110 = vpop.f32.mrf.mxu0
  %v3111 = vadd.f32 %v2900, %v3110
  %v3112 = vpop.f32.mrf.mxu0
  %v3113 = vadd.f32 %v2900, %v3112
  %3114 = vmatmul.bf16.gmra.mxu0 %v2863
  %v3115 = vpop.f32.mrf.mxu0
  %v3116 = vadd.f32 %v2900, %v3115
  %v3117 = vpop.f32.mrf.mxu0
  %v3118 = vadd.f32 %v2900, %v3117
  %3119 = vmatmul.bf16.gmra.mxu0 %v2864
  %v3120 = vpop.f32.mrf.mxu0
  %v3121 = vadd.f32 %v2900, %v3120
  %v3122 = vpop.f32.mrf.mxu0
  %v3123 = vadd.f32 %v2900, %v3122
  %3124 = vdwg.mxu0
  %3125 = vmatpush.bf16.msra.mxu0 %v3033
  %3126 = vmatpush.bf16.msra.mxu0 %v3029
  %3127 = vmatpush.bf16.msra.mxu0 %v3025
  %3128 = vmatpush.bf16.msra.mxu0 %v3021
  %3129 = vmatpush.bf16.msra.mxu0 %v3017
  %3130 = vmatpush.bf16.msra.mxu0 %v3013
  %3131 = vmatpush.bf16.msra.mxu0 %v3009
  %3132 = vmatpush.bf16.msra.mxu0 %v3005
  %3133 = vmatmul.bf16.gmra.mxu0 %v2861
  %v3134 = vpop.f32.mrf.mxu0
  %v3135 = vadd.f32 %v2901, %v3134
  %v3136 = vpop.f32.mrf.mxu0
  %v3137 = vadd.f32 %v2901, %v3136
  %3138 = vmatmul.bf16.gmra.mxu0 %v2862
  %v3139 = vpop.f32.mrf.mxu0
  %v3140 = vadd.f32 %v2901, %v3139
  %v3141 = vpop.f32.mrf.mxu0
  %v3142 = vadd.f32 %v2901, %v3141
  %3143 = vmatmul.bf16.gmra.mxu0 %v2863
  %v3144 = vpop.f32.mrf.mxu0
  %v3145 = vadd.f32 %v2901, %v3144
  %v3146 = vpop.f32.mrf.mxu0
  %v3147 = vadd.f32 %v2901, %v3146
  %3148 = vmatmul.bf16.gmra.mxu0 %v2864
  %v3149 = vpop.f32.mrf.mxu0
  %v3150 = vadd.f32 %v2901, %v3149
  %v3151 = vpop.f32.mrf.mxu0
  %v3152 = vadd.f32 %v2901, %v3151
  %3153 = vdwg.mxu0
  %3154 = vmatpush.bf16.msra.mxu0 %v3034
  %3155 = vmatpush.bf16.msra.mxu0 %v3030
  %3156 = vmatpush.bf16.msra.mxu0 %v3026
  %3157 = vmatpush.bf16.msra.mxu0 %v3022
  %3158 = vmatpush.bf16.msra.mxu0 %v3018
  %3159 = vmatpush.bf16.msra.mxu0 %v3014
  %3160 = vmatpush.bf16.msra.mxu0 %v3010
  %3161 = vmatpush.bf16.msra.mxu0 %v3006
  %3162 = vmatmul.bf16.gmra.mxu0 %v2861
  %v3163 = vpop.f32.mrf.mxu0
  %v3164 = vadd.f32 %v2902, %v3163
  %v3165 = vpop.f32.mrf.mxu0
  %v3166 = vadd.f32 %v2902, %v3165
  %3167 = vmatmul.bf16.gmra.mxu0 %v2862
  %v3168 = vpop.f32.mrf.mxu0
  %v3169 = vadd.f32 %v2902, %v3168
  %v3170 = vpop.f32.mrf.mxu0
  %v3171 = vadd.f32 %v2902, %v3170
  %3172 = vmatmul.bf16.gmra.mxu0 %v2863
  %v3173 = vpop.f32.mrf.mxu0
  %v3174 = vadd.f32 %v2902, %v3173
  %v3175 = vpop.f32.mrf.mxu0
  %v3176 = vadd.f32 %v2902, %v3175
  %3177 = vmatmul.bf16.gmra.mxu0 %v2864
  %v3178 = vpop.f32.mrf.mxu0
  %v3179 = vadd.f32 %v2902, %v3178
  %v3180 = vpop.f32.mrf.mxu0
  %v3181 = vadd.f32 %v2902, %v3180
  %3182 = vdwg.mxu0
  %3183 = vst [vmem:[#allocation2] sm:$0xff] %v3077
  %3184 = vst [vmem:[#allocation2 + $0x8] sm:$0xff] %v3106
  %3185 = vst [vmem:[#allocation2 + $0x10] sm:$0xff] %v3135
  %3186 = vst [vmem:[#allocation2 + $0x18] sm:$0xff] %v3164
  %3187 = vst [vmem:[#allocation2 + $0x20] sm:$0xff] %v3079
  %3188 = vst [vmem:[#allocation2 + $0x28] sm:$0xff] %v3108
  %3189 = vst [vmem:[#allocation2 + $0x30] sm:$0xff] %v3137
  %3190 = vst [vmem:[#allocation2 + $0x38] sm:$0xff] %v3166
  %3191 = vst [vmem:[#allocation2 + $0x40] sm:$0xff] %v3082
  %3192 = vst [vmem:[#allocation2 + $0x48] sm:$0xff] %v3111
  %3193 = vst [vmem:[#allocation2 + $0x50] sm:$0xff] %v3140
  %3194 = vst [vmem:[#allocation2 + $0x58] sm:$0xff] %v3169
  %3195 = vst [vmem:[#allocation2 + $0x60] sm:$0xff] %v3084
  %3196 = vst [vmem:[#allocation2 + $0x68] sm:$0xff] %v3113
  %3197 = vst [vmem:[#allocation2 + $0x70] sm:$0xff] %v3142
  %3198 = vst [vmem:[#allocation2 + $0x78] sm:$0xff] %v3171
  %3199 = vst [vmem:[#allocation2 + $0x80] sm:$0xff] %v3087
  %3200 = vst [vmem:[#allocation2 + $0x88] sm:$0xff] %v3116
  %3201 = vst [vmem:[#allocation2 + $0x90] sm:$0xff] %v3145
  %3202 = vst [vmem:[#allocation2 + $0x98] sm:$0xff] %v3174
  %3203 = vst [vmem:[#allocation2 + $0xa0] sm:$0xff] %v3089
  %3204 = vst [vmem:[#allocation2 + $0xa8] sm:$0xff] %v3118
  %3205 = vst [vmem:[#allocation2 + $0xb0] sm:$0xff] %v3147
  %3206 = vst [vmem:[#allocation2 + $0xb8] sm:$0xff] %v3176
  %3207 = vst [vmem:[#allocation2 + $0xc0] sm:$0xff] %v3092
  %3208 = vst [vmem:[#allocation2 + $0xc8] sm:$0xff] %v3121
  %3209 = vst [vmem:[#allocation2 + $0xd0] sm:$0xff] %v3150
  %3210 = vst [vmem:[#allocation2 + $0xd8] sm:$0xff] %v3179
  %3211 = vst [vmem:[#allocation2 + $0xe0] sm:$0xff] %v3094
  %3212 = vst [vmem:[#allocation2 + $0xe8] sm:$0xff] %v3123
  %3213 = vst [vmem:[#allocation2 + $0xf0] sm:$0xff] %v3152
  %3214 = vst [vmem:[#allocation2 + $0xf8] sm:$0xff] %v3181
  %v3215 = vld [vmem:[#allocation6] sm:$0xff]
  %v3216 = vld [vmem:[#allocation7] sm:$0xff]
  %v3217 = vld [vmem:[%s286] sm:$0xff]
  %v3218 = vld [vmem:[%s286 + $0x8] sm:$0xff]
  %v3219 = vld [vmem:[%s286 + $0x10] sm:$0xff]
  %v3220 = vld [vmem:[%s286 + $0x18] sm:$0xff]
  %v3221 = vpack.c.bf16 %v3215, %v3215
  %v3222 = vld [vmem:[%s5] sm:$0xff]
  %v3223 = vld [vmem:[%s5 + $0x8] sm:$0xff]
  %v3224 = vld [vmem:[%s5 + $0x10] sm:$0xff]
  %v3225 = vld [vmem:[%s5 + $0x18] sm:$0xff]
  %v3226 = vld [vmem:[%s5 + $0x20] sm:$0xff]
  %v3227 = vld [vmem:[%s5 + $0x28] sm:$0xff]
  %v3228 = vld [vmem:[%s5 + $0x30] sm:$0xff]
  %v3229 = vld [vmem:[%s5 + $0x38] sm:$0xff]
  %v3230 = vld [vmem:[%s5 + $0x40] sm:$0xff]
  %v3231 = vld [vmem:[%s5 + $0x48] sm:$0xff]
  %v3232 = vld [vmem:[%s5 + $0x50] sm:$0xff]
  %v3233 = vld [vmem:[%s5 + $0x58] sm:$0xff]
  %v3234 = vld [vmem:[%s5 + $0x60] sm:$0xff]
  %v3235 = vld [vmem:[%s5 + $0x68] sm:$0xff]
  %v3236 = vld [vmem:[%s5 + $0x70] sm:$0xff]
  %v3237 = vld [vmem:[%s5 + $0x78] sm:$0xff]
  %v3238 = vld [vmem:[%s5 + $0x80] sm:$0xff]
  %v3239 = vld [vmem:[%s5 + $0x88] sm:$0xff]
  %v3240 = vld [vmem:[%s5 + $0x90] sm:$0xff]
  %v3241 = vld [vmem:[%s5 + $0x98] sm:$0xff]
  %v3242 = vld [vmem:[%s5 + $0xa0] sm:$0xff]
  %v3243 = vld [vmem:[%s5 + $0xa8] sm:$0xff]
  %v3244 = vld [vmem:[%s5 + $0xb0] sm:$0xff]
  %v3245 = vld [vmem:[%s5 + $0xb8] sm:$0xff]
  %v3246 = vld [vmem:[%s5 + $0xc0] sm:$0xff]
  %v3247 = vld [vmem:[%s5 + $0xc8] sm:$0xff]
  %v3248 = vld [vmem:[%s5 + $0xd0] sm:$0xff]
  %v3249 = vld [vmem:[%s5 + $0xd8] sm:$0xff]
  %v3250 = vld [vmem:[%s5 + $0xe0] sm:$0xff]
  %v3251 = vld [vmem:[%s5 + $0xe8] sm:$0xff]
  %v3252 = vld [vmem:[%s5 + $0xf0] sm:$0xff]
  %v3253 = vld [vmem:[%s5 + $0xf8] sm:$0xff]
  %v3286 = vunpack.c.l.b16 %v3222
  %v3287 = vunpack.c.h.b16 %v3222
  %v3288 = vunpack.c.l.b16 %v3223
  %v3289 = vunpack.c.h.b16 %v3223
  %v3290 = vunpack.c.l.b16 %v3224
  %v3291 = vunpack.c.h.b16 %v3224
  %v3292 = vunpack.c.l.b16 %v3225
  %v3293 = vunpack.c.h.b16 %v3225
  %v3294 = vunpack.c.l.b16 %v3226
  %v3295 = vunpack.c.h.b16 %v3226
  %v3296 = vunpack.c.l.b16 %v3227
  %v3297 = vunpack.c.h.b16 %v3227
  %v3298 = vunpack.c.l.b16 %v3228
  %v3299 = vunpack.c.h.b16 %v3228
  %v3300 = vunpack.c.l.b16 %v3229
  %v3301 = vunpack.c.h.b16 %v3229
  %v3302 = vunpack.c.l.b16 %v3230
  %v3303 = vunpack.c.h.b16 %v3230
  %v3304 = vunpack.c.l.b16 %v3231
  %v3305 = vunpack.c.h.b16 %v3231
  %v3306 = vunpack.c.l.b16 %v3232
  %v3307 = vunpack.c.h.b16 %v3232
  %v3308 = vunpack.c.l.b16 %v3233
  %v3309 = vunpack.c.h.b16 %v3233
  %v3310 = vunpack.c.l.b16 %v3234
  %v3311 = vunpack.c.h.b16 %v3234
  %v3312 = vunpack.c.l.b16 %v3235
  %v3313 = vunpack.c.h.b16 %v3235
  %v3314 = vunpack.c.l.b16 %v3236
  %v3315 = vunpack.c.h.b16 %v3236
  %v3316 = vunpack.c.l.b16 %v3237
  %v3317 = vunpack.c.h.b16 %v3237
  %v3318 = vunpack.c.l.b16 %v3238
  %v3319 = vunpack.c.h.b16 %v3238
  %v3320 = vunpack.c.l.b16 %v3239
  %v3321 = vunpack.c.h.b16 %v3239
  %v3322 = vunpack.c.l.b16 %v3240
  %v3323 = vunpack.c.h.b16 %v3240
  %v3324 = vunpack.c.l.b16 %v3241
  %v3325 = vunpack.c.h.b16 %v3241
  %v3326 = vunpack.c.l.b16 %v3242
  %v3327 = vunpack.c.h.b16 %v3242
  %v3328 = vunpack.c.l.b16 %v3243
  %v3329 = vunpack.c.h.b16 %v3243
  %v3330 = vunpack.c.l.b16 %v3244
  %v3331 = vunpack.c.h.b16 %v3244
  %v3332 = vunpack.c.l.b16 %v3245
  %v3333 = vunpack.c.h.b16 %v3245
  %v3334 = vunpack.c.l.b16 %v3246
  %v3335 = vunpack.c.h.b16 %v3246
  %v3336 = vunpack.c.l.b16 %v3247
  %v3337 = vunpack.c.h.b16 %v3247
  %v3338 = vunpack.c.l.b16 %v3248
  %v3339 = vunpack.c.h.b16 %v3248
  %v3340 = vunpack.c.l.b16 %v3249
  %v3341 = vunpack.c.h.b16 %v3249
  %v3342 = vunpack.c.l.b16 %v3250
  %v3343 = vunpack.c.h.b16 %v3250
  %v3344 = vunpack.c.l.b16 %v3251
  %v3345 = vunpack.c.h.b16 %v3251
  %v3346 = vunpack.c.l.b16 %v3252
  %v3347 = vunpack.c.h.b16 %v3252
  %v3348 = vunpack.c.l.b16 %v3253
  %v3349 = vunpack.c.h.b16 %v3253
  %v3350 = vpack.c.b16 %v3290, %v3286
  %v3351 = vpack.c.b16 %v3291, %v3287
  %v3352 = vpack.c.b16 %v3292, %v3288
  %v3353 = vpack.c.b16 %v3293, %v3289
  %v3354 = vpack.c.b16 %v3298, %v3294
  %v3355 = vpack.c.b16 %v3299, %v3295
  %v3356 = vpack.c.b16 %v3300, %v3296
  %v3357 = vpack.c.b16 %v3301, %v3297
  %v3358 = vpack.c.b16 %v3306, %v3302
  %v3359 = vpack.c.b16 %v3307, %v3303
  %v3360 = vpack.c.b16 %v3308, %v3304
  %v3361 = vpack.c.b16 %v3309, %v3305
  %v3362 = vpack.c.b16 %v3314, %v3310
  %v3363 = vpack.c.b16 %v3315, %v3311
  %v3364 = vpack.c.b16 %v3316, %v3312
  %v3365 = vpack.c.b16 %v3317, %v3313
  %v3366 = vpack.c.b16 %v3322, %v3318
  %v3367 = vpack.c.b16 %v3323, %v3319
  %v3368 = vpack.c.b16 %v3324, %v3320
  %v3369 = vpack.c.b16 %v3325, %v3321
  %v3370 = vpack.c.b16 %v3330, %v3326
  %v3371 = vpack.c.b16 %v3331, %v3327
  %v3372 = vpack.c.b16 %v3332, %v3328
  %v3373 = vpack.c.b16 %v3333, %v3329
  %v3374 = vpack.c.b16 %v3338, %v3334
  %v3375 = vpack.c.b16 %v3339, %v3335
  %v3376 = vpack.c.b16 %v3340, %v3336
  %v3377 = vpack.c.b16 %v3341, %v3337
  %v3378 = vpack.c.b16 %v3346, %v3342
  %v3379 = vpack.c.b16 %v3347, %v3343
  %v3380 = vpack.c.b16 %v3348, %v3344
  %v3381 = vpack.c.b16 %v3349, %v3345
  %3414 = vmatpush.bf16.msra.mxu0 %v3378
  %3415 = vmatpush.bf16.msra.mxu0 %v3374
  %3416 = vmatpush.bf16.msra.mxu0 %v3370
  %3417 = vmatpush.bf16.msra.mxu0 %v3366
  %3418 = vmatpush.bf16.msra.mxu0 %v3362
  %3419 = vmatpush.bf16.msra.mxu0 %v3358
  %3420 = vmatpush.bf16.msra.mxu0 %v3354
  %3421 = vmatpush.bf16.msra.mxu0 %v3350
  %3422 = vmatmul.bf16.gmra.mxu0 %v3221
  %v3423 = vpop.f32.mrf.mxu0
  %v3424 = vadd.f32 0.0, %v3423
  %v3425 = vpop.f32.mrf.mxu0
  %3426 = vdwg.mxu0
  %3427 = vmatpush.bf16.msra.mxu0 %v3379
  %3428 = vmatpush.bf16.msra.mxu0 %v3375
  %3429 = vmatpush.bf16.msra.mxu0 %v3371
  %3430 = vmatpush.bf16.msra.mxu0 %v3367
  %3431 = vmatpush.bf16.msra.mxu0 %v3363
  %3432 = vmatpush.bf16.msra.mxu0 %v3359
  %3433 = vmatpush.bf16.msra.mxu0 %v3355
  %3434 = vmatpush.bf16.msra.mxu0 %v3351
  %3435 = vmatmul.bf16.gmra.mxu0 %v3221
  %v3436 = vpop.f32.mrf.mxu0
  %v3437 = vadd.f32 0.0, %v3436
  %v3438 = vpop.f32.mrf.mxu0
  %3439 = vdwg.mxu0
  %3440 = vmatpush.bf16.msra.mxu0 %v3380
  %3441 = vmatpush.bf16.msra.mxu0 %v3376
  %3442 = vmatpush.bf16.msra.mxu0 %v3372
  %3443 = vmatpush.bf16.msra.mxu0 %v3368
  %3444 = vmatpush.bf16.msra.mxu0 %v3364
  %3445 = vmatpush.bf16.msra.mxu0 %v3360
  %3446 = vmatpush.bf16.msra.mxu0 %v3356
  %3447 = vmatpush.bf16.msra.mxu0 %v3352
  %3448 = vmatmul.bf16.gmra.mxu0 %v3221
  %v3449 = vpop.f32.mrf.mxu0
  %v3450 = vadd.f32 0.0, %v3449
  %v3451 = vpop.f32.mrf.mxu0
  %3452 = vdwg.mxu0
  %3453 = vmatpush.bf16.msra.mxu0 %v3381
  %3454 = vmatpush.bf16.msra.mxu0 %v3377
  %3455 = vmatpush.bf16.msra.mxu0 %v3373
  %3456 = vmatpush.bf16.msra.mxu0 %v3369
  %3457 = vmatpush.bf16.msra.mxu0 %v3365
  %3458 = vmatpush.bf16.msra.mxu0 %v3361
  %3459 = vmatpush.bf16.msra.mxu0 %v3357
  %3460 = vmatpush.bf16.msra.mxu0 %v3353
  %3461 = vmatmul.bf16.gmra.mxu0 %v3221
  %v3462 = vpop.f32.mrf.mxu0
  %v3463 = vadd.f32 0.0, %v3462
  %v3464 = vpop.f32.mrf.mxu0
  %3465 = vdwg.mxu0
  %v3466 = vadd.f32 %v3217, %v3424
  %v3467 = vadd.f32 %v3218, %v3437
  %v3468 = vadd.f32 %v3219, %v3450
  %v3469 = vadd.f32 %v3220, %v3463
  %v3470 = vxor.u32 %v3466, 2147483648
  %v3471 = vmul.f32 %v3470, 1.442695
  %v3472 = vpow.pop %v3471
  %v3473 = vadd.f32 %v3472, 1.0
  %v3474 = vrcp.pop %v3473
  %v3475 = vmul.f32 %v3473, %v3474
  %v3476 = vsub.f32 1.0, %v3475
  %v3477 = vmul.f32 %v3474, %v3476
  %v3478 = vadd.f32 %v3474, %v3477
  %vm3479 = vweird.f32 %v3473
  %vm3480 = vweird.f32 %v3474
  %vm3481 = vmor %vm3479, %vm3480
  %v3482 = vsel %vm3481, %v3474, %v3478
  %v3483 = vand.u32 2147483647, %v3473
  %vm3484 = vcmp.eq.f32.partialorder %v3483, 8.507059e+37
  %v3485 = vand.u32 %v3473, 2147483648
  %v3486 = vor.u32 1.1754944e-38, %v3485
  %v3487 = vsel %vm3484, %v3486, %v3482
  %v3488 = vmul.f32 1.0, %v3487
  %v3489 = vxor.u32 %v3467, 2147483648
  %v3490 = vmul.f32 %v3489, 1.442695
  %v3491 = vpow.pop %v3490
  %v3492 = vadd.f32 %v3491, 1.0
  %v3493 = vrcp.pop %v3492
  %v3494 = vmul.f32 %v3492, %v3493
  %v3495 = vsub.f32 1.0, %v3494
  %v3496 = vmul.f32 %v3493, %v3495
  %v3497 = vadd.f32 %v3493, %v3496
  %vm3498 = vweird.f32 %v3492
  %vm3499 = vweird.f32 %v3493
  %vm3500 = vmor %vm3498, %vm3499
  %v3501 = vsel %vm3500, %v3493, %v3497
  %v3502 = vand.u32 2147483647, %v3492
  %vm3503 = vcmp.eq.f32.partialorder %v3502, 8.507059e+37
  %v3504 = vand.u32 %v3492, 2147483648
  %v3505 = vor.u32 1.1754944e-38, %v3504
  %v3506 = vsel %vm3503, %v3505, %v3501
  %v3507 = vmul.f32 1.0, %v3506
  %v3508 = vtanh.pop %v3468
  %v3509 = vxor.u32 %v3469, 2147483648
  %v3510 = vmul.f32 %v3509, 1.442695
  %v3511 = vpow.pop %v3510
  %v3512 = vadd.f32 %v3511, 1.0
  %v3513 = vrcp.pop %v3512
  %v3514 = vmul.f32 %v3512, %v3513
  %v3515 = vsub.f32 1.0, %v3514
  %v3516 = vmul.f32 %v3513, %v3515
  %v3517 = vadd.f32 %v3513, %v3516
  %vm3518 = vweird.f32 %v3512
  %vm3519 = vweird.f32 %v3513
  %vm3520 = vmor %vm3518, %vm3519
  %v3521 = vsel %vm3520, %v3513, %v3517
  %v3522 = vand.u32 2147483647, %v3512
  %vm3523 = vcmp.eq.f32.partialorder %v3522, 8.507059e+37
  %v3524 = vand.u32 %v3512, 2147483648
  %v3525 = vor.u32 1.1754944e-38, %v3524
  %v3526 = vsel %vm3523, %v3525, %v3521
  %v3527 = vmul.f32 1.0, %v3526
  %v3528 = vmul.f32 %v3507, %v3216
  %v3529 = vmul.f32 %v3488, %v3508
  %v3530 = vadd.f32 %v3528, %v3529
  %v3531 = vtanh.pop %v3530
  %v3532 = vmul.f32 %v3527, %v3531
  %v3533 = vmax.f32 %v3532, 0.0
  %3534 = vst [vmem:[%s7] sm:$0xff] %v3533
  %v3535 = vld [vmem:[%s606] sm:$0xff]
  %v3536 = vld [vmem:[%s606 + $0x8] sm:$0xff]
  %v3537 = vld [vmem:[%s606 + $0x10] sm:$0xff]
  %v3538 = vld [vmem:[%s606 + $0x18] sm:$0xff]
  %v3539 = vpack.c.bf16 %v3532, %v3532
  %v3540 = vld [vmem:[%s5] sm:$0xff]
  %v3541 = vld [vmem:[%s5 + $0x8] sm:$0xff]
  %v3542 = vld [vmem:[%s5 + $0x10] sm:$0xff]
  %v3543 = vld [vmem:[%s5 + $0x18] sm:$0xff]
  %v3544 = vld [vmem:[%s5 + $0x20] sm:$0xff]
  %v3545 = vld [vmem:[%s5 + $0x28] sm:$0xff]
  %v3546 = vld [vmem:[%s5 + $0x30] sm:$0xff]
  %v3547 = vld [vmem:[%s5 + $0x38] sm:$0xff]
  %v3548 = vld [vmem:[%s5 + $0x40] sm:$0xff]
  %v3549 = vld [vmem:[%s5 + $0x48] sm:$0xff]
  %v3550 = vld [vmem:[%s5 + $0x50] sm:$0xff]
  %v3551 = vld [vmem:[%s5 + $0x58] sm:$0xff]
  %v3552 = vld [vmem:[%s5 + $0x60] sm:$0xff]
  %v3553 = vld [vmem:[%s5 + $0x68] sm:$0xff]
  %v3554 = vld [vmem:[%s5 + $0x70] sm:$0xff]
  %v3555 = vld [vmem:[%s5 + $0x78] sm:$0xff]
  %v3556 = vld [vmem:[%s5 + $0x80] sm:$0xff]
  %v3557 = vld [vmem:[%s5 + $0x88] sm:$0xff]
  %v3558 = vld [vmem:[%s5 + $0x90] sm:$0xff]
  %v3559 = vld [vmem:[%s5 + $0x98] sm:$0xff]
  %v3560 = vld [vmem:[%s5 + $0xa0] sm:$0xff]
  %v3561 = vld [vmem:[%s5 + $0xa8] sm:$0xff]
  %v3562 = vld [vmem:[%s5 + $0xb0] sm:$0xff]
  %v3563 = vld [vmem:[%s5 + $0xb8] sm:$0xff]
  %v3564 = vld [vmem:[%s5 + $0xc0] sm:$0xff]
  %v3565 = vld [vmem:[%s5 + $0xc8] sm:$0xff]
  %v3566 = vld [vmem:[%s5 + $0xd0] sm:$0xff]
  %v3567 = vld [vmem:[%s5 + $0xd8] sm:$0xff]
  %v3568 = vld [vmem:[%s5 + $0xe0] sm:$0xff]
  %v3569 = vld [vmem:[%s5 + $0xe8] sm:$0xff]
  %v3570 = vld [vmem:[%s5 + $0xf0] sm:$0xff]
  %v3571 = vld [vmem:[%s5 + $0xf8] sm:$0xff]
  %v3604 = vunpack.c.l.b16 %v3540
  %v3605 = vunpack.c.h.b16 %v3540
  %v3606 = vunpack.c.l.b16 %v3541
  %v3607 = vunpack.c.h.b16 %v3541
  %v3608 = vunpack.c.l.b16 %v3542
  %v3609 = vunpack.c.h.b16 %v3542
  %v3610 = vunpack.c.l.b16 %v3543
  %v3611 = vunpack.c.h.b16 %v3543
  %v3612 = vunpack.c.l.b16 %v3544
  %v3613 = vunpack.c.h.b16 %v3544
  %v3614 = vunpack.c.l.b16 %v3545
  %v3615 = vunpack.c.h.b16 %v3545
  %v3616 = vunpack.c.l.b16 %v3546
  %v3617 = vunpack.c.h.b16 %v3546
  %v3618 = vunpack.c.l.b16 %v3547
  %v3619 = vunpack.c.h.b16 %v3547
  %v3620 = vunpack.c.l.b16 %v3548
  %v3621 = vunpack.c.h.b16 %v3548
  %v3622 = vunpack.c.l.b16 %v3549
  %v3623 = vunpack.c.h.b16 %v3549
  %v3624 = vunpack.c.l.b16 %v3550
  %v3625 = vunpack.c.h.b16 %v3550
  %v3626 = vunpack.c.l.b16 %v3551
  %v3627 = vunpack.c.h.b16 %v3551
  %v3628 = vunpack.c.l.b16 %v3552
  %v3629 = vunpack.c.h.b16 %v3552
  %v3630 = vunpack.c.l.b16 %v3553
  %v3631 = vunpack.c.h.b16 %v3553
  %v3632 = vunpack.c.l.b16 %v3554
  %v3633 = vunpack.c.h.b16 %v3554
  %v3634 = vunpack.c.l.b16 %v3555
  %v3635 = vunpack.c.h.b16 %v3555
  %v3636 = vunpack.c.l.b16 %v3556
  %v3637 = vunpack.c.h.b16 %v3556
  %v3638 = vunpack.c.l.b16 %v3557
  %v3639 = vunpack.c.h.b16 %v3557
  %v3640 = vunpack.c.l.b16 %v3558
  %v3641 = vunpack.c.h.b16 %v3558
  %v3642 = vunpack.c.l.b16 %v3559
  %v3643 = vunpack.c.h.b16 %v3559
  %v3644 = vunpack.c.l.b16 %v3560
  %v3645 = vunpack.c.h.b16 %v3560
  %v3646 = vunpack.c.l.b16 %v3561
  %v3647 = vunpack.c.h.b16 %v3561
  %v3648 = vunpack.c.l.b16 %v3562
  %v3649 = vunpack.c.h.b16 %v3562
  %v3650 = vunpack.c.l.b16 %v3563
  %v3651 = vunpack.c.h.b16 %v3563
  %v3652 = vunpack.c.l.b16 %v3564
  %v3653 = vunpack.c.h.b16 %v3564
  %v3654 = vunpack.c.l.b16 %v3565
  %v3655 = vunpack.c.h.b16 %v3565
  %v3656 = vunpack.c.l.b16 %v3566
  %v3657 = vunpack.c.h.b16 %v3566
  %v3658 = vunpack.c.l.b16 %v3567
  %v3659 = vunpack.c.h.b16 %v3567
  %v3660 = vunpack.c.l.b16 %v3568
  %v3661 = vunpack.c.h.b16 %v3568
  %v3662 = vunpack.c.l.b16 %v3569
  %v3663 = vunpack.c.h.b16 %v3569
  %v3664 = vunpack.c.l.b16 %v3570
  %v3665 = vunpack.c.h.b16 %v3570
  %v3666 = vunpack.c.l.b16 %v3571
  %v3667 = vunpack.c.h.b16 %v3571
  %v3668 = vpack.c.b16 %v3608, %v3604
  %v3669 = vpack.c.b16 %v3609, %v3605
  %v3670 = vpack.c.b16 %v3610, %v3606
  %v3671 = vpack.c.b16 %v3611, %v3607
  %v3672 = vpack.c.b16 %v3616, %v3612
  %v3673 = vpack.c.b16 %v3617, %v3613
  %v3674 = vpack.c.b16 %v3618, %v3614
  %v3675 = vpack.c.b16 %v3619, %v3615
  %v3676 = vpack.c.b16 %v3624, %v3620
  %v3677 = vpack.c.b16 %v3625, %v3621
  %v3678 = vpack.c.b16 %v3626, %v3622
  %v3679 = vpack.c.b16 %v3627, %v3623
  %v3680 = vpack.c.b16 %v3632, %v3628
  %v3681 = vpack.c.b16 %v3633, %v3629
  %v3682 = vpack.c.b16 %v3634, %v3630
  %v3683 = vpack.c.b16 %v3635, %v3631
  %v3684 = vpack.c.b16 %v3640, %v3636
  %v3685 = vpack.c.b16 %v3641, %v3637
  %v3686 = vpack.c.b16 %v3642, %v3638
  %v3687 = vpack.c.b16 %v3643, %v3639
  %v3688 = vpack.c.b16 %v3648, %v3644
  %v3689 = vpack.c.b16 %v3649, %v3645
  %v3690 = vpack.c.b16 %v3650, %v3646
  %v3691 = vpack.c.b16 %v3651, %v3647
  %v3692 = vpack.c.b16 %v3656, %v3652
  %v3693 = vpack.c.b16 %v3657, %v3653
  %v3694 = vpack.c.b16 %v3658, %v3654
  %v3695 = vpack.c.b16 %v3659, %v3655
  %v3696 = vpack.c.b16 %v3664, %v3660
  %v3697 = vpack.c.b16 %v3665, %v3661
  %v3698 = vpack.c.b16 %v3666, %v3662
  %v3699 = vpack.c.b16 %v3667, %v3663
  %3732 = vmatpush.bf16.msra.mxu0 %v3696
  %3733 = vmatpush.bf16.msra.mxu0 %v3692
  %3734 = vmatpush.bf16.msra.mxu0 %v3688
  %3735 = vmatpush.bf16.msra.mxu0 %v3684
  %3736 = vmatpush.bf16.msra.mxu0 %v3680
  %3737 = vmatpush.bf16.msra.mxu0 %v3676
  %3738 = vmatpush.bf16.msra.mxu0 %v3672
  %3739 = vmatpush.bf16.msra.mxu0 %v3668
  %3740 = vmatmul.bf16.gmra.mxu0 %v3539
  %v3741 = vpop.f32.mrf.mxu0
  %v3742 = vadd.f32 0.0, %v3741
  %v3743 = vpop.f32.mrf.mxu0
  %3744 = vdwg.mxu0
  %3745 = vmatpush.bf16.msra.mxu0 %v3697
  %3746 = vmatpush.bf16.msra.mxu0 %v3693
  %3747 = vmatpush.bf16.msra.mxu0 %v3689
  %3748 = vmatpush.bf16.msra.mxu0 %v3685
  %3749 = vmatpush.bf16.msra.mxu0 %v3681
  %3750 = vmatpush.bf16.msra.mxu0 %v3677
  %3751 = vmatpush.bf16.msra.mxu0 %v3673
  %3752 = vmatpush.bf16.msra.mxu0 %v3669
  %3753 = vmatmul.bf16.gmra.mxu0 %v3539
  %v3754 = vpop.f32.mrf.mxu0
  %v3755 = vadd.f32 0.0, %v3754
  %v3756 = vpop.f32.mrf.mxu0
  %3757 = vdwg.mxu0
  %3758 = vmatpush.bf16.msra.mxu0 %v3698
  %3759 = vmatpush.bf16.msra.mxu0 %v3694
  %3760 = vmatpush.bf16.msra.mxu0 %v3690
  %3761 = vmatpush.bf16.msra.mxu0 %v3686
  %3762 = vmatpush.bf16.msra.mxu0 %v3682
  %3763 = vmatpush.bf16.msra.mxu0 %v3678
  %3764 = vmatpush.bf16.msra.mxu0 %v3674
  %3765 = vmatpush.bf16.msra.mxu0 %v3670
  %3766 = vmatmul.bf16.gmra.mxu0 %v3539
  %v3767 = vpop.f32.mrf.mxu0
  %v3768 = vadd.f32 0.0, %v3767
  %v3769 = vpop.f32.mrf.mxu0
  %3770 = vdwg.mxu0
  %3771 = vmatpush.bf16.msra.mxu0 %v3699
  %3772 = vmatpush.bf16.msra.mxu0 %v3695
  %3773 = vmatpush.bf16.msra.mxu0 %v3691
  %3774 = vmatpush.bf16.msra.mxu0 %v3687
  %3775 = vmatpush.bf16.msra.mxu0 %v3683
  %3776 = vmatpush.bf16.msra.mxu0 %v3679
  %3777 = vmatpush.bf16.msra.mxu0 %v3675
  %3778 = vmatpush.bf16.msra.mxu0 %v3671
  %3779 = vmatmul.bf16.gmra.mxu0 %v3539
  %v3780 = vpop.f32.mrf.mxu0
  %v3781 = vadd.f32 0.0, %v3780
  %v3782 = vpop.f32.mrf.mxu0
  %3783 = vdwg.mxu0
  %v3784 = vadd.f32 %v3535, %v3742
  %v3785 = vadd.f32 %v3536, %v3755
  %v3786 = vadd.f32 %v3537, %v3768
  %v3787 = vadd.f32 %v3538, %v3781
  %v3788 = vxor.u32 %v3784, 2147483648
  %v3789 = vmul.f32 %v3788, 1.442695
  %v3790 = vpow.pop %v3789
  %v3791 = vadd.f32 %v3790, 1.0
  %v3792 = vrcp.pop %v3791
  %v3793 = vmul.f32 %v3791, %v3792
  %v3794 = vsub.f32 1.0, %v3793
  %v3795 = vmul.f32 %v3792, %v3794
  %v3796 = vadd.f32 %v3792, %v3795
  %vm3797 = vweird.f32 %v3791
  %vm3798 = vweird.f32 %v3792
  %vm3799 = vmor %vm3797, %vm3798
  %v3800 = vsel %vm3799, %v3792, %v3796
  %v3801 = vand.u32 2147483647, %v3791
  %vm3802 = vcmp.eq.f32.partialorder %v3801, 8.507059e+37
  %v3803 = vand.u32 %v3791, 2147483648
  %v3804 = vor.u32 1.1754944e-38, %v3803
  %v3805 = vsel %vm3802, %v3804, %v3800
  %v3806 = vmul.f32 1.0, %v3805
  %v3807 = vxor.u32 %v3785, 2147483648
  %v3808 = vmul.f32 %v3807, 1.442695
  %v3809 = vpow.pop %v3808
  %v3810 = vadd.f32 %v3809, 1.0
  %v3811 = vrcp.pop %v3810
  %v3812 = vmul.f32 %v3810, %v3811
  %v3813 = vsub.f32 1.0, %v3812
  %v3814 = vmul.f32 %v3811, %v3813
  %v3815 = vadd.f32 %v3811, %v3814
  %vm3816 = vweird.f32 %v3810
  %vm3817 = vweird.f32 %v3811
  %vm3818 = vmor %vm3816, %vm3817
  %v3819 = vsel %vm3818, %v3811, %v3815
  %v3820 = vand.u32 2147483647, %v3810
  %vm3821 = vcmp.eq.f32.partialorder %v3820, 8.507059e+37
  %v3822 = vand.u32 %v3810, 2147483648
  %v3823 = vor.u32 1.1754944e-38, %v3822
  %v3824 = vsel %vm3821, %v3823, %v3819
  %v3825 = vmul.f32 1.0, %v3824
  %v3826 = vtanh.pop %v3786
  %v3827 = vxor.u32 %v3787, 2147483648
  %v3828 = vmul.f32 %v3827, 1.442695
  %v3829 = vpow.pop %v3828
  %v3830 = vadd.f32 %v3829, 1.0
  %v3831 = vrcp.pop %v3830
  %v3832 = vmul.f32 %v3830, %v3831
  %v3833 = vsub.f32 1.0, %v3832
  %v3834 = vmul.f32 %v3831, %v3833
  %v3835 = vadd.f32 %v3831, %v3834
  %vm3836 = vweird.f32 %v3830
  %vm3837 = vweird.f32 %v3831
  %vm3838 = vmor %vm3836, %vm3837
  %v3839 = vsel %vm3838, %v3831, %v3835
  %v3840 = vand.u32 2147483647, %v3830
  %vm3841 = vcmp.eq.f32.partialorder %v3840, 8.507059e+37
  %v3842 = vand.u32 %v3830, 2147483648
  %v3843 = vor.u32 1.1754944e-38, %v3842
  %v3844 = vsel %vm3841, %v3843, %v3839
  %v3845 = vmul.f32 1.0, %v3844
  %v3846 = vmul.f32 %v3825, %v3530
  %v3847 = vmul.f32 %v3806, %v3826
  %v3848 = vadd.f32 %v3846, %v3847
  %v3849 = vtanh.pop %v3848
  %v3850 = vmul.f32 %v3845, %v3849
  %v3851 = vmax.f32 %v3850, 0.0
  %s3852 = scalar_lea.vmem %s7, 8
  %3853 = vst [vmem:[%s3852] sm:$0xff] %v3851
  %v3854 = vld [vmem:[%s927] sm:$0xff]
  %v3855 = vld [vmem:[%s927 + $0x8] sm:$0xff]
  %v3856 = vld [vmem:[%s927 + $0x10] sm:$0xff]
  %v3857 = vld [vmem:[%s927 + $0x18] sm:$0xff]
  %v3858 = vpack.c.bf16 %v3850, %v3850
  %v3859 = vld [vmem:[%s5] sm:$0xff]
  %v3860 = vld [vmem:[%s5 + $0x8] sm:$0xff]
  %v3861 = vld [vmem:[%s5 + $0x10] sm:$0xff]
  %v3862 = vld [vmem:[%s5 + $0x18] sm:$0xff]
  %v3863 = vld [vmem:[%s5 + $0x20] sm:$0xff]
  %v3864 = vld [vmem:[%s5 + $0x28] sm:$0xff]
  %v3865 = vld [vmem:[%s5 + $0x30] sm:$0xff]
  %v3866 = vld [vmem:[%s5 + $0x38] sm:$0xff]
  %v3867 = vld [vmem:[%s5 + $0x40] sm:$0xff]
  %v3868 = vld [vmem:[%s5 + $0x48] sm:$0xff]
  %v3869 = vld [vmem:[%s5 + $0x50] sm:$0xff]
  %v3870 = vld [vmem:[%s5 + $0x58] sm:$0xff]
  %v3871 = vld [vmem:[%s5 + $0x60] sm:$0xff]
  %v3872 = vld [vmem:[%s5 + $0x68] sm:$0xff]
  %v3873 = vld [vmem:[%s5 + $0x70] sm:$0xff]
  %v3874 = vld [vmem:[%s5 + $0x78] sm:$0xff]
  %v3875 = vld [vmem:[%s5 + $0x80] sm:$0xff]
  %v3876 = vld [vmem:[%s5 + $0x88] sm:$0xff]
  %v3877 = vld [vmem:[%s5 + $0x90] sm:$0xff]
  %v3878 = vld [vmem:[%s5 + $0x98] sm:$0xff]
  %v3879 = vld [vmem:[%s5 + $0xa0] sm:$0xff]
  %v3880 = vld [vmem:[%s5 + $0xa8] sm:$0xff]
  %v3881 = vld [vmem:[%s5 + $0xb0] sm:$0xff]
  %v3882 = vld [vmem:[%s5 + $0xb8] sm:$0xff]
  %v3883 = vld [vmem:[%s5 + $0xc0] sm:$0xff]
  %v3884 = vld [vmem:[%s5 + $0xc8] sm:$0xff]
  %v3885 = vld [vmem:[%s5 + $0xd0] sm:$0xff]
  %v3886 = vld [vmem:[%s5 + $0xd8] sm:$0xff]
  %v3887 = vld [vmem:[%s5 + $0xe0] sm:$0xff]
  %v3888 = vld [vmem:[%s5 + $0xe8] sm:$0xff]
  %v3889 = vld [vmem:[%s5 + $0xf0] sm:$0xff]
  %v3890 = vld [vmem:[%s5 + $0xf8] sm:$0xff]
  %v3923 = vunpack.c.l.b16 %v3859
  %v3924 = vunpack.c.h.b16 %v3859
  %v3925 = vunpack.c.l.b16 %v3860
  %v3926 = vunpack.c.h.b16 %v3860
  %v3927 = vunpack.c.l.b16 %v3861
  %v3928 = vunpack.c.h.b16 %v3861
  %v3929 = vunpack.c.l.b16 %v3862
  %v3930 = vunpack.c.h.b16 %v3862
  %v3931 = vunpack.c.l.b16 %v3863
  %v3932 = vunpack.c.h.b16 %v3863
  %v3933 = vunpack.c.l.b16 %v3864
  %v3934 = vunpack.c.h.b16 %v3864
  %v3935 = vunpack.c.l.b16 %v3865
  %v3936 = vunpack.c.h.b16 %v3865
  %v3937 = vunpack.c.l.b16 %v3866
  %v3938 = vunpack.c.h.b16 %v3866
  %v3939 = vunpack.c.l.b16 %v3867
  %v3940 = vunpack.c.h.b16 %v3867
  %v3941 = vunpack.c.l.b16 %v3868
  %v3942 = vunpack.c.h.b16 %v3868
  %v3943 = vunpack.c.l.b16 %v3869
  %v3944 = vunpack.c.h.b16 %v3869
  %v3945 = vunpack.c.l.b16 %v3870
  %v3946 = vunpack.c.h.b16 %v3870
  %v3947 = vunpack.c.l.b16 %v3871
  %v3948 = vunpack.c.h.b16 %v3871
  %v3949 = vunpack.c.l.b16 %v3872
  %v3950 = vunpack.c.h.b16 %v3872
  %v3951 = vunpack.c.l.b16 %v3873
  %v3952 = vunpack.c.h.b16 %v3873
  %v3953 = vunpack.c.l.b16 %v3874
  %v3954 = vunpack.c.h.b16 %v3874
  %v3955 = vunpack.c.l.b16 %v3875
  %v3956 = vunpack.c.h.b16 %v3875
  %v3957 = vunpack.c.l.b16 %v3876
  %v3958 = vunpack.c.h.b16 %v3876
  %v3959 = vunpack.c.l.b16 %v3877
  %v3960 = vunpack.c.h.b16 %v3877
  %v3961 = vunpack.c.l.b16 %v3878
  %v3962 = vunpack.c.h.b16 %v3878
  %v3963 = vunpack.c.l.b16 %v3879
  %v3964 = vunpack.c.h.b16 %v3879
  %v3965 = vunpack.c.l.b16 %v3880
  %v3966 = vunpack.c.h.b16 %v3880
  %v3967 = vunpack.c.l.b16 %v3881
  %v3968 = vunpack.c.h.b16 %v3881
  %v3969 = vunpack.c.l.b16 %v3882
  %v3970 = vunpack.c.h.b16 %v3882
  %v3971 = vunpack.c.l.b16 %v3883
  %v3972 = vunpack.c.h.b16 %v3883
  %v3973 = vunpack.c.l.b16 %v3884
  %v3974 = vunpack.c.h.b16 %v3884
  %v3975 = vunpack.c.l.b16 %v3885
  %v3976 = vunpack.c.h.b16 %v3885
  %v3977 = vunpack.c.l.b16 %v3886
  %v3978 = vunpack.c.h.b16 %v3886
  %v3979 = vunpack.c.l.b16 %v3887
  %v3980 = vunpack.c.h.b16 %v3887
  %v3981 = vunpack.c.l.b16 %v3888
  %v3982 = vunpack.c.h.b16 %v3888
  %v3983 = vunpack.c.l.b16 %v3889
  %v3984 = vunpack.c.h.b16 %v3889
  %v3985 = vunpack.c.l.b16 %v3890
  %v3986 = vunpack.c.h.b16 %v3890
  %v3987 = vpack.c.b16 %v3927, %v3923
  %v3988 = vpack.c.b16 %v3928, %v3924
  %v3989 = vpack.c.b16 %v3929, %v3925
  %v3990 = vpack.c.b16 %v3930, %v3926
  %v3991 = vpack.c.b16 %v3935, %v3931
  %v3992 = vpack.c.b16 %v3936, %v3932
  %v3993 = vpack.c.b16 %v3937, %v3933
  %v3994 = vpack.c.b16 %v3938, %v3934
  %v3995 = vpack.c.b16 %v3943, %v3939
  %v3996 = vpack.c.b16 %v3944, %v3940
  %v3997 = vpack.c.b16 %v3945, %v3941
  %v3998 = vpack.c.b16 %v3946, %v3942
  %v3999 = vpack.c.b16 %v3951, %v3947
  %v4000 = vpack.c.b16 %v3952, %v3948
  %v4001 = vpack.c.b16 %v3953, %v3949
  %v4002 = vpack.c.b16 %v3954, %v3950
  %v4003 = vpack.c.b16 %v3959, %v3955
  %v4004 = vpack.c.b16 %v3960, %v3956
  %v4005 = vpack.c.b16 %v3961, %v3957
  %v4006 = vpack.c.b16 %v3962, %v3958
  %v4007 = vpack.c.b16 %v3967, %v3963
  %v4008 = vpack.c.b16 %v3968, %v3964
  %v4009 = vpack.c.b16 %v3969, %v3965
  %v4010 = vpack.c.b16 %v3970, %v3966
  %v4011 = vpack.c.b16 %v3975, %v3971
  %v4012 = vpack.c.b16 %v3976, %v3972
  %v4013 = vpack.c.b16 %v3977, %v3973
  %v4014 = vpack.c.b16 %v3978, %v3974
  %v4015 = vpack.c.b16 %v3983, %v3979
  %v4016 = vpack.c.b16 %v3984, %v3980
  %v4017 = vpack.c.b16 %v3985, %v3981
  %v4018 = vpack.c.b16 %v3986, %v3982
  %4051 = vmatpush.bf16.msra.mxu0 %v4015
  %4052 = vmatpush.bf16.msra.mxu0 %v4011
  %4053 = vmatpush.bf16.msra.mxu0 %v4007
  %4054 = vmatpush.bf16.msra.mxu0 %v4003
  %4055 = vmatpush.bf16.msra.mxu0 %v3999
  %4056 = vmatpush.bf16.msra.mxu0 %v3995
  %4057 = vmatpush.bf16.msra.mxu0 %v3991
  %4058 = vmatpush.bf16.msra.mxu0 %v3987
  %4059 = vmatmul.bf16.gmra.mxu0 %v3858
  %v4060 = vpop.f32.mrf.mxu0
  %v4061 = vadd.f32 0.0, %v4060
  %v4062 = vpop.f32.mrf.mxu0
  %4063 = vdwg.mxu0
  %4064 = vmatpush.bf16.msra.mxu0 %v4016
  %4065 = vmatpush.bf16.msra.mxu0 %v4012
  %4066 = vmatpush.bf16.msra.mxu0 %v4008
  %4067 = vmatpush.bf16.msra.mxu0 %v4004
  %4068 = vmatpush.bf16.msra.mxu0 %v4000
  %4069 = vmatpush.bf16.msra.mxu0 %v3996
  %4070 = vmatpush.bf16.msra.mxu0 %v3992
  %4071 = vmatpush.bf16.msra.mxu0 %v3988
  %4072 = vmatmul.bf16.gmra.mxu0 %v3858
  %v4073 = vpop.f32.mrf.mxu0
  %v4074 = vadd.f32 0.0, %v4073
  %v4075 = vpop.f32.mrf.mxu0
  %4076 = vdwg.mxu0
  %4077 = vmatpush.bf16.msra.mxu0 %v4017
  %4078 = vmatpush.bf16.msra.mxu0 %v4013
  %4079 = vmatpush.bf16.msra.mxu0 %v4009
  %4080 = vmatpush.bf16.msra.mxu0 %v4005
  %4081 = vmatpush.bf16.msra.mxu0 %v4001
  %4082 = vmatpush.bf16.msra.mxu0 %v3997
  %4083 = vmatpush.bf16.msra.mxu0 %v3993
  %4084 = vmatpush.bf16.msra.mxu0 %v3989
  %4085 = vmatmul.bf16.gmra.mxu0 %v3858
  %v4086 = vpop.f32.mrf.mxu0
  %v4087 = vadd.f32 0.0, %v4086
  %v4088 = vpop.f32.mrf.mxu0
  %4089 = vdwg.mxu0
  %4090 = vmatpush.bf16.msra.mxu0 %v4018
  %4091 = vmatpush.bf16.msra.mxu0 %v4014
  %4092 = vmatpush.bf16.msra.mxu0 %v4010
  %4093 = vmatpush.bf16.msra.mxu0 %v4006
  %4094 = vmatpush.bf16.msra.mxu0 %v4002
  %4095 = vmatpush.bf16.msra.mxu0 %v3998
  %4096 = vmatpush.bf16.msra.mxu0 %v3994
  %4097 = vmatpush.bf16.msra.mxu0 %v3990
  %4098 = vmatmul.bf16.gmra.mxu0 %v3858
  %v4099 = vpop.f32.mrf.mxu0
  %v4100 = vadd.f32 0.0, %v4099
  %v4101 = vpop.f32.mrf.mxu0
  %4102 = vdwg.mxu0
  %v4103 = vadd.f32 %v3854, %v4061
  %v4104 = vadd.f32 %v3855, %v4074
  %v4105 = vadd.f32 %v3856, %v4087
  %v4106 = vadd.f32 %v3857, %v4100
  %v4107 = vxor.u32 %v4103, 2147483648
  %v4108 = vmul.f32 %v4107, 1.442695
  %v4109 = vpow.pop %v4108
  %v4110 = vadd.f32 %v4109, 1.0
  %v4111 = vrcp.pop %v4110
  %v4112 = vmul.f32 %v4110, %v4111
  %v4113 = vsub.f32 1.0, %v4112
  %v4114 = vmul.f32 %v4111, %v4113
  %v4115 = vadd.f32 %v4111, %v4114
  %vm4116 = vweird.f32 %v4110
  %vm4117 = vweird.f32 %v4111
  %vm4118 = vmor %vm4116, %vm4117
  %v4119 = vsel %vm4118, %v4111, %v4115
  %v4120 = vand.u32 2147483647, %v4110
  %vm4121 = vcmp.eq.f32.partialorder %v4120, 8.507059e+37
  %v4122 = vand.u32 %v4110, 2147483648
  %v4123 = vor.u32 1.1754944e-38, %v4122
  %v4124 = vsel %vm4121, %v4123, %v4119
  %v4125 = vmul.f32 1.0, %v4124
  %v4126 = vxor.u32 %v4104, 2147483648
  %v4127 = vmul.f32 %v4126, 1.442695
  %v4128 = vpow.pop %v4127
  %v4129 = vadd.f32 %v4128, 1.0
  %v4130 = vrcp.pop %v4129
  %v4131 = vmul.f32 %v4129, %v4130
  %v4132 = vsub.f32 1.0, %v4131
  %v4133 = vmul.f32 %v4130, %v4132
  %v4134 = vadd.f32 %v4130, %v4133
  %vm4135 = vweird.f32 %v4129
  %vm4136 = vweird.f32 %v4130
  %vm4137 = vmor %vm4135, %vm4136
  %v4138 = vsel %vm4137, %v4130, %v4134
  %v4139 = vand.u32 2147483647, %v4129
  %vm4140 = vcmp.eq.f32.partialorder %v4139, 8.507059e+37
  %v4141 = vand.u32 %v4129, 2147483648
  %v4142 = vor.u32 1.1754944e-38, %v4141
  %v4143 = vsel %vm4140, %v4142, %v4138
  %v4144 = vmul.f32 1.0, %v4143
  %v4145 = vtanh.pop %v4105
  %v4146 = vxor.u32 %v4106, 2147483648
  %v4147 = vmul.f32 %v4146, 1.442695
  %v4148 = vpow.pop %v4147
  %v4149 = vadd.f32 %v4148, 1.0
  %v4150 = vrcp.pop %v4149
  %v4151 = vmul.f32 %v4149, %v4150
  %v4152 = vsub.f32 1.0, %v4151
  %v4153 = vmul.f32 %v4150, %v4152
  %v4154 = vadd.f32 %v4150, %v4153
  %vm4155 = vweird.f32 %v4149
  %vm4156 = vweird.f32 %v4150
  %vm4157 = vmor %vm4155, %vm4156
  %v4158 = vsel %vm4157, %v4150, %v4154
  %v4159 = vand.u32 2147483647, %v4149
  %vm4160 = vcmp.eq.f32.partialorder %v4159, 8.507059e+37
  %v4161 = vand.u32 %v4149, 2147483648
  %v4162 = vor.u32 1.1754944e-38, %v4161
  %v4163 = vsel %vm4160, %v4162, %v4158
  %v4164 = vmul.f32 1.0, %v4163
  %v4165 = vmul.f32 %v4144, %v3848
  %v4166 = vmul.f32 %v4125, %v4145
  %v4167 = vadd.f32 %v4165, %v4166
  %v4168 = vtanh.pop %v4167
  %v4169 = vmul.f32 %v4164, %v4168
  %v4170 = vmax.f32 %v4169, 0.0
  %s4171 = scalar_lea.vmem %s7, 16
  %4172 = vst [vmem:[%s4171] sm:$0xff] %v4170
  %v4173 = vld [vmem:[%s1248] sm:$0xff]
  %v4174 = vld [vmem:[%s1248 + $0x8] sm:$0xff]
  %v4175 = vld [vmem:[%s1248 + $0x10] sm:$0xff]
  %v4176 = vld [vmem:[%s1248 + $0x18] sm:$0xff]
  %v4177 = vpack.c.bf16 %v4169, %v4169
  %v4178 = vld [vmem:[%s5] sm:$0xff]
  %v4179 = vld [vmem:[%s5 + $0x8] sm:$0xff]
  %v4180 = vld [vmem:[%s5 + $0x10] sm:$0xff]
  %v4181 = vld [vmem:[%s5 + $0x18] sm:$0xff]
  %v4182 = vld [vmem:[%s5 + $0x20] sm:$0xff]
  %v4183 = vld [vmem:[%s5 + $0x28] sm:$0xff]
  %v4184 = vld [vmem:[%s5 + $0x30] sm:$0xff]
  %v4185 = vld [vmem:[%s5 + $0x38] sm:$0xff]
  %v4186 = vld [vmem:[%s5 + $0x40] sm:$0xff]
  %v4187 = vld [vmem:[%s5 + $0x48] sm:$0xff]
  %v4188 = vld [vmem:[%s5 + $0x50] sm:$0xff]
  %v4189 = vld [vmem:[%s5 + $0x58] sm:$0xff]
  %v4190 = vld [vmem:[%s5 + $0x60] sm:$0xff]
  %v4191 = vld [vmem:[%s5 + $0x68] sm:$0xff]
  %v4192 = vld [vmem:[%s5 + $0x70] sm:$0xff]
  %v4193 = vld [vmem:[%s5 + $0x78] sm:$0xff]
  %v4194 = vld [vmem:[%s5 + $0x80] sm:$0xff]
  %v4195 = vld [vmem:[%s5 + $0x88] sm:$0xff]
  %v4196 = vld [vmem:[%s5 + $0x90] sm:$0xff]
  %v4197 = vld [vmem:[%s5 + $0x98] sm:$0xff]
  %v4198 = vld [vmem:[%s5 + $0xa0] sm:$0xff]
  %v4199 = vld [vmem:[%s5 + $0xa8] sm:$0xff]
  %v4200 = vld [vmem:[%s5 + $0xb0] sm:$0xff]
  %v4201 = vld [vmem:[%s5 + $0xb8] sm:$0xff]
  %v4202 = vld [vmem:[%s5 + $0xc0] sm:$0xff]
  %v4203 = vld [vmem:[%s5 + $0xc8] sm:$0xff]
  %v4204 = vld [vmem:[%s5 + $0xd0] sm:$0xff]
  %v4205 = vld [vmem:[%s5 + $0xd8] sm:$0xff]
  %v4206 = vld [vmem:[%s5 + $0xe0] sm:$0xff]
  %v4207 = vld [vmem:[%s5 + $0xe8] sm:$0xff]
  %v4208 = vld [vmem:[%s5 + $0xf0] sm:$0xff]
  %v4209 = vld [vmem:[%s5 + $0xf8] sm:$0xff]
  %v4242 = vunpack.c.l.b16 %v4178
  %v4243 = vunpack.c.h.b16 %v4178
  %v4244 = vunpack.c.l.b16 %v4179
  %v4245 = vunpack.c.h.b16 %v4179
  %v4246 = vunpack.c.l.b16 %v4180
  %v4247 = vunpack.c.h.b16 %v4180
  %v4248 = vunpack.c.l.b16 %v4181
  %v4249 = vunpack.c.h.b16 %v4181
  %v4250 = vunpack.c.l.b16 %v4182
  %v4251 = vunpack.c.h.b16 %v4182
  %v4252 = vunpack.c.l.b16 %v4183
  %v4253 = vunpack.c.h.b16 %v4183
  %v4254 = vunpack.c.l.b16 %v4184
  %v4255 = vunpack.c.h.b16 %v4184
  %v4256 = vunpack.c.l.b16 %v4185
  %v4257 = vunpack.c.h.b16 %v4185
  %v4258 = vunpack.c.l.b16 %v4186
  %v4259 = vunpack.c.h.b16 %v4186
  %v4260 = vunpack.c.l.b16 %v4187
  %v4261 = vunpack.c.h.b16 %v4187
  %v4262 = vunpack.c.l.b16 %v4188
  %v4263 = vunpack.c.h.b16 %v4188
  %v4264 = vunpack.c.l.b16 %v4189
  %v4265 = vunpack.c.h.b16 %v4189
  %v4266 = vunpack.c.l.b16 %v4190
  %v4267 = vunpack.c.h.b16 %v4190
  %v4268 = vunpack.c.l.b16 %v4191
  %v4269 = vunpack.c.h.b16 %v4191
  %v4270 = vunpack.c.l.b16 %v4192
  %v4271 = vunpack.c.h.b16 %v4192
  %v4272 = vunpack.c.l.b16 %v4193
  %v4273 = vunpack.c.h.b16 %v4193
  %v4274 = vunpack.c.l.b16 %v4194
  %v4275 = vunpack.c.h.b16 %v4194
  %v4276 = vunpack.c.l.b16 %v4195
  %v4277 = vunpack.c.h.b16 %v4195
  %v4278 = vunpack.c.l.b16 %v4196
  %v4279 = vunpack.c.h.b16 %v4196
  %v4280 = vunpack.c.l.b16 %v4197
  %v4281 = vunpack.c.h.b16 %v4197
  %v4282 = vunpack.c.l.b16 %v4198
  %v4283 = vunpack.c.h.b16 %v4198
  %v4284 = vunpack.c.l.b16 %v4199
  %v4285 = vunpack.c.h.b16 %v4199
  %v4286 = vunpack.c.l.b16 %v4200
  %v4287 = vunpack.c.h.b16 %v4200
  %v4288 = vunpack.c.l.b16 %v4201
  %v4289 = vunpack.c.h.b16 %v4201
  %v4290 = vunpack.c.l.b16 %v4202
  %v4291 = vunpack.c.h.b16 %v4202
  %v4292 = vunpack.c.l.b16 %v4203
  %v4293 = vunpack.c.h.b16 %v4203
  %v4294 = vunpack.c.l.b16 %v4204
  %v4295 = vunpack.c.h.b16 %v4204
  %v4296 = vunpack.c.l.b16 %v4205
  %v4297 = vunpack.c.h.b16 %v4205
  %v4298 = vunpack.c.l.b16 %v4206
  %v4299 = vunpack.c.h.b16 %v4206
  %v4300 = vunpack.c.l.b16 %v4207
  %v4301 = vunpack.c.h.b16 %v4207
  %v4302 = vunpack.c.l.b16 %v4208
  %v4303 = vunpack.c.h.b16 %v4208
  %v4304 = vunpack.c.l.b16 %v4209
  %v4305 = vunpack.c.h.b16 %v4209
  %v4306 = vpack.c.b16 %v4246, %v4242
  %v4307 = vpack.c.b16 %v4247, %v4243
  %v4308 = vpack.c.b16 %v4248, %v4244
  %v4309 = vpack.c.b16 %v4249, %v4245
  %v4310 = vpack.c.b16 %v4254, %v4250
  %v4311 = vpack.c.b16 %v4255, %v4251
  %v4312 = vpack.c.b16 %v4256, %v4252
  %v4313 = vpack.c.b16 %v4257, %v4253
  %v4314 = vpack.c.b16 %v4262, %v4258
  %v4315 = vpack.c.b16 %v4263, %v4259
  %v4316 = vpack.c.b16 %v4264, %v4260
  %v4317 = vpack.c.b16 %v4265, %v4261
  %v4318 = vpack.c.b16 %v4270, %v4266
  %v4319 = vpack.c.b16 %v4271, %v4267
  %v4320 = vpack.c.b16 %v4272, %v4268
  %v4321 = vpack.c.b16 %v4273, %v4269
  %v4322 = vpack.c.b16 %v4278, %v4274
  %v4323 = vpack.c.b16 %v4279, %v4275
  %v4324 = vpack.c.b16 %v4280, %v4276
  %v4325 = vpack.c.b16 %v4281, %v4277
  %v4326 = vpack.c.b16 %v4286, %v4282
  %v4327 = vpack.c.b16 %v4287, %v4283
  %v4328 = vpack.c.b16 %v4288, %v4284
  %v4329 = vpack.c.b16 %v4289, %v4285
  %v4330 = vpack.c.b16 %v4294, %v4290
  %v4331 = vpack.c.b16 %v4295, %v4291
  %v4332 = vpack.c.b16 %v4296, %v4292
  %v4333 = vpack.c.b16 %v4297, %v4293
  %v4334 = vpack.c.b16 %v4302, %v4298
  %v4335 = vpack.c.b16 %v4303, %v4299
  %v4336 = vpack.c.b16 %v4304, %v4300
  %v4337 = vpack.c.b16 %v4305, %v4301
  %4370 = vmatpush.bf16.msra.mxu0 %v4334
  %4371 = vmatpush.bf16.msra.mxu0 %v4330
  %4372 = vmatpush.bf16.msra.mxu0 %v4326
  %4373 = vmatpush.bf16.msra.mxu0 %v4322
  %4374 = vmatpush.bf16.msra.mxu0 %v4318
  %4375 = vmatpush.bf16.msra.mxu0 %v4314
  %4376 = vmatpush.bf16.msra.mxu0 %v4310
  %4377 = vmatpush.bf16.msra.mxu0 %v4306
  %4378 = vmatmul.bf16.gmra.mxu0 %v4177
  %v4379 = vpop.f32.mrf.mxu0
  %v4380 = vadd.f32 0.0, %v4379
  %v4381 = vpop.f32.mrf.mxu0
  %4382 = vdwg.mxu0
  %4383 = vmatpush.bf16.msra.mxu0 %v4335
  %4384 = vmatpush.bf16.msra.mxu0 %v4331
  %4385 = vmatpush.bf16.msra.mxu0 %v4327
  %4386 = vmatpush.bf16.msra.mxu0 %v4323
  %4387 = vmatpush.bf16.msra.mxu0 %v4319
  %4388 = vmatpush.bf16.msra.mxu0 %v4315
  %4389 = vmatpush.bf16.msra.mxu0 %v4311
  %4390 = vmatpush.bf16.msra.mxu0 %v4307
  %4391 = vmatmul.bf16.gmra.mxu0 %v4177
  %v4392 = vpop.f32.mrf.mxu0
  %v4393 = vadd.f32 0.0, %v4392
  %v4394 = vpop.f32.mrf.mxu0
  %4395 = vdwg.mxu0
  %4396 = vmatpush.bf16.msra.mxu0 %v4336
  %4397 = vmatpush.bf16.msra.mxu0 %v4332
  %4398 = vmatpush.bf16.msra.mxu0 %v4328
  %4399 = vmatpush.bf16.msra.mxu0 %v4324
  %4400 = vmatpush.bf16.msra.mxu0 %v4320
  %4401 = vmatpush.bf16.msra.mxu0 %v4316
  %4402 = vmatpush.bf16.msra.mxu0 %v4312
  %4403 = vmatpush.bf16.msra.mxu0 %v4308
  %4404 = vmatmul.bf16.gmra.mxu0 %v4177
  %v4405 = vpop.f32.mrf.mxu0
  %v4406 = vadd.f32 0.0, %v4405
  %v4407 = vpop.f32.mrf.mxu0
  %4408 = vdwg.mxu0
  %4409 = vmatpush.bf16.msra.mxu0 %v4337
  %4410 = vmatpush.bf16.msra.mxu0 %v4333
  %4411 = vmatpush.bf16.msra.mxu0 %v4329
  %4412 = vmatpush.bf16.msra.mxu0 %v4325
  %4413 = vmatpush.bf16.msra.mxu0 %v4321
  %4414 = vmatpush.bf16.msra.mxu0 %v4317
  %4415 = vmatpush.bf16.msra.mxu0 %v4313
  %4416 = vmatpush.bf16.msra.mxu0 %v4309
  %4417 = vmatmul.bf16.gmra.mxu0 %v4177
  %v4418 = vpop.f32.mrf.mxu0
  %v4419 = vadd.f32 0.0, %v4418
  %v4420 = vpop.f32.mrf.mxu0
  %4421 = vdwg.mxu0
  %v4422 = vadd.f32 %v4173, %v4380
  %v4423 = vadd.f32 %v4174, %v4393
  %v4424 = vadd.f32 %v4175, %v4406
  %v4425 = vadd.f32 %v4176, %v4419
  %v4426 = vxor.u32 %v4422, 2147483648
  %v4427 = vmul.f32 %v4426, 1.442695
  %v4428 = vpow.pop %v4427
  %v4429 = vadd.f32 %v4428, 1.0
  %v4430 = vrcp.pop %v4429
  %v4431 = vmul.f32 %v4429, %v4430
  %v4432 = vsub.f32 1.0, %v4431
  %v4433 = vmul.f32 %v4430, %v4432
  %v4434 = vadd.f32 %v4430, %v4433
  %vm4435 = vweird.f32 %v4429
  %vm4436 = vweird.f32 %v4430
  %vm4437 = vmor %vm4435, %vm4436
  %v4438 = vsel %vm4437, %v4430, %v4434
  %v4439 = vand.u32 2147483647, %v4429
  %vm4440 = vcmp.eq.f32.partialorder %v4439, 8.507059e+37
  %v4441 = vand.u32 %v4429, 2147483648
  %v4442 = vor.u32 1.1754944e-38, %v4441
  %v4443 = vsel %vm4440, %v4442, %v4438
  %v4444 = vmul.f32 1.0, %v4443
  %v4445 = vxor.u32 %v4423, 2147483648
  %v4446 = vmul.f32 %v4445, 1.442695
  %v4447 = vpow.pop %v4446
  %v4448 = vadd.f32 %v4447, 1.0
  %v4449 = vrcp.pop %v4448
  %v4450 = vmul.f32 %v4448, %v4449
  %v4451 = vsub.f32 1.0, %v4450
  %v4452 = vmul.f32 %v4449, %v4451
  %v4453 = vadd.f32 %v4449, %v4452
  %vm4454 = vweird.f32 %v4448
  %vm4455 = vweird.f32 %v4449
  %vm4456 = vmor %vm4454, %vm4455
  %v4457 = vsel %vm4456, %v4449, %v4453
  %v4458 = vand.u32 2147483647, %v4448
  %vm4459 = vcmp.eq.f32.partialorder %v4458, 8.507059e+37
  %v4460 = vand.u32 %v4448, 2147483648
  %v4461 = vor.u32 1.1754944e-38, %v4460
  %v4462 = vsel %vm4459, %v4461, %v4457
  %v4463 = vmul.f32 1.0, %v4462
  %v4464 = vtanh.pop %v4424
  %v4465 = vxor.u32 %v4425, 2147483648
  %v4466 = vmul.f32 %v4465, 1.442695
  %v4467 = vpow.pop %v4466
  %v4468 = vadd.f32 %v4467, 1.0
  %v4469 = vrcp.pop %v4468
  %v4470 = vmul.f32 %v4468, %v4469
  %v4471 = vsub.f32 1.0, %v4470
  %v4472 = vmul.f32 %v4469, %v4471
  %v4473 = vadd.f32 %v4469, %v4472
  %vm4474 = vweird.f32 %v4468
  %vm4475 = vweird.f32 %v4469
  %vm4476 = vmor %vm4474, %vm4475
  %v4477 = vsel %vm4476, %v4469, %v4473
  %v4478 = vand.u32 2147483647, %v4468
  %vm4479 = vcmp.eq.f32.partialorder %v4478, 8.507059e+37
  %v4480 = vand.u32 %v4468, 2147483648
  %v4481 = vor.u32 1.1754944e-38, %v4480
  %v4482 = vsel %vm4479, %v4481, %v4477
  %v4483 = vmul.f32 1.0, %v4482
  %v4484 = vmul.f32 %v4463, %v4167
  %v4485 = vmul.f32 %v4444, %v4464
  %v4486 = vadd.f32 %v4484, %v4485
  %v4487 = vtanh.pop %v4486
  %v4488 = vmul.f32 %v4483, %v4487
  %v4489 = vmax.f32 %v4488, 0.0
  %s4490 = scalar_lea.vmem %s7, 24
  %4491 = vst [vmem:[%s4490] sm:$0xff] %v4489
  %v4492 = vld [vmem:[%s1569] sm:$0xff]
  %v4493 = vld [vmem:[%s1569 + $0x8] sm:$0xff]
  %v4494 = vld [vmem:[%s1569 + $0x10] sm:$0xff]
  %v4495 = vld [vmem:[%s1569 + $0x18] sm:$0xff]
  %v4496 = vpack.c.bf16 %v4488, %v4488
  %v4497 = vld [vmem:[%s5] sm:$0xff]
  %v4498 = vld [vmem:[%s5 + $0x8] sm:$0xff]
  %v4499 = vld [vmem:[%s5 + $0x10] sm:$0xff]
  %v4500 = vld [vmem:[%s5 + $0x18] sm:$0xff]
  %v4501 = vld [vmem:[%s5 + $0x20] sm:$0xff]
  %v4502 = vld [vmem:[%s5 + $0x28] sm:$0xff]
  %v4503 = vld [vmem:[%s5 + $0x30] sm:$0xff]
  %v4504 = vld [vmem:[%s5 + $0x38] sm:$0xff]
  %v4505 = vld [vmem:[%s5 + $0x40] sm:$0xff]
  %v4506 = vld [vmem:[%s5 + $0x48] sm:$0xff]
  %v4507 = vld [vmem:[%s5 + $0x50] sm:$0xff]
  %v4508 = vld [vmem:[%s5 + $0x58] sm:$0xff]
  %v4509 = vld [vmem:[%s5 + $0x60] sm:$0xff]
  %v4510 = vld [vmem:[%s5 + $0x68] sm:$0xff]
  %v4511 = vld [vmem:[%s5 + $0x70] sm:$0xff]
  %v4512 = vld [vmem:[%s5 + $0x78] sm:$0xff]
  %v4513 = vld [vmem:[%s5 + $0x80] sm:$0xff]
  %v4514 = vld [vmem:[%s5 + $0x88] sm:$0xff]
  %v4515 = vld [vmem:[%s5 + $0x90] sm:$0xff]
  %v4516 = vld [vmem:[%s5 + $0x98] sm:$0xff]
  %v4517 = vld [vmem:[%s5 + $0xa0] sm:$0xff]
  %v4518 = vld [vmem:[%s5 + $0xa8] sm:$0xff]
  %v4519 = vld [vmem:[%s5 + $0xb0] sm:$0xff]
  %v4520 = vld [vmem:[%s5 + $0xb8] sm:$0xff]
  %v4521 = vld [vmem:[%s5 + $0xc0] sm:$0xff]
  %v4522 = vld [vmem:[%s5 + $0xc8] sm:$0xff]
  %v4523 = vld [vmem:[%s5 + $0xd0] sm:$0xff]
  %v4524 = vld [vmem:[%s5 + $0xd8] sm:$0xff]
  %v4525 = vld [vmem:[%s5 + $0xe0] sm:$0xff]
  %v4526 = vld [vmem:[%s5 + $0xe8] sm:$0xff]
  %v4527 = vld [vmem:[%s5 + $0xf0] sm:$0xff]
  %v4528 = vld [vmem:[%s5 + $0xf8] sm:$0xff]
  %v4561 = vunpack.c.l.b16 %v4497
  %v4562 = vunpack.c.h.b16 %v4497
  %v4563 = vunpack.c.l.b16 %v4498
  %v4564 = vunpack.c.h.b16 %v4498
  %v4565 = vunpack.c.l.b16 %v4499
  %v4566 = vunpack.c.h.b16 %v4499
  %v4567 = vunpack.c.l.b16 %v4500
  %v4568 = vunpack.c.h.b16 %v4500
  %v4569 = vunpack.c.l.b16 %v4501
  %v4570 = vunpack.c.h.b16 %v4501
  %v4571 = vunpack.c.l.b16 %v4502
  %v4572 = vunpack.c.h.b16 %v4502
  %v4573 = vunpack.c.l.b16 %v4503
  %v4574 = vunpack.c.h.b16 %v4503
  %v4575 = vunpack.c.l.b16 %v4504
  %v4576 = vunpack.c.h.b16 %v4504
  %v4577 = vunpack.c.l.b16 %v4505
  %v4578 = vunpack.c.h.b16 %v4505
  %v4579 = vunpack.c.l.b16 %v4506
  %v4580 = vunpack.c.h.b16 %v4506
  %v4581 = vunpack.c.l.b16 %v4507
  %v4582 = vunpack.c.h.b16 %v4507
  %v4583 = vunpack.c.l.b16 %v4508
  %v4584 = vunpack.c.h.b16 %v4508
  %v4585 = vunpack.c.l.b16 %v4509
  %v4586 = vunpack.c.h.b16 %v4509
  %v4587 = vunpack.c.l.b16 %v4510
  %v4588 = vunpack.c.h.b16 %v4510
  %v4589 = vunpack.c.l.b16 %v4511
  %v4590 = vunpack.c.h.b16 %v4511
  %v4591 = vunpack.c.l.b16 %v4512
  %v4592 = vunpack.c.h.b16 %v4512
  %v4593 = vunpack.c.l.b16 %v4513
  %v4594 = vunpack.c.h.b16 %v4513
  %v4595 = vunpack.c.l.b16 %v4514
  %v4596 = vunpack.c.h.b16 %v4514
  %v4597 = vunpack.c.l.b16 %v4515
  %v4598 = vunpack.c.h.b16 %v4515
  %v4599 = vunpack.c.l.b16 %v4516
  %v4600 = vunpack.c.h.b16 %v4516
  %v4601 = vunpack.c.l.b16 %v4517
  %v4602 = vunpack.c.h.b16 %v4517
  %v4603 = vunpack.c.l.b16 %v4518
  %v4604 = vunpack.c.h.b16 %v4518
  %v4605 = vunpack.c.l.b16 %v4519
  %v4606 = vunpack.c.h.b16 %v4519
  %v4607 = vunpack.c.l.b16 %v4520
  %v4608 = vunpack.c.h.b16 %v4520
  %v4609 = vunpack.c.l.b16 %v4521
  %v4610 = vunpack.c.h.b16 %v4521
  %v4611 = vunpack.c.l.b16 %v4522
  %v4612 = vunpack.c.h.b16 %v4522
  %v4613 = vunpack.c.l.b16 %v4523
  %v4614 = vunpack.c.h.b16 %v4523
  %v4615 = vunpack.c.l.b16 %v4524
  %v4616 = vunpack.c.h.b16 %v4524
  %v4617 = vunpack.c.l.b16 %v4525
  %v4618 = vunpack.c.h.b16 %v4525
  %v4619 = vunpack.c.l.b16 %v4526
  %v4620 = vunpack.c.h.b16 %v4526
  %v4621 = vunpack.c.l.b16 %v4527
  %v4622 = vunpack.c.h.b16 %v4527
  %v4623 = vunpack.c.l.b16 %v4528
  %v4624 = vunpack.c.h.b16 %v4528
  %v4625 = vpack.c.b16 %v4565, %v4561
  %v4626 = vpack.c.b16 %v4566, %v4562
  %v4627 = vpack.c.b16 %v4567, %v4563
  %v4628 = vpack.c.b16 %v4568, %v4564
  %v4629 = vpack.c.b16 %v4573, %v4569
  %v4630 = vpack.c.b16 %v4574, %v4570
  %v4631 = vpack.c.b16 %v4575, %v4571
  %v4632 = vpack.c.b16 %v4576, %v4572
  %v4633 = vpack.c.b16 %v4581, %v4577
  %v4634 = vpack.c.b16 %v4582, %v4578
  %v4635 = vpack.c.b16 %v4583, %v4579
  %v4636 = vpack.c.b16 %v4584, %v4580
  %v4637 = vpack.c.b16 %v4589, %v4585
  %v4638 = vpack.c.b16 %v4590, %v4586
  %v4639 = vpack.c.b16 %v4591, %v4587
  %v4640 = vpack.c.b16 %v4592, %v4588
  %v4641 = vpack.c.b16 %v4597, %v4593
  %v4642 = vpack.c.b16 %v4598, %v4594
  %v4643 = vpack.c.b16 %v4599, %v4595
  %v4644 = vpack.c.b16 %v4600, %v4596
  %v4645 = vpack.c.b16 %v4605, %v4601
  %v4646 = vpack.c.b16 %v4606, %v4602
  %v4647 = vpack.c.b16 %v4607, %v4603
  %v4648 = vpack.c.b16 %v4608, %v4604
  %v4649 = vpack.c.b16 %v4613, %v4609
  %v4650 = vpack.c.b16 %v4614, %v4610
  %v4651 = vpack.c.b16 %v4615, %v4611
  %v4652 = vpack.c.b16 %v4616, %v4612
  %v4653 = vpack.c.b16 %v4621, %v4617
  %v4654 = vpack.c.b16 %v4622, %v4618
  %v4655 = vpack.c.b16 %v4623, %v4619
  %v4656 = vpack.c.b16 %v4624, %v4620
  %4689 = vmatpush.bf16.msra.mxu0 %v4653
  %4690 = vmatpush.bf16.msra.mxu0 %v4649
  %4691 = vmatpush.bf16.msra.mxu0 %v4645
  %4692 = vmatpush.bf16.msra.mxu0 %v4641
  %4693 = vmatpush.bf16.msra.mxu0 %v4637
  %4694 = vmatpush.bf16.msra.mxu0 %v4633
  %4695 = vmatpush.bf16.msra.mxu0 %v4629
  %4696 = vmatpush.bf16.msra.mxu0 %v4625
  %4697 = vmatmul.bf16.gmra.mxu0 %v4496
  %v4698 = vpop.f32.mrf.mxu0
  %v4699 = vadd.f32 0.0, %v4698
  %v4700 = vpop.f32.mrf.mxu0
  %4701 = vdwg.mxu0
  %4702 = vmatpush.bf16.msra.mxu0 %v4654
  %4703 = vmatpush.bf16.msra.mxu0 %v4650
  %4704 = vmatpush.bf16.msra.mxu0 %v4646
  %4705 = vmatpush.bf16.msra.mxu0 %v4642
  %4706 = vmatpush.bf16.msra.mxu0 %v4638
  %4707 = vmatpush.bf16.msra.mxu0 %v4634
  %4708 = vmatpush.bf16.msra.mxu0 %v4630
  %4709 = vmatpush.bf16.msra.mxu0 %v4626
  %4710 = vmatmul.bf16.gmra.mxu0 %v4496
  %v4711 = vpop.f32.mrf.mxu0
  %v4712 = vadd.f32 0.0, %v4711
  %v4713 = vpop.f32.mrf.mxu0
  %4714 = vdwg.mxu0
  %4715 = vmatpush.bf16.msra.mxu0 %v4655
  %4716 = vmatpush.bf16.msra.mxu0 %v4651
  %4717 = vmatpush.bf16.msra.mxu0 %v4647
  %4718 = vmatpush.bf16.msra.mxu0 %v4643
  %4719 = vmatpush.bf16.msra.mxu0 %v4639
  %4720 = vmatpush.bf16.msra.mxu0 %v4635
  %4721 = vmatpush.bf16.msra.mxu0 %v4631
  %4722 = vmatpush.bf16.msra.mxu0 %v4627
  %4723 = vmatmul.bf16.gmra.mxu0 %v4496
  %v4724 = vpop.f32.mrf.mxu0
  %v4725 = vadd.f32 0.0, %v4724
  %v4726 = vpop.f32.mrf.mxu0
  %4727 = vdwg.mxu0
  %4728 = vmatpush.bf16.msra.mxu0 %v4656
  %4729 = vmatpush.bf16.msra.mxu0 %v4652
  %4730 = vmatpush.bf16.msra.mxu0 %v4648
  %4731 = vmatpush.bf16.msra.mxu0 %v4644
  %4732 = vmatpush.bf16.msra.mxu0 %v4640
  %4733 = vmatpush.bf16.msra.mxu0 %v4636
  %4734 = vmatpush.bf16.msra.mxu0 %v4632
  %4735 = vmatpush.bf16.msra.mxu0 %v4628
  %4736 = vmatmul.bf16.gmra.mxu0 %v4496
  %v4737 = vpop.f32.mrf.mxu0
  %v4738 = vadd.f32 0.0, %v4737
  %v4739 = vpop.f32.mrf.mxu0
  %4740 = vdwg.mxu0
  %v4741 = vadd.f32 %v4492, %v4699
  %v4742 = vadd.f32 %v4493, %v4712
  %v4743 = vadd.f32 %v4494, %v4725
  %v4744 = vadd.f32 %v4495, %v4738
  %v4745 = vxor.u32 %v4741, 2147483648
  %v4746 = vmul.f32 %v4745, 1.442695
  %v4747 = vpow.pop %v4746
  %v4748 = vadd.f32 %v4747, 1.0
  %v4749 = vrcp.pop %v4748
  %v4750 = vmul.f32 %v4748, %v4749
  %v4751 = vsub.f32 1.0, %v4750
  %v4752 = vmul.f32 %v4749, %v4751
  %v4753 = vadd.f32 %v4749, %v4752
  %vm4754 = vweird.f32 %v4748
  %vm4755 = vweird.f32 %v4749
  %vm4756 = vmor %vm4754, %vm4755
  %v4757 = vsel %vm4756, %v4749, %v4753
  %v4758 = vand.u32 2147483647, %v4748
  %vm4759 = vcmp.eq.f32.partialorder %v4758, 8.507059e+37
  %v4760 = vand.u32 %v4748, 2147483648
  %v4761 = vor.u32 1.1754944e-38, %v4760
  %v4762 = vsel %vm4759, %v4761, %v4757
  %v4763 = vmul.f32 1.0, %v4762
  %v4764 = vxor.u32 %v4742, 2147483648
  %v4765 = vmul.f32 %v4764, 1.442695
  %v4766 = vpow.pop %v4765
  %v4767 = vadd.f32 %v4766, 1.0
  %v4768 = vrcp.pop %v4767
  %v4769 = vmul.f32 %v4767, %v4768
  %v4770 = vsub.f32 1.0, %v4769
  %v4771 = vmul.f32 %v4768, %v4770
  %v4772 = vadd.f32 %v4768, %v4771
  %vm4773 = vweird.f32 %v4767
  %vm4774 = vweird.f32 %v4768
  %vm4775 = vmor %vm4773, %vm4774
  %v4776 = vsel %vm4775, %v4768, %v4772
  %v4777 = vand.u32 2147483647, %v4767
  %vm4778 = vcmp.eq.f32.partialorder %v4777, 8.507059e+37
  %v4779 = vand.u32 %v4767, 2147483648
  %v4780 = vor.u32 1.1754944e-38, %v4779
  %v4781 = vsel %vm4778, %v4780, %v4776
  %v4782 = vmul.f32 1.0, %v4781
  %v4783 = vtanh.pop %v4743
  %v4784 = vxor.u32 %v4744, 2147483648
  %v4785 = vmul.f32 %v4784, 1.442695
  %v4786 = vpow.pop %v4785
  %v4787 = vadd.f32 %v4786, 1.0
  %v4788 = vrcp.pop %v4787
  %v4789 = vmul.f32 %v4787, %v4788
  %v4790 = vsub.f32 1.0, %v4789
  %v4791 = vmul.f32 %v4788, %v4790
  %v4792 = vadd.f32 %v4788, %v4791
  %vm4793 = vweird.f32 %v4787
  %vm4794 = vweird.f32 %v4788
  %vm4795 = vmor %vm4793, %vm4794
  %v4796 = vsel %vm4795, %v4788, %v4792
  %v4797 = vand.u32 2147483647, %v4787
  %vm4798 = vcmp.eq.f32.partialorder %v4797, 8.507059e+37
  %v4799 = vand.u32 %v4787, 2147483648
  %v4800 = vor.u32 1.1754944e-38, %v4799
  %v4801 = vsel %vm4798, %v4800, %v4796
  %v4802 = vmul.f32 1.0, %v4801
  %v4803 = vmul.f32 %v4782, %v4486
  %v4804 = vmul.f32 %v4763, %v4783
  %v4805 = vadd.f32 %v4803, %v4804
  %v4806 = vtanh.pop %v4805
  %v4807 = vmul.f32 %v4802, %v4806
  %v4808 = vmax.f32 %v4807, 0.0
  %s4809 = scalar_lea.vmem %s7, 32
  %4810 = vst [vmem:[%s4809] sm:$0xff] %v4808
  %v4811 = vld [vmem:[%s1890] sm:$0xff]
  %v4812 = vld [vmem:[%s1890 + $0x8] sm:$0xff]
  %v4813 = vld [vmem:[%s1890 + $0x10] sm:$0xff]
  %v4814 = vld [vmem:[%s1890 + $0x18] sm:$0xff]
  %v4815 = vpack.c.bf16 %v4807, %v4807
  %v4816 = vld [vmem:[%s5] sm:$0xff]
  %v4817 = vld [vmem:[%s5 + $0x8] sm:$0xff]
  %v4818 = vld [vmem:[%s5 + $0x10] sm:$0xff]
  %v4819 = vld [vmem:[%s5 + $0x18] sm:$0xff]
  %v4820 = vld [vmem:[%s5 + $0x20] sm:$0xff]
  %v4821 = vld [vmem:[%s5 + $0x28] sm:$0xff]
  %v4822 = vld [vmem:[%s5 + $0x30] sm:$0xff]
  %v4823 = vld [vmem:[%s5 + $0x38] sm:$0xff]
  %v4824 = vld [vmem:[%s5 + $0x40] sm:$0xff]
  %v4825 = vld [vmem:[%s5 + $0x48] sm:$0xff]
  %v4826 = vld [vmem:[%s5 + $0x50] sm:$0xff]
  %v4827 = vld [vmem:[%s5 + $0x58] sm:$0xff]
  %v4828 = vld [vmem:[%s5 + $0x60] sm:$0xff]
  %v4829 = vld [vmem:[%s5 + $0x68] sm:$0xff]
  %v4830 = vld [vmem:[%s5 + $0x70] sm:$0xff]
  %v4831 = vld [vmem:[%s5 + $0x78] sm:$0xff]
  %v4832 = vld [vmem:[%s5 + $0x80] sm:$0xff]
  %v4833 = vld [vmem:[%s5 + $0x88] sm:$0xff]
  %v4834 = vld [vmem:[%s5 + $0x90] sm:$0xff]
  %v4835 = vld [vmem:[%s5 + $0x98] sm:$0xff]
  %v4836 = vld [vmem:[%s5 + $0xa0] sm:$0xff]
  %v4837 = vld [vmem:[%s5 + $0xa8] sm:$0xff]
  %v4838 = vld [vmem:[%s5 + $0xb0] sm:$0xff]
  %v4839 = vld [vmem:[%s5 + $0xb8] sm:$0xff]
  %v4840 = vld [vmem:[%s5 + $0xc0] sm:$0xff]
  %v4841 = vld [vmem:[%s5 + $0xc8] sm:$0xff]
  %v4842 = vld [vmem:[%s5 + $0xd0] sm:$0xff]
  %v4843 = vld [vmem:[%s5 + $0xd8] sm:$0xff]
  %v4844 = vld [vmem:[%s5 + $0xe0] sm:$0xff]
  %v4845 = vld [vmem:[%s5 + $0xe8] sm:$0xff]
  %v4846 = vld [vmem:[%s5 + $0xf0] sm:$0xff]
  %v4847 = vld [vmem:[%s5 + $0xf8] sm:$0xff]
  %v4880 = vunpack.c.l.b16 %v4816
  %v4881 = vunpack.c.h.b16 %v4816
  %v4882 = vunpack.c.l.b16 %v4817
  %v4883 = vunpack.c.h.b16 %v4817
  %v4884 = vunpack.c.l.b16 %v4818
  %v4885 = vunpack.c.h.b16 %v4818
  %v4886 = vunpack.c.l.b16 %v4819
  %v4887 = vunpack.c.h.b16 %v4819
  %v4888 = vunpack.c.l.b16 %v4820
  %v4889 = vunpack.c.h.b16 %v4820
  %v4890 = vunpack.c.l.b16 %v4821
  %v4891 = vunpack.c.h.b16 %v4821
  %v4892 = vunpack.c.l.b16 %v4822
  %v4893 = vunpack.c.h.b16 %v4822
  %v4894 = vunpack.c.l.b16 %v4823
  %v4895 = vunpack.c.h.b16 %v4823
  %v4896 = vunpack.c.l.b16 %v4824
  %v4897 = vunpack.c.h.b16 %v4824
  %v4898 = vunpack.c.l.b16 %v4825
  %v4899 = vunpack.c.h.b16 %v4825
  %v4900 = vunpack.c.l.b16 %v4826
  %v4901 = vunpack.c.h.b16 %v4826
  %v4902 = vunpack.c.l.b16 %v4827
  %v4903 = vunpack.c.h.b16 %v4827
  %v4904 = vunpack.c.l.b16 %v4828
  %v4905 = vunpack.c.h.b16 %v4828
  %v4906 = vunpack.c.l.b16 %v4829
  %v4907 = vunpack.c.h.b16 %v4829
  %v4908 = vunpack.c.l.b16 %v4830
  %v4909 = vunpack.c.h.b16 %v4830
  %v4910 = vunpack.c.l.b16 %v4831
  %v4911 = vunpack.c.h.b16 %v4831
  %v4912 = vunpack.c.l.b16 %v4832
  %v4913 = vunpack.c.h.b16 %v4832
  %v4914 = vunpack.c.l.b16 %v4833
  %v4915 = vunpack.c.h.b16 %v4833
  %v4916 = vunpack.c.l.b16 %v4834
  %v4917 = vunpack.c.h.b16 %v4834
  %v4918 = vunpack.c.l.b16 %v4835
  %v4919 = vunpack.c.h.b16 %v4835
  %v4920 = vunpack.c.l.b16 %v4836
  %v4921 = vunpack.c.h.b16 %v4836
  %v4922 = vunpack.c.l.b16 %v4837
  %v4923 = vunpack.c.h.b16 %v4837
  %v4924 = vunpack.c.l.b16 %v4838
  %v4925 = vunpack.c.h.b16 %v4838
  %v4926 = vunpack.c.l.b16 %v4839
  %v4927 = vunpack.c.h.b16 %v4839
  %v4928 = vunpack.c.l.b16 %v4840
  %v4929 = vunpack.c.h.b16 %v4840
  %v4930 = vunpack.c.l.b16 %v4841
  %v4931 = vunpack.c.h.b16 %v4841
  %v4932 = vunpack.c.l.b16 %v4842
  %v4933 = vunpack.c.h.b16 %v4842
  %v4934 = vunpack.c.l.b16 %v4843
  %v4935 = vunpack.c.h.b16 %v4843
  %v4936 = vunpack.c.l.b16 %v4844
  %v4937 = vunpack.c.h.b16 %v4844
  %v4938 = vunpack.c.l.b16 %v4845
  %v4939 = vunpack.c.h.b16 %v4845
  %v4940 = vunpack.c.l.b16 %v4846
  %v4941 = vunpack.c.h.b16 %v4846
  %v4942 = vunpack.c.l.b16 %v4847
  %v4943 = vunpack.c.h.b16 %v4847
  %v4944 = vpack.c.b16 %v4884, %v4880
  %v4945 = vpack.c.b16 %v4885, %v4881
  %v4946 = vpack.c.b16 %v4886, %v4882
  %v4947 = vpack.c.b16 %v4887, %v4883
  %v4948 = vpack.c.b16 %v4892, %v4888
  %v4949 = vpack.c.b16 %v4893, %v4889
  %v4950 = vpack.c.b16 %v4894, %v4890
  %v4951 = vpack.c.b16 %v4895, %v4891
  %v4952 = vpack.c.b16 %v4900, %v4896
  %v4953 = vpack.c.b16 %v4901, %v4897
  %v4954 = vpack.c.b16 %v4902, %v4898
  %v4955 = vpack.c.b16 %v4903, %v4899
  %v4956 = vpack.c.b16 %v4908, %v4904
  %v4957 = vpack.c.b16 %v4909, %v4905
  %v4958 = vpack.c.b16 %v4910, %v4906
  %v4959 = vpack.c.b16 %v4911, %v4907
  %v4960 = vpack.c.b16 %v4916, %v4912
  %v4961 = vpack.c.b16 %v4917, %v4913
  %v4962 = vpack.c.b16 %v4918, %v4914
  %v4963 = vpack.c.b16 %v4919, %v4915
  %v4964 = vpack.c.b16 %v4924, %v4920
  %v4965 = vpack.c.b16 %v4925, %v4921
  %v4966 = vpack.c.b16 %v4926, %v4922
  %v4967 = vpack.c.b16 %v4927, %v4923
  %v4968 = vpack.c.b16 %v4932, %v4928
  %v4969 = vpack.c.b16 %v4933, %v4929
  %v4970 = vpack.c.b16 %v4934, %v4930
  %v4971 = vpack.c.b16 %v4935, %v4931
  %v4972 = vpack.c.b16 %v4940, %v4936
  %v4973 = vpack.c.b16 %v4941, %v4937
  %v4974 = vpack.c.b16 %v4942, %v4938
  %v4975 = vpack.c.b16 %v4943, %v4939
  %5008 = vmatpush.bf16.msra.mxu0 %v4972
  %5009 = vmatpush.bf16.msra.mxu0 %v4968
  %5010 = vmatpush.bf16.msra.mxu0 %v4964
  %5011 = vmatpush.bf16.msra.mxu0 %v4960
  %5012 = vmatpush.bf16.msra.mxu0 %v4956
  %5013 = vmatpush.bf16.msra.mxu0 %v4952
  %5014 = vmatpush.bf16.msra.mxu0 %v4948
  %5015 = vmatpush.bf16.msra.mxu0 %v4944
  %5016 = vmatmul.bf16.gmra.mxu0 %v4815
  %v5017 = vpop.f32.mrf.mxu0
  %v5018 = vadd.f32 0.0, %v5017
  %v5019 = vpop.f32.mrf.mxu0
  %5020 = vdwg.mxu0
  %5021 = vmatpush.bf16.msra.mxu0 %v4973
  %5022 = vmatpush.bf16.msra.mxu0 %v4969
  %5023 = vmatpush.bf16.msra.mxu0 %v4965
  %5024 = vmatpush.bf16.msra.mxu0 %v4961
  %5025 = vmatpush.bf16.msra.mxu0 %v4957
  %5026 = vmatpush.bf16.msra.mxu0 %v4953
  %5027 = vmatpush.bf16.msra.mxu0 %v4949
  %5028 = vmatpush.bf16.msra.mxu0 %v4945
  %5029 = vmatmul.bf16.gmra.mxu0 %v4815
  %v5030 = vpop.f32.mrf.mxu0
  %v5031 = vadd.f32 0.0, %v5030
  %v5032 = vpop.f32.mrf.mxu0
  %5033 = vdwg.mxu0
  %5034 = vmatpush.bf16.msra.mxu0 %v4974
  %5035 = vmatpush.bf16.msra.mxu0 %v4970
  %5036 = vmatpush.bf16.msra.mxu0 %v4966
  %5037 = vmatpush.bf16.msra.mxu0 %v4962
  %5038 = vmatpush.bf16.msra.mxu0 %v4958
  %5039 = vmatpush.bf16.msra.mxu0 %v4954
  %5040 = vmatpush.bf16.msra.mxu0 %v4950
  %5041 = vmatpush.bf16.msra.mxu0 %v4946
  %5042 = vmatmul.bf16.gmra.mxu0 %v4815
  %v5043 = vpop.f32.mrf.mxu0
  %v5044 = vadd.f32 0.0, %v5043
  %v5045 = vpop.f32.mrf.mxu0
  %5046 = vdwg.mxu0
  %5047 = vmatpush.bf16.msra.mxu0 %v4975
  %5048 = vmatpush.bf16.msra.mxu0 %v4971
  %5049 = vmatpush.bf16.msra.mxu0 %v4967
  %5050 = vmatpush.bf16.msra.mxu0 %v4963
  %5051 = vmatpush.bf16.msra.mxu0 %v4959
  %5052 = vmatpush.bf16.msra.mxu0 %v4955
  %5053 = vmatpush.bf16.msra.mxu0 %v4951
  %5054 = vmatpush.bf16.msra.mxu0 %v4947
  %5055 = vmatmul.bf16.gmra.mxu0 %v4815
  %v5056 = vpop.f32.mrf.mxu0
  %v5057 = vadd.f32 0.0, %v5056
  %v5058 = vpop.f32.mrf.mxu0
  %5059 = vdwg.mxu0
  %v5060 = vadd.f32 %v4811, %v5018
  %v5061 = vadd.f32 %v4812, %v5031
  %v5062 = vadd.f32 %v4813, %v5044
  %v5063 = vadd.f32 %v4814, %v5057
  %v5064 = vxor.u32 %v5060, 2147483648
  %v5065 = vmul.f32 %v5064, 1.442695
  %v5066 = vpow.pop %v5065
  %v5067 = vadd.f32 %v5066, 1.0
  %v5068 = vrcp.pop %v5067
  %v5069 = vmul.f32 %v5067, %v5068
  %v5070 = vsub.f32 1.0, %v5069
  %v5071 = vmul.f32 %v5068, %v5070
  %v5072 = vadd.f32 %v5068, %v5071
  %vm5073 = vweird.f32 %v5067
  %vm5074 = vweird.f32 %v5068
  %vm5075 = vmor %vm5073, %vm5074
  %v5076 = vsel %vm5075, %v5068, %v5072
  %v5077 = vand.u32 2147483647, %v5067
  %vm5078 = vcmp.eq.f32.partialorder %v5077, 8.507059e+37
  %v5079 = vand.u32 %v5067, 2147483648
  %v5080 = vor.u32 1.1754944e-38, %v5079
  %v5081 = vsel %vm5078, %v5080, %v5076
  %v5082 = vmul.f32 1.0, %v5081
  %v5083 = vxor.u32 %v5061, 2147483648
  %v5084 = vmul.f32 %v5083, 1.442695
  %v5085 = vpow.pop %v5084
  %v5086 = vadd.f32 %v5085, 1.0
  %v5087 = vrcp.pop %v5086
  %v5088 = vmul.f32 %v5086, %v5087
  %v5089 = vsub.f32 1.0, %v5088
  %v5090 = vmul.f32 %v5087, %v5089
  %v5091 = vadd.f32 %v5087, %v5090
  %vm5092 = vweird.f32 %v5086
  %vm5093 = vweird.f32 %v5087
  %vm5094 = vmor %vm5092, %vm5093
  %v5095 = vsel %vm5094, %v5087, %v5091
  %v5096 = vand.u32 2147483647, %v5086
  %vm5097 = vcmp.eq.f32.partialorder %v5096, 8.507059e+37
  %v5098 = vand.u32 %v5086, 2147483648
  %v5099 = vor.u32 1.1754944e-38, %v5098
  %v5100 = vsel %vm5097, %v5099, %v5095
  %v5101 = vmul.f32 1.0, %v5100
  %v5102 = vtanh.pop %v5062
  %v5103 = vxor.u32 %v5063, 2147483648
  %v5104 = vmul.f32 %v5103, 1.442695
  %v5105 = vpow.pop %v5104
  %v5106 = vadd.f32 %v5105, 1.0
  %v5107 = vrcp.pop %v5106
  %v5108 = vmul.f32 %v5106, %v5107
  %v5109 = vsub.f32 1.0, %v5108
  %v5110 = vmul.f32 %v5107, %v5109
  %v5111 = vadd.f32 %v5107, %v5110
  %vm5112 = vweird.f32 %v5106
  %vm5113 = vweird.f32 %v5107
  %vm5114 = vmor %vm5112, %vm5113
  %v5115 = vsel %vm5114, %v5107, %v5111
  %v5116 = vand.u32 2147483647, %v5106
  %vm5117 = vcmp.eq.f32.partialorder %v5116, 8.507059e+37
  %v5118 = vand.u32 %v5106, 2147483648
  %v5119 = vor.u32 1.1754944e-38, %v5118
  %v5120 = vsel %vm5117, %v5119, %v5115
  %v5121 = vmul.f32 1.0, %v5120
  %v5122 = vmul.f32 %v5101, %v4805
  %v5123 = vmul.f32 %v5082, %v5102
  %v5124 = vadd.f32 %v5122, %v5123
  %v5125 = vtanh.pop %v5124
  %v5126 = vmul.f32 %v5121, %v5125
  %v5127 = vmax.f32 %v5126, 0.0
  %s5128 = scalar_lea.vmem %s7, 40
  %5129 = vst [vmem:[%s5128] sm:$0xff] %v5127
  %v5130 = vld [vmem:[%s2211] sm:$0xff]
  %v5131 = vld [vmem:[%s2211 + $0x8] sm:$0xff]
  %v5132 = vld [vmem:[%s2211 + $0x10] sm:$0xff]
  %v5133 = vld [vmem:[%s2211 + $0x18] sm:$0xff]
  %v5134 = vpack.c.bf16 %v5126, %v5126
  %v5135 = vld [vmem:[%s5] sm:$0xff]
  %v5136 = vld [vmem:[%s5 + $0x8] sm:$0xff]
  %v5137 = vld [vmem:[%s5 + $0x10] sm:$0xff]
  %v5138 = vld [vmem:[%s5 + $0x18] sm:$0xff]
  %v5139 = vld [vmem:[%s5 + $0x20] sm:$0xff]
  %v5140 = vld [vmem:[%s5 + $0x28] sm:$0xff]
  %v5141 = vld [vmem:[%s5 + $0x30] sm:$0xff]
  %v5142 = vld [vmem:[%s5 + $0x38] sm:$0xff]
  %v5143 = vld [vmem:[%s5 + $0x40] sm:$0xff]
  %v5144 = vld [vmem:[%s5 + $0x48] sm:$0xff]
  %v5145 = vld [vmem:[%s5 + $0x50] sm:$0xff]
  %v5146 = vld [vmem:[%s5 + $0x58] sm:$0xff]
  %v5147 = vld [vmem:[%s5 + $0x60] sm:$0xff]
  %v5148 = vld [vmem:[%s5 + $0x68] sm:$0xff]
  %v5149 = vld [vmem:[%s5 + $0x70] sm:$0xff]
  %v5150 = vld [vmem:[%s5 + $0x78] sm:$0xff]
  %v5151 = vld [vmem:[%s5 + $0x80] sm:$0xff]
  %v5152 = vld [vmem:[%s5 + $0x88] sm:$0xff]
  %v5153 = vld [vmem:[%s5 + $0x90] sm:$0xff]
  %v5154 = vld [vmem:[%s5 + $0x98] sm:$0xff]
  %v5155 = vld [vmem:[%s5 + $0xa0] sm:$0xff]
  %v5156 = vld [vmem:[%s5 + $0xa8] sm:$0xff]
  %v5157 = vld [vmem:[%s5 + $0xb0] sm:$0xff]
  %v5158 = vld [vmem:[%s5 + $0xb8] sm:$0xff]
  %v5159 = vld [vmem:[%s5 + $0xc0] sm:$0xff]
  %v5160 = vld [vmem:[%s5 + $0xc8] sm:$0xff]
  %v5161 = vld [vmem:[%s5 + $0xd0] sm:$0xff]
  %v5162 = vld [vmem:[%s5 + $0xd8] sm:$0xff]
  %v5163 = vld [vmem:[%s5 + $0xe0] sm:$0xff]
  %v5164 = vld [vmem:[%s5 + $0xe8] sm:$0xff]
  %v5165 = vld [vmem:[%s5 + $0xf0] sm:$0xff]
  %v5166 = vld [vmem:[%s5 + $0xf8] sm:$0xff]
  %v5199 = vunpack.c.l.b16 %v5135
  %v5200 = vunpack.c.h.b16 %v5135
  %v5201 = vunpack.c.l.b16 %v5136
  %v5202 = vunpack.c.h.b16 %v5136
  %v5203 = vunpack.c.l.b16 %v5137
  %v5204 = vunpack.c.h.b16 %v5137
  %v5205 = vunpack.c.l.b16 %v5138
  %v5206 = vunpack.c.h.b16 %v5138
  %v5207 = vunpack.c.l.b16 %v5139
  %v5208 = vunpack.c.h.b16 %v5139
  %v5209 = vunpack.c.l.b16 %v5140
  %v5210 = vunpack.c.h.b16 %v5140
  %v5211 = vunpack.c.l.b16 %v5141
  %v5212 = vunpack.c.h.b16 %v5141
  %v5213 = vunpack.c.l.b16 %v5142
  %v5214 = vunpack.c.h.b16 %v5142
  %v5215 = vunpack.c.l.b16 %v5143
  %v5216 = vunpack.c.h.b16 %v5143
  %v5217 = vunpack.c.l.b16 %v5144
  %v5218 = vunpack.c.h.b16 %v5144
  %v5219 = vunpack.c.l.b16 %v5145
  %v5220 = vunpack.c.h.b16 %v5145
  %v5221 = vunpack.c.l.b16 %v5146
  %v5222 = vunpack.c.h.b16 %v5146
  %v5223 = vunpack.c.l.b16 %v5147
  %v5224 = vunpack.c.h.b16 %v5147
  %v5225 = vunpack.c.l.b16 %v5148
  %v5226 = vunpack.c.h.b16 %v5148
  %v5227 = vunpack.c.l.b16 %v5149
  %v5228 = vunpack.c.h.b16 %v5149
  %v5229 = vunpack.c.l.b16 %v5150
  %v5230 = vunpack.c.h.b16 %v5150
  %v5231 = vunpack.c.l.b16 %v5151
  %v5232 = vunpack.c.h.b16 %v5151
  %v5233 = vunpack.c.l.b16 %v5152
  %v5234 = vunpack.c.h.b16 %v5152
  %v5235 = vunpack.c.l.b16 %v5153
  %v5236 = vunpack.c.h.b16 %v5153
  %v5237 = vunpack.c.l.b16 %v5154
  %v5238 = vunpack.c.h.b16 %v5154
  %v5239 = vunpack.c.l.b16 %v5155
  %v5240 = vunpack.c.h.b16 %v5155
  %v5241 = vunpack.c.l.b16 %v5156
  %v5242 = vunpack.c.h.b16 %v5156
  %v5243 = vunpack.c.l.b16 %v5157
  %v5244 = vunpack.c.h.b16 %v5157
  %v5245 = vunpack.c.l.b16 %v5158
  %v5246 = vunpack.c.h.b16 %v5158
  %v5247 = vunpack.c.l.b16 %v5159
  %v5248 = vunpack.c.h.b16 %v5159
  %v5249 = vunpack.c.l.b16 %v5160
  %v5250 = vunpack.c.h.b16 %v5160
  %v5251 = vunpack.c.l.b16 %v5161
  %v5252 = vunpack.c.h.b16 %v5161
  %v5253 = vunpack.c.l.b16 %v5162
  %v5254 = vunpack.c.h.b16 %v5162
  %v5255 = vunpack.c.l.b16 %v5163
  %v5256 = vunpack.c.h.b16 %v5163
  %v5257 = vunpack.c.l.b16 %v5164
  %v5258 = vunpack.c.h.b16 %v5164
  %v5259 = vunpack.c.l.b16 %v5165
  %v5260 = vunpack.c.h.b16 %v5165
  %v5261 = vunpack.c.l.b16 %v5166
  %v5262 = vunpack.c.h.b16 %v5166
  %v5263 = vpack.c.b16 %v5203, %v5199
  %v5264 = vpack.c.b16 %v5204, %v5200
  %v5265 = vpack.c.b16 %v5205, %v5201
  %v5266 = vpack.c.b16 %v5206, %v5202
  %v5267 = vpack.c.b16 %v5211, %v5207
  %v5268 = vpack.c.b16 %v5212, %v5208
  %v5269 = vpack.c.b16 %v5213, %v5209
  %v5270 = vpack.c.b16 %v5214, %v5210
  %v5271 = vpack.c.b16 %v5219, %v5215
  %v5272 = vpack.c.b16 %v5220, %v5216
  %v5273 = vpack.c.b16 %v5221, %v5217
  %v5274 = vpack.c.b16 %v5222, %v5218
  %v5275 = vpack.c.b16 %v5227, %v5223
  %v5276 = vpack.c.b16 %v5228, %v5224
  %v5277 = vpack.c.b16 %v5229, %v5225
  %v5278 = vpack.c.b16 %v5230, %v5226
  %v5279 = vpack.c.b16 %v5235, %v5231
  %v5280 = vpack.c.b16 %v5236, %v5232
  %v5281 = vpack.c.b16 %v5237, %v5233
  %v5282 = vpack.c.b16 %v5238, %v5234
  %v5283 = vpack.c.b16 %v5243, %v5239
  %v5284 = vpack.c.b16 %v5244, %v5240
  %v5285 = vpack.c.b16 %v5245, %v5241
  %v5286 = vpack.c.b16 %v5246, %v5242
  %v5287 = vpack.c.b16 %v5251, %v5247
  %v5288 = vpack.c.b16 %v5252, %v5248
  %v5289 = vpack.c.b16 %v5253, %v5249
  %v5290 = vpack.c.b16 %v5254, %v5250
  %v5291 = vpack.c.b16 %v5259, %v5255
  %v5292 = vpack.c.b16 %v5260, %v5256
  %v5293 = vpack.c.b16 %v5261, %v5257
  %v5294 = vpack.c.b16 %v5262, %v5258
  %5327 = vmatpush.bf16.msra.mxu0 %v5291
  %5328 = vmatpush.bf16.msra.mxu0 %v5287
  %5329 = vmatpush.bf16.msra.mxu0 %v5283
  %5330 = vmatpush.bf16.msra.mxu0 %v5279
  %5331 = vmatpush.bf16.msra.mxu0 %v5275
  %5332 = vmatpush.bf16.msra.mxu0 %v5271
  %5333 = vmatpush.bf16.msra.mxu0 %v5267
  %5334 = vmatpush.bf16.msra.mxu0 %v5263
  %5335 = vmatmul.bf16.gmra.mxu0 %v5134
  %v5336 = vpop.f32.mrf.mxu0
  %v5337 = vadd.f32 0.0, %v5336
  %v5338 = vpop.f32.mrf.mxu0
  %5339 = vdwg.mxu0
  %5340 = vmatpush.bf16.msra.mxu0 %v5292
  %5341 = vmatpush.bf16.msra.mxu0 %v5288
  %5342 = vmatpush.bf16.msra.mxu0 %v5284
  %5343 = vmatpush.bf16.msra.mxu0 %v5280
  %5344 = vmatpush.bf16.msra.mxu0 %v5276
  %5345 = vmatpush.bf16.msra.mxu0 %v5272
  %5346 = vmatpush.bf16.msra.mxu0 %v5268
  %5347 = vmatpush.bf16.msra.mxu0 %v5264
  %5348 = vmatmul.bf16.gmra.mxu0 %v5134
  %v5349 = vpop.f32.mrf.mxu0
  %v5350 = vadd.f32 0.0, %v5349
  %v5351 = vpop.f32.mrf.mxu0
  %5352 = vdwg.mxu0
  %5353 = vmatpush.bf16.msra.mxu0 %v5293
  %5354 = vmatpush.bf16.msra.mxu0 %v5289
  %5355 = vmatpush.bf16.msra.mxu0 %v5285
  %5356 = vmatpush.bf16.msra.mxu0 %v5281
  %5357 = vmatpush.bf16.msra.mxu0 %v5277
  %5358 = vmatpush.bf16.msra.mxu0 %v5273
  %5359 = vmatpush.bf16.msra.mxu0 %v5269
  %5360 = vmatpush.bf16.msra.mxu0 %v5265
  %5361 = vmatmul.bf16.gmra.mxu0 %v5134
  %v5362 = vpop.f32.mrf.mxu0
  %v5363 = vadd.f32 0.0, %v5362
  %v5364 = vpop.f32.mrf.mxu0
  %5365 = vdwg.mxu0
  %5366 = vmatpush.bf16.msra.mxu0 %v5294
  %5367 = vmatpush.bf16.msra.mxu0 %v5290
  %5368 = vmatpush.bf16.msra.mxu0 %v5286
  %5369 = vmatpush.bf16.msra.mxu0 %v5282
  %5370 = vmatpush.bf16.msra.mxu0 %v5278
  %5371 = vmatpush.bf16.msra.mxu0 %v5274
  %5372 = vmatpush.bf16.msra.mxu0 %v5270
  %5373 = vmatpush.bf16.msra.mxu0 %v5266
  %5374 = vmatmul.bf16.gmra.mxu0 %v5134
  %v5375 = vpop.f32.mrf.mxu0
  %v5376 = vadd.f32 0.0, %v5375
  %v5377 = vpop.f32.mrf.mxu0
  %5378 = vdwg.mxu0
  %v5379 = vadd.f32 %v5130, %v5337
  %v5380 = vadd.f32 %v5131, %v5350
  %v5381 = vadd.f32 %v5132, %v5363
  %v5382 = vadd.f32 %v5133, %v5376
  %v5383 = vxor.u32 %v5379, 2147483648
  %v5384 = vmul.f32 %v5383, 1.442695
  %v5385 = vpow.pop %v5384
  %v5386 = vadd.f32 %v5385, 1.0
  %v5387 = vrcp.pop %v5386
  %v5388 = vmul.f32 %v5386, %v5387
  %v5389 = vsub.f32 1.0, %v5388
  %v5390 = vmul.f32 %v5387, %v5389
  %v5391 = vadd.f32 %v5387, %v5390
  %vm5392 = vweird.f32 %v5386
  %vm5393 = vweird.f32 %v5387
  %vm5394 = vmor %vm5392, %vm5393
  %v5395 = vsel %vm5394, %v5387, %v5391
  %v5396 = vand.u32 2147483647, %v5386
  %vm5397 = vcmp.eq.f32.partialorder %v5396, 8.507059e+37
  %v5398 = vand.u32 %v5386, 2147483648
  %v5399 = vor.u32 1.1754944e-38, %v5398
  %v5400 = vsel %vm5397, %v5399, %v5395
  %v5401 = vmul.f32 1.0, %v5400
  %v5402 = vxor.u32 %v5380, 2147483648
  %v5403 = vmul.f32 %v5402, 1.442695
  %v5404 = vpow.pop %v5403
  %v5405 = vadd.f32 %v5404, 1.0
  %v5406 = vrcp.pop %v5405
  %v5407 = vmul.f32 %v5405, %v5406
  %v5408 = vsub.f32 1.0, %v5407
  %v5409 = vmul.f32 %v5406, %v5408
  %v5410 = vadd.f32 %v5406, %v5409
  %vm5411 = vweird.f32 %v5405
  %vm5412 = vweird.f32 %v5406
  %vm5413 = vmor %vm5411, %vm5412
  %v5414 = vsel %vm5413, %v5406, %v5410
  %v5415 = vand.u32 2147483647, %v5405
  %vm5416 = vcmp.eq.f32.partialorder %v5415, 8.507059e+37
  %v5417 = vand.u32 %v5405, 2147483648
  %v5418 = vor.u32 1.1754944e-38, %v5417
  %v5419 = vsel %vm5416, %v5418, %v5414
  %v5420 = vmul.f32 1.0, %v5419
  %v5421 = vtanh.pop %v5381
  %v5422 = vxor.u32 %v5382, 2147483648
  %v5423 = vmul.f32 %v5422, 1.442695
  %v5424 = vpow.pop %v5423
  %v5425 = vadd.f32 %v5424, 1.0
  %v5426 = vrcp.pop %v5425
  %v5427 = vmul.f32 %v5425, %v5426
  %v5428 = vsub.f32 1.0, %v5427
  %v5429 = vmul.f32 %v5426, %v5428
  %v5430 = vadd.f32 %v5426, %v5429
  %vm5431 = vweird.f32 %v5425
  %vm5432 = vweird.f32 %v5426
  %vm5433 = vmor %vm5431, %vm5432
  %v5434 = vsel %vm5433, %v5426, %v5430
  %v5435 = vand.u32 2147483647, %v5425
  %vm5436 = vcmp.eq.f32.partialorder %v5435, 8.507059e+37
  %v5437 = vand.u32 %v5425, 2147483648
  %v5438 = vor.u32 1.1754944e-38, %v5437
  %v5439 = vsel %vm5436, %v5438, %v5434
  %v5440 = vmul.f32 1.0, %v5439
  %v5441 = vmul.f32 %v5420, %v5124
  %v5442 = vmul.f32 %v5401, %v5421
  %v5443 = vadd.f32 %v5441, %v5442
  %v5444 = vtanh.pop %v5443
  %v5445 = vmul.f32 %v5440, %v5444
  %v5446 = vmax.f32 %v5445, 0.0
  %s5447 = scalar_lea.vmem %s7, 48
  %5448 = vst [vmem:[%s5447] sm:$0xff] %v5446
  %v5449 = vld [vmem:[%s2532] sm:$0xff]
  %v5450 = vld [vmem:[%s2532 + $0x8] sm:$0xff]
  %v5451 = vld [vmem:[%s2532 + $0x10] sm:$0xff]
  %v5452 = vld [vmem:[%s2532 + $0x18] sm:$0xff]
  %v5453 = vpack.c.bf16 %v5445, %v5445
  %v5454 = vld [vmem:[%s5] sm:$0xff]
  %v5455 = vld [vmem:[%s5 + $0x8] sm:$0xff]
  %v5456 = vld [vmem:[%s5 + $0x10] sm:$0xff]
  %v5457 = vld [vmem:[%s5 + $0x18] sm:$0xff]
  %v5458 = vld [vmem:[%s5 + $0x20] sm:$0xff]
  %v5459 = vld [vmem:[%s5 + $0x28] sm:$0xff]
  %v5460 = vld [vmem:[%s5 + $0x30] sm:$0xff]
  %v5461 = vld [vmem:[%s5 + $0x38] sm:$0xff]
  %v5462 = vld [vmem:[%s5 + $0x40] sm:$0xff]
  %v5463 = vld [vmem:[%s5 + $0x48] sm:$0xff]
  %v5464 = vld [vmem:[%s5 + $0x50] sm:$0xff]
  %v5465 = vld [vmem:[%s5 + $0x58] sm:$0xff]
  %v5466 = vld [vmem:[%s5 + $0x60] sm:$0xff]
  %v5467 = vld [vmem:[%s5 + $0x68] sm:$0xff]
  %v5468 = vld [vmem:[%s5 + $0x70] sm:$0xff]
  %v5469 = vld [vmem:[%s5 + $0x78] sm:$0xff]
  %v5470 = vld [vmem:[%s5 + $0x80] sm:$0xff]
  %v5471 = vld [vmem:[%s5 + $0x88] sm:$0xff]
  %v5472 = vld [vmem:[%s5 + $0x90] sm:$0xff]
  %v5473 = vld [vmem:[%s5 + $0x98] sm:$0xff]
  %v5474 = vld [vmem:[%s5 + $0xa0] sm:$0xff]
  %v5475 = vld [vmem:[%s5 + $0xa8] sm:$0xff]
  %v5476 = vld [vmem:[%s5 + $0xb0] sm:$0xff]
  %v5477 = vld [vmem:[%s5 + $0xb8] sm:$0xff]
  %v5478 = vld [vmem:[%s5 + $0xc0] sm:$0xff]
  %v5479 = vld [vmem:[%s5 + $0xc8] sm:$0xff]
  %v5480 = vld [vmem:[%s5 + $0xd0] sm:$0xff]
  %v5481 = vld [vmem:[%s5 + $0xd8] sm:$0xff]
  %v5482 = vld [vmem:[%s5 + $0xe0] sm:$0xff]
  %v5483 = vld [vmem:[%s5 + $0xe8] sm:$0xff]
  %v5484 = vld [vmem:[%s5 + $0xf0] sm:$0xff]
  %v5485 = vld [vmem:[%s5 + $0xf8] sm:$0xff]
  %v5518 = vunpack.c.l.b16 %v5454
  %v5519 = vunpack.c.h.b16 %v5454
  %v5520 = vunpack.c.l.b16 %v5455
  %v5521 = vunpack.c.h.b16 %v5455
  %v5522 = vunpack.c.l.b16 %v5456
  %v5523 = vunpack.c.h.b16 %v5456
  %v5524 = vunpack.c.l.b16 %v5457
  %v5525 = vunpack.c.h.b16 %v5457
  %v5526 = vunpack.c.l.b16 %v5458
  %v5527 = vunpack.c.h.b16 %v5458
  %v5528 = vunpack.c.l.b16 %v5459
  %v5529 = vunpack.c.h.b16 %v5459
  %v5530 = vunpack.c.l.b16 %v5460
  %v5531 = vunpack.c.h.b16 %v5460
  %v5532 = vunpack.c.l.b16 %v5461
  %v5533 = vunpack.c.h.b16 %v5461
  %v5534 = vunpack.c.l.b16 %v5462
  %v5535 = vunpack.c.h.b16 %v5462
  %v5536 = vunpack.c.l.b16 %v5463
  %v5537 = vunpack.c.h.b16 %v5463
  %v5538 = vunpack.c.l.b16 %v5464
  %v5539 = vunpack.c.h.b16 %v5464
  %v5540 = vunpack.c.l.b16 %v5465
  %v5541 = vunpack.c.h.b16 %v5465
  %v5542 = vunpack.c.l.b16 %v5466
  %v5543 = vunpack.c.h.b16 %v5466
  %v5544 = vunpack.c.l.b16 %v5467
  %v5545 = vunpack.c.h.b16 %v5467
  %v5546 = vunpack.c.l.b16 %v5468
  %v5547 = vunpack.c.h.b16 %v5468
  %v5548 = vunpack.c.l.b16 %v5469
  %v5549 = vunpack.c.h.b16 %v5469
  %v5550 = vunpack.c.l.b16 %v5470
  %v5551 = vunpack.c.h.b16 %v5470
  %v5552 = vunpack.c.l.b16 %v5471
  %v5553 = vunpack.c.h.b16 %v5471
  %v5554 = vunpack.c.l.b16 %v5472
  %v5555 = vunpack.c.h.b16 %v5472
  %v5556 = vunpack.c.l.b16 %v5473
  %v5557 = vunpack.c.h.b16 %v5473
  %v5558 = vunpack.c.l.b16 %v5474
  %v5559 = vunpack.c.h.b16 %v5474
  %v5560 = vunpack.c.l.b16 %v5475
  %v5561 = vunpack.c.h.b16 %v5475
  %v5562 = vunpack.c.l.b16 %v5476
  %v5563 = vunpack.c.h.b16 %v5476
  %v5564 = vunpack.c.l.b16 %v5477
  %v5565 = vunpack.c.h.b16 %v5477
  %v5566 = vunpack.c.l.b16 %v5478
  %v5567 = vunpack.c.h.b16 %v5478
  %v5568 = vunpack.c.l.b16 %v5479
  %v5569 = vunpack.c.h.b16 %v5479
  %v5570 = vunpack.c.l.b16 %v5480
  %v5571 = vunpack.c.h.b16 %v5480
  %v5572 = vunpack.c.l.b16 %v5481
  %v5573 = vunpack.c.h.b16 %v5481
  %v5574 = vunpack.c.l.b16 %v5482
  %v5575 = vunpack.c.h.b16 %v5482
  %v5576 = vunpack.c.l.b16 %v5483
  %v5577 = vunpack.c.h.b16 %v5483
  %v5578 = vunpack.c.l.b16 %v5484
  %v5579 = vunpack.c.h.b16 %v5484
  %v5580 = vunpack.c.l.b16 %v5485
  %v5581 = vunpack.c.h.b16 %v5485
  %v5582 = vpack.c.b16 %v5522, %v5518
  %v5583 = vpack.c.b16 %v5523, %v5519
  %v5584 = vpack.c.b16 %v5524, %v5520
  %v5585 = vpack.c.b16 %v5525, %v5521
  %v5586 = vpack.c.b16 %v5530, %v5526
  %v5587 = vpack.c.b16 %v5531, %v5527
  %v5588 = vpack.c.b16 %v5532, %v5528
  %v5589 = vpack.c.b16 %v5533, %v5529
  %v5590 = vpack.c.b16 %v5538, %v5534
  %v5591 = vpack.c.b16 %v5539, %v5535
  %v5592 = vpack.c.b16 %v5540, %v5536
  %v5593 = vpack.c.b16 %v5541, %v5537
  %v5594 = vpack.c.b16 %v5546, %v5542
  %v5595 = vpack.c.b16 %v5547, %v5543
  %v5596 = vpack.c.b16 %v5548, %v5544
  %v5597 = vpack.c.b16 %v5549, %v5545
  %v5598 = vpack.c.b16 %v5554, %v5550
  %v5599 = vpack.c.b16 %v5555, %v5551
  %v5600 = vpack.c.b16 %v5556, %v5552
  %v5601 = vpack.c.b16 %v5557, %v5553
  %v5602 = vpack.c.b16 %v5562, %v5558
  %v5603 = vpack.c.b16 %v5563, %v5559
  %v5604 = vpack.c.b16 %v5564, %v5560
  %v5605 = vpack.c.b16 %v5565, %v5561
  %v5606 = vpack.c.b16 %v5570, %v5566
  %v5607 = vpack.c.b16 %v5571, %v5567
  %v5608 = vpack.c.b16 %v5572, %v5568
  %v5609 = vpack.c.b16 %v5573, %v5569
  %v5610 = vpack.c.b16 %v5578, %v5574
  %v5611 = vpack.c.b16 %v5579, %v5575
  %v5612 = vpack.c.b16 %v5580, %v5576
  %v5613 = vpack.c.b16 %v5581, %v5577
  %5646 = vmatpush.bf16.msra.mxu0 %v5610
  %5647 = vmatpush.bf16.msra.mxu0 %v5606
  %5648 = vmatpush.bf16.msra.mxu0 %v5602
  %5649 = vmatpush.bf16.msra.mxu0 %v5598
  %5650 = vmatpush.bf16.msra.mxu0 %v5594
  %5651 = vmatpush.bf16.msra.mxu0 %v5590
  %5652 = vmatpush.bf16.msra.mxu0 %v5586
  %5653 = vmatpush.bf16.msra.mxu0 %v5582
  %5654 = vmatmul.bf16.gmra.mxu0 %v5453
  %v5655 = vpop.f32.mrf.mxu0
  %v5656 = vadd.f32 0.0, %v5655
  %v5657 = vpop.f32.mrf.mxu0
  %5658 = vdwg.mxu0
  %5659 = vmatpush.bf16.msra.mxu0 %v5611
  %5660 = vmatpush.bf16.msra.mxu0 %v5607
  %5661 = vmatpush.bf16.msra.mxu0 %v5603
  %5662 = vmatpush.bf16.msra.mxu0 %v5599
  %5663 = vmatpush.bf16.msra.mxu0 %v5595
  %5664 = vmatpush.bf16.msra.mxu0 %v5591
  %5665 = vmatpush.bf16.msra.mxu0 %v5587
  %5666 = vmatpush.bf16.msra.mxu0 %v5583
  %5667 = vmatmul.bf16.gmra.mxu0 %v5453
  %v5668 = vpop.f32.mrf.mxu0
  %v5669 = vadd.f32 0.0, %v5668
  %v5670 = vpop.f32.mrf.mxu0
  %5671 = vdwg.mxu0
  %5672 = vmatpush.bf16.msra.mxu0 %v5612
  %5673 = vmatpush.bf16.msra.mxu0 %v5608
  %5674 = vmatpush.bf16.msra.mxu0 %v5604
  %5675 = vmatpush.bf16.msra.mxu0 %v5600
  %5676 = vmatpush.bf16.msra.mxu0 %v5596
  %5677 = vmatpush.bf16.msra.mxu0 %v5592
  %5678 = vmatpush.bf16.msra.mxu0 %v5588
  %5679 = vmatpush.bf16.msra.mxu0 %v5584
  %5680 = vmatmul.bf16.gmra.mxu0 %v5453
  %v5681 = vpop.f32.mrf.mxu0
  %v5682 = vadd.f32 0.0, %v5681
  %v5683 = vpop.f32.mrf.mxu0
  %5684 = vdwg.mxu0
  %5685 = vmatpush.bf16.msra.mxu0 %v5613
  %5686 = vmatpush.bf16.msra.mxu0 %v5609
  %5687 = vmatpush.bf16.msra.mxu0 %v5605
  %5688 = vmatpush.bf16.msra.mxu0 %v5601
  %5689 = vmatpush.bf16.msra.mxu0 %v5597
  %5690 = vmatpush.bf16.msra.mxu0 %v5593
  %5691 = vmatpush.bf16.msra.mxu0 %v5589
  %5692 = vmatpush.bf16.msra.mxu0 %v5585
  %5693 = vmatmul.bf16.gmra.mxu0 %v5453
  %v5694 = vpop.f32.mrf.mxu0
  %v5695 = vadd.f32 0.0, %v5694
  %v5696 = vpop.f32.mrf.mxu0
  %5697 = vdwg.mxu0
  %v5698 = vadd.f32 %v5449, %v5656
  %v5699 = vadd.f32 %v5450, %v5669
  %v5700 = vadd.f32 %v5451, %v5682
  %v5701 = vadd.f32 %v5452, %v5695
  %v5702 = vxor.u32 %v5698, 2147483648
  %v5703 = vmul.f32 %v5702, 1.442695
  %v5704 = vpow.pop %v5703
  %v5705 = vadd.f32 %v5704, 1.0
  %v5706 = vrcp.pop %v5705
  %v5707 = vmul.f32 %v5705, %v5706
  %v5708 = vsub.f32 1.0, %v5707
  %v5709 = vmul.f32 %v5706, %v5708
  %v5710 = vadd.f32 %v5706, %v5709
  %vm5711 = vweird.f32 %v5705
  %vm5712 = vweird.f32 %v5706
  %vm5713 = vmor %vm5711, %vm5712
  %v5714 = vsel %vm5713, %v5706, %v5710
  %v5715 = vand.u32 2147483647, %v5705
  %vm5716 = vcmp.eq.f32.partialorder %v5715, 8.507059e+37
  %v5717 = vand.u32 %v5705, 2147483648
  %v5718 = vor.u32 1.1754944e-38, %v5717
  %v5719 = vsel %vm5716, %v5718, %v5714
  %v5720 = vmul.f32 1.0, %v5719
  %v5721 = vxor.u32 %v5699, 2147483648
  %v5722 = vmul.f32 %v5721, 1.442695
  %v5723 = vpow.pop %v5722
  %v5724 = vadd.f32 %v5723, 1.0
  %v5725 = vrcp.pop %v5724
  %v5726 = vmul.f32 %v5724, %v5725
  %v5727 = vsub.f32 1.0, %v5726
  %v5728 = vmul.f32 %v5725, %v5727
  %v5729 = vadd.f32 %v5725, %v5728
  %vm5730 = vweird.f32 %v5724
  %vm5731 = vweird.f32 %v5725
  %vm5732 = vmor %vm5730, %vm5731
  %v5733 = vsel %vm5732, %v5725, %v5729
  %v5734 = vand.u32 2147483647, %v5724
  %vm5735 = vcmp.eq.f32.partialorder %v5734, 8.507059e+37
  %v5736 = vand.u32 %v5724, 2147483648
  %v5737 = vor.u32 1.1754944e-38, %v5736
  %v5738 = vsel %vm5735, %v5737, %v5733
  %v5739 = vmul.f32 1.0, %v5738
  %v5740 = vtanh.pop %v5700
  %v5741 = vxor.u32 %v5701, 2147483648
  %v5742 = vmul.f32 %v5741, 1.442695
  %v5743 = vpow.pop %v5742
  %v5744 = vadd.f32 %v5743, 1.0
  %v5745 = vrcp.pop %v5744
  %v5746 = vmul.f32 %v5744, %v5745
  %v5747 = vsub.f32 1.0, %v5746
  %v5748 = vmul.f32 %v5745, %v5747
  %v5749 = vadd.f32 %v5745, %v5748
  %vm5750 = vweird.f32 %v5744
  %vm5751 = vweird.f32 %v5745
  %vm5752 = vmor %vm5750, %vm5751
  %v5753 = vsel %vm5752, %v5745, %v5749
  %v5754 = vand.u32 2147483647, %v5744
  %vm5755 = vcmp.eq.f32.partialorder %v5754, 8.507059e+37
  %v5756 = vand.u32 %v5744, 2147483648
  %v5757 = vor.u32 1.1754944e-38, %v5756
  %v5758 = vsel %vm5755, %v5757, %v5753
  %v5759 = vmul.f32 1.0, %v5758
  %v5760 = vmul.f32 %v5739, %v5443
  %v5761 = vmul.f32 %v5720, %v5740
  %v5762 = vadd.f32 %v5760, %v5761
  %v5763 = vtanh.pop %v5762
  %v5764 = vmul.f32 %v5759, %v5763
  %v5765 = vmax.f32 %v5764, 0.0
  %s5766 = scalar_lea.vmem %s7, 56
  %5767 = vst [vmem:[%s5766] sm:$0xff] %v5765
  %5768 = vst [vmem:[#allocation6] sm:$0xff] %v5764
  %5769 = vst [vmem:[#allocation7] sm:$0xff] %v5762
  // Predicated region
  $region34: #{vd_encoder_forward.1} parent=0 // pred_check
    _
  $region35: #{vd_encoder_forward.1} parent=0 // pred_check_branch
    %5771 = sbr.rel (0) target = $region37
  $region36: #{vd_encoder_forward.1} parent=0 // pred_region
    _
  $region37: #{vd_encoder_forward.1} parent=0 // pred_fallthru
    _
  // Predicated region
  $region38: #{vd_encoder_forward.1} parent=0 // pred_check
    _
  $region39: #{vd_encoder_forward.1} parent=0 // pred_check_branch
    %5773 = sbr.rel (0) target = $region41
  $region40: #{vd_encoder_forward.1} parent=0 // pred_region
    _
  $region41: #{vd_encoder_forward.1} parent=0 // pred_fallthru
    _

</llo_original>
